<compile_context>
chip_gen: v5e
topology: v5e:2x2
jax: 0.10.0
libtpu: 0.0.40
codegen_flags: <defaults>
</compile_context>

<pallas_src>
import numpy as np
import jax
import jax.numpy as jnp
from jax.experimental import pallas as pl
from jax.experimental.pallas import tpu as pltpu

# ----------------------------- configuration -----------------------------
B = 2            # batch size
N = 8            # n_max_obj == top_k (module requires n_obj == top_k for the final Linear)
F = 16           # obj_feature_dim
H = 32           # hidden_dim
CLASS_SIZE = 2
OUT_SIZE = CLASS_SIZE ** N           # class_size ** top_k = 256
N_MAX_Q = 8
I0 = 4 + 64 + 4                      # GRU layer-0 input dim = iq(4) + pred(4) + obj(64)
I1 = 2 * H                           # GRU layer-1 input dim (bidirectional concat)

H2, H4, H6 = 2 * H, 4 * H, 6 * H     # 64, 128, 192
I0Z = 2 * I0                         # 144 (fused/padded layer-0 input width)
BP = 8                               # sublane-padded batch

# row offsets inside the packed GRU weight slab (all multiples of 8)
OFF_WIH0 = 0
OFF_WHH0 = I0Z                       # 144
OFF_WIH1A = I0Z + H2                 # 208
OFF_WIH1B = I0Z + 2 * H2             # 272
OFF_WHH1 = I0Z + 3 * H2              # 336
OFF_WOBJ = I0Z + 4 * H2              # 400
GRU_ROWS = OFF_WOBJ + 2 * F          # 432


# ------------------------------- the kernel -------------------------------
def make_kernel(batch, n_obj, b_pad):
    Bs, Ns, Bp = batch, n_obj, b_pad

    def kernel(xin_ref, wgru_ref, wout_hbm, bias_ref, out_ref,
               z1a_ref, z1b_ref, logits_ref, wout_vmem, dma_sem):
        f32 = jnp.float32

        # Kick off the w_out HBM->VMEM copy immediately; it is only needed by the
        # layer-1 recurrence, so it overlaps all of layer-0's work.
        wout_cp = pltpu.make_async_copy(wout_hbm, wout_vmem, dma_sem.at[0])
        wout_cp.start()

        xin = xin_ref[...]                                        # (Ns*Bp, 42) f32

        # ---- packed parameters (bf16 storage, f32 compute) ----
        wih0 = wgru_ref[OFF_WIH0:OFF_WHH0, :].astype(f32)         # (144, 192)
        whh0 = wgru_ref[OFF_WHH0:OFF_WIH1A, :].astype(f32)        # (64, 192)
        wih1a = wgru_ref[OFF_WIH1A:OFF_WIH1B, :].astype(f32)      # (64, 192)
        wih1b = wgru_ref[OFF_WIH1B:OFF_WHH1, :].astype(f32)       # (64, 192)
        whh1 = wgru_ref[OFF_WHH1:OFF_WOBJ, :].astype(f32)         # (64, 192)
        wobj = wgru_ref[OFF_WOBJ:OFF_WOBJ + 2 * F, 0:H4].astype(f32)   # (32, 128)

        b_out = bias_ref[0:1, :]                                  # (1, 256)
        bih0 = bias_ref[1:2, 0:H6]                                # r/z hidden biases folded in
        bhh0n = bias_ref[2:3, 0:H2]                               # n-gate hidden bias only
        bih1 = bias_ref[3:4, 0:H6]
        bhh1n = bias_ref[4:5, 0:H2]
        bo2 = bias_ref[5:6, 0:H4]
        wp = bias_ref[6:7, 0:4]
        bp = bias_ref[6:7, 4:8]

        # ---- layer-0 fused (fwd | time-reversed) input slab, lane-aligned layout ----
        obj_z = xin[:, 0:2 * F]                                   # [obj(t) | obj(N-1-t)]  (., 32)
        o_f = xin[:, 2 * F:2 * F + 1]                             # o_pred(t)
        o_b = xin[:, 2 * F + 1:2 * F + 2]                         # o_pred(N-1-t)
        iq8 = xin[:, 2 * F + 2:2 * F + 10]                        # iq embedding (4) + zero pad (4)

        oe = jnp.maximum(
            jnp.dot(obj_z, wobj, preferred_element_type=f32) + bo2, 0.0)   # (., 128) at lane 0
        pe_f = o_f * wp + bp                                      # pred_embed(t)        (., 4)
        pe_b = o_b * wp + bp                                      # pred_embed(N-1-t)
        z0 = jnp.concatenate([oe, iq8, pe_f, pe_b], axis=-1)      # (Ns*Bp, 144)
        gx0 = jnp.dot(z0, wih0, preferred_element_type=f32) + bih0          # (Ns*Bp, 192)

        # ---- fused bidirectional GRU recurrence (fwd tracks s, bwd tracks N-1-s) ----
        def fused_layer(gx, whh, bhh_n, store):
            h = jnp.zeros((Bp, H2), f32)                          # [h_f | h_b]
            for s in range(Ns):
                gh = jnp.dot(h, whh, preferred_element_type=f32)             # (Bp, 192)
                gxs = gx[s * Bp:(s + 1) * Bp, :]                             # sublane-aligned
                rz = jax.nn.sigmoid(gxs[:, 0:H4] + gh[:, 0:H4])              # [r_f r_b z_f z_b]
                r = rz[:, 0:H2]
                z = rz[:, H2:H4]
                n = jnp.tanh(gxs[:, H4:H6] + r * (gh[:, H4:H6] + bhh_n))
                h = (1.0 - z) * n + z * h                         # = [h_f(s) | h_b(N-1-s)]
                store(s, h)

        # layer-0: scatter paired states into the two 64-lane layer-1 input slabs
        def store0(s, h):
            z1a_ref[s * Bp:(s + 1) * Bp, :] = h
            z1b_ref[(Ns - 1 - s) * Bp:(Ns - s) * Bp, :] = h

        fused_layer(gx0, whh0, bhh0n, store0)

        # ---- layer 1 (output head accumulated inside the recurrence) ----
        gx1 = (jnp.dot(z1a_ref[...], wih1a, preferred_element_type=f32)
               + jnp.dot(z1b_ref[...], wih1b, preferred_element_type=f32) + bih1)

        wout_cp.wait()                                            # first use of w_out is below
        logits_ref[...] = jnp.broadcast_to(b_out, (Bp, OUT_SIZE))

        def store1(s, h):
            w_s = wout_vmem[s * H2:(s + 1) * H2, :].astype(f32)   # (64, 256), aligned slice
            logits_ref[...] += jnp.dot(h, w_s, preferred_element_type=f32)

        fused_layer(gx1, whh1, bhh1n, store1)

        # ---- softmax over the real batch rows (exact reciprocal) ----
        logits = logits_ref[0:Bs, :]
        m = jnp.max(logits, axis=-1, keepdims=True)
        e = jnp.exp(logits - m)
        out_ref[...] = e / jnp.sum(e, axis=-1, keepdims=True)

    return kernel


# ---------------------- host-side parameter packing ------------------------
def _fused_cols(w_d, direction):
    """Place a per-direction (rows, 3H) [r|z|n] block into the fused (rows, 6H) layout."""
    rows = w_d.shape[0]
    out = np.zeros((rows, H6), np.float32)
    for g in range(3):   # r, z, n
        out[:, 2 * g * H + direction * H: 2 * g * H + (direction + 1) * H] = \
            w_d[:, g * H:(g + 1) * H]
    return out


def pack_params(P):
    f32 = np.float32

    def A(x):
        return np.asarray(x, f32)

    wih0f, wih0b = A(P["wih0f"]), A(P["wih0b"])        # (72, 96)
    wih1f, wih1b = A(P["wih1f"]), A(P["wih1b"])        # (64, 96)
    whh0f, whh0b = A(P["whh0f"]), A(P["whh0b"])        # (32, 96)
    whh1f, whh1b = A(P["whh1f"]), A(P["whh1b"])

    # layer-0 fused input weight.
    # z0 lanes = [oe_f(0:64) | oe_b(64:128) | iq(128:132) | pad(132:136) | pe_f(136:140) | pe_b(140:144)]
    wih0_z = np.zeros((I0Z, H6), f32)
    wih0_z[0:64] = _fused_cols(wih0f[8:72], 0)                                 # obj_emb -> fwd
    wih0_z[64:128] = _fused_cols(wih0b[8:72], 1)                               # obj_emb -> bwd
    wih0_z[128:132] = _fused_cols(wih0f[0:4], 0) + _fused_cols(wih0b[0:4], 1)  # iq feeds both dirs
    wih0_z[136:140] = _fused_cols(wih0f[4:8], 0)                               # pred_emb fwd
    wih0_z[140:144] = _fused_cols(wih0b[4:8], 1)                               # pred_emb bwd

    # layer-1 fused input weight, split over the two 64-lane slabs:
    #   z1a(s) = [hf0(s) | hb0(N-1-s)],   z1b(s) = [hf0(N-1-s) | hb0(s)]
    wih1_z = np.zeros((2 * I1, H6), f32)
    wih1_z[0:32] = _fused_cols(wih1f[0:32], 0)
    wih1_z[32:64] = _fused_cols(wih1b[32:64], 1)
    wih1_z[64:96] = _fused_cols(wih1b[0:32], 1)
    wih1_z[96:128] = _fused_cols(wih1f[32:64], 0)

    # hidden (block) weights; state columns = [h_f | h_b]
    whh0_blk = np.concatenate([_fused_cols(whh0f, 0), _fused_cols(whh0b, 1)], axis=0)  # (64,192)
    whh1_blk = np.concatenate([_fused_cols(whh1f, 0), _fused_cols(whh1b, 1)], axis=0)

    # obj-embed block-diagonal weight for [obj(t) | obj(N-1-t)] inputs, padded to 192 cols
    wo = A(P["w_obj"])                                  # (F, 64)
    wobj2 = np.zeros((2 * F, H6), f32)
    wobj2[0:F, 0:64] = wo
    wobj2[F:2 * F, 64:128] = wo

    w_gru = np.concatenate([wih0_z, whh0_blk, wih1_z, whh1_blk, wobj2], axis=0)  # (432, 192)
    assert w_gru.shape[0] == GRU_ROWS

    # biases / tiny params packed as rows of an (8, 256) f32 slab
    bias = np.zeros((8, 256), f32)
    bias[0, :OUT_SIZE] = A(P["b_out"])[0]

    bih0 = (_fused_cols(A(P["bih0f"]), 0) + _fused_cols(A(P["bih0b"]), 1))[0]
    bhh0 = (_fused_cols(A(P["bhh0f"]), 0) + _fused_cols(A(P["bhh0b"]), 1))[0]
    bih1 = (_fused_cols(A(P["bih1f"]), 0) + _fused_cols(A(P["bih1b"]), 1))[0]
    bhh1 = (_fused_cols(A(P["bhh1f"]), 0) + _fused_cols(A(P["bhh1b"]), 1))[0]
    # fold the r/z hidden biases into the input biases; only the n-gate hidden bias
    # must stay inside the recurrence (it is multiplied by r)
    bias[1, :H6] = bih0
    bias[1, :H4] += bhh0[:H4]
    bias[2, :H2] = bhh0[H4:H6]
    bias[3, :H6] = bih1
    bias[3, :H4] += bhh1[:H4]
    bias[4, :H2] = bhh1[H4:H6]

    bias[5, 0:64] = A(P["b_obj"])[0]
    bias[5, 64:128] = A(P["b_obj"])[0]
    bias[6, 0:4] = A(P["w_pred"])[0]
    bias[6, 4:8] = A(P["b_pred"])[0]

    # output weight with the paired->time-ordered row permutation folded in
    w_out = A(P["w_out"])                               # (N*2H, OUT)
    j = np.arange(N * 2 * H)
    t_idx, c_idx = j // (2 * H), j % (2 * H)
    pi = np.where(c_idx < H, j, (N - 1 - t_idx) * (2 * H) + c_idx)   # involution
    w_out_perm = w_out[pi, :]

    return {
        "w_gru": jnp.asarray(w_gru, dtype=jnp.bfloat16),    # bf16 storage, f32 compute in-kernel
        "w_out": jnp.asarray(w_out_perm, dtype=jnp.bfloat16),
        "bias": jnp.asarray(bias),                          # f32
    }


# ------------------------------- wrapper ----------------------------------
def cands_split_forward(o_pred_prob, obj_features, iq, params, packed=None):
    """o_pred_prob: (B, N, 1), obj_features: (B, N, F), iq: python int."""
    batch, n_obj, _ = o_pred_prob.shape
    assert n_obj == N and batch <= BP
    if packed is None:
        packed = pack_params(params)
    f32 = jnp.float32

    # time-major, batch padded to BP sublanes, plus time-reversed copies,
    # flattened into a single (N*BP, 42) input slab (obj features at lane 0)
    o3 = jnp.transpose(o_pred_prob, (1, 0, 2)).astype(f32)         # (N, B, 1)
    obj3 = jnp.transpose(obj_features, (1, 0, 2)).astype(f32)      # (N, B, F)

    def pad_b(x):
        return jnp.pad(x, ((0, 0), (0, BP - batch), (0, 0)))

    o3, obj3 = pad_b(o3), pad_b(obj3)
    nb = n_obj * BP
    o_f = o3.reshape(nb, 1)
    o_b = o3[::-1].reshape(nb, 1)
    obj_f = obj3.reshape(nb, F)
    obj_b = obj3[::-1].reshape(nb, F)
    iq_row = params["iq_table"][iq]                                # embedding lookup (host glue)
    iq_bc = jnp.broadcast_to(iq_row, (nb, 4)).astype(f32)
    pad4 = jnp.zeros((nb, 4), f32)
    xin = jnp.concatenate([obj_f, obj_b, o_f, o_b, iq_bc, pad4], axis=-1)   # (N*BP, 42)

    in_arrays = [xin, packed["w_gru"], packed["w_out"], packed["bias"]]

    def full_spec(a):
        return pl.BlockSpec(a.shape, lambda i, nd=a.ndim: (0,) * nd)

    out = pl.pallas_call(
        make_kernel(batch, n_obj, BP),
        grid=(1,),
        in_specs=[full_spec(xin),
                  full_spec(packed["w_gru"]),
                  pl.BlockSpec(memory_space=pl.ANY),       # w_out: manual async copy in-kernel
                  full_spec(packed["bias"])],
        out_specs=pl.BlockSpec((batch, OUT_SIZE), lambda i: (0, 0)),
        out_shape=jax.ShapeDtypeStruct((batch, OUT_SIZE), jnp.float32),
        scratch_shapes=[
            pltpu.VMEM((nb, H2), jnp.float32),             # z1a: layer-1 input slab (fwd-paired)
            pltpu.VMEM((nb, H2), jnp.float32),             # z1b: layer-1 input slab (bwd-paired)
            pltpu.VMEM((BP, OUT_SIZE), jnp.float32),       # logits accumulator
            pltpu.VMEM((n_obj * 2 * H, OUT_SIZE), jnp.bfloat16),   # w_out landing buffer
            pltpu.SemaphoreType.DMA((1,)),
        ],
        compiler_params=pltpu.CompilerParams(dimension_semantics=("arbitrary",)),
    )(*in_arrays)
    return out


# -------------------------- deterministic params ---------------------------
def init_params(key):
    keys = jax.random.split(key, 32)
    it = iter(keys)

    def u(shape, fan_in):
        s = 1.0 / np.sqrt(fan_in)
        return jax.random.uniform(next(it), shape, jnp.float32, -s, s)

    # weights that live in the bf16 slabs are made bf16-exact at init so the
    # bf16-storage kernel and the f32 reference use identical values
    def q(x):
        return x.astype(jnp.bfloat16).astype(jnp.float32)

    P = {}
    # pred_embed: Linear(1, 4) -> stored transposed (1, 4)
    P["w_pred"] = u((1, 4), 1)
    P["b_pred"] = u((1, 4), 1)
    # obj_embed: Linear(F, 64) -> stored transposed (F, 64)
    P["w_obj"] = q(u((F, 64), F))
    P["b_obj"] = u((1, 64), F)
    # iq_embed: Embedding(n_max_questions + 1, 4)
    P["iq_table"] = jax.random.normal(next(it), (N_MAX_Q + 1, 4), jnp.float32)
    # bidirectional 2-layer GRU weights (PyTorch gate order r, z, n), stored transposed
    for name, din in (("0f", I0), ("0b", I0), ("1f", I1), ("1b", I1)):
        P["wih" + name] = q(u((din, 3 * H), H))
        P["bih" + name] = u((1, 3 * H), H)
        P["whh" + name] = q(u((H, 3 * H), H))
        P["bhh" + name] = u((1, 3 * H), H)
    # hidden2output: Linear(2*H*top_k, out_size) -> stored transposed
    P["w_out"] = q(u((N * 2 * H, OUT_SIZE), N * 2 * H))
    P["b_out"] = u((1, OUT_SIZE), N * 2 * H)
    return P


# ---------------------------- pure-JAX reference ----------------------------
def forward_ref(o_pred, obj_feat, iq, P):
    batch, n_obj, _ = o_pred.shape
    pred_emb = o_pred * P["w_pred"] + P["b_pred"]                     # (B, N, 4)
    obj_emb = jax.nn.relu(obj_feat @ P["w_obj"] + P["b_obj"])         # (B, N, 64)
    iq_emb = jnp.broadcast_to(P["iq_table"][iq], (batch, n_obj, 4))
    x = jnp.concatenate([iq_emb, pred_emb, obj_emb], axis=-1)         # (B, N, 72)

    def gru_dir(xin, wih, bih, whh, bhh, reverse):
        h = jnp.zeros((batch, H), jnp.float32)
        hs = [None] * n_obj
        ts = range(n_obj - 1, -1, -1) if reverse else range(n_obj)
        for t in ts:
            g = xin[:, t, :] @ wih + bih
            gh = h @ whh + bhh
            r = jax.nn.sigmoid(g[:, :H] + gh[:, :H])
            z = jax.nn.sigmoid(g[:, H:2 * H] + gh[:, H:2 * H])
            n = jnp.tanh(g[:, 2 * H:] + r * gh[:, 2 * H:])
            h = (1.0 - z) * n + z * h
            hs[t] = h
        return jnp.stack(hs, axis=1)

    def gru_layer(xin, sf, sb):
        hf = gru_dir(xin, P["wih" + sf], P["bih" + sf], P["whh" + sf], P["bhh" + sf], False)
        hb = gru_dir(xin, P["wih" + sb], P["bih" + sb], P["whh" + sb], P["bhh" + sb], True)
        return jnp.concatenate([hf, hb], axis=-1)

    y0 = gru_layer(x, "0f", "0b")
    y1 = gru_layer(y0, "1f", "1b")
    flat = y1.reshape(batch, -1)
    logits = flat @ P["w_out"] + P["b_out"]
    return jax.nn.softmax(logits, axis=-1)


# ---------------------------------- main ------------------------------------
if __name__ == "__main__":
    key = jax.random.PRNGKey(0)
    k1, k2, kp = jax.random.split(key, 3)

    # inputs: o_pred_prob is a per-object reference probability, obj_features random
    o_pred_prob = jax.nn.softmax(jax.random.normal(k1, (B, N)), axis=-1)[..., None]  # (B, N, 1)
    obj_features = jax.random.normal(k2, (B, N, F), jnp.float32)                      # (B, N, F)
    iq = 3                                                                            # question index

    params = init_params(kp)
    packed = pack_params(params)

    out = cands_split_forward(o_pred_prob, obj_features, iq, params, packed)
    out = jax.block_until_ready(out)

    assert out.shape == (B, OUT_SIZE)
    ref = forward_ref(o_pred_prob.astype(jnp.float32), obj_features, iq, params)
    np.testing.assert_allclose(np.asarray(out), np.asarray(ref), rtol=1e-2, atol=1e-6)
    assert np.allclose(np.asarray(out).sum(-1), 1.0, atol=1e-3)   # softmax rows sum to 1

    print("KERNEL_OK")
</pallas_src>

<mosaic_0001>
module attributes {stable_mosaic.version = 11 : i64} {
  func.func @kernel(%arg0: i32, %arg1: memref<64x42xf32, #tpu.memory_space<vmem>>, %arg2: memref<432x192xbf16, #tpu.memory_space<vmem>>, %arg3: memref<512x256xbf16, #tpu.memory_space<any>>, %arg4: memref<8x256xf32, #tpu.memory_space<vmem>>, %arg5: memref<2x256xf32, #tpu.memory_space<vmem>>, %arg6: memref<64x64xf32, #tpu.memory_space<vmem>>, %arg7: memref<64x64xf32, #tpu.memory_space<vmem>>, %arg8: memref<8x256xf32, #tpu.memory_space<vmem>>, %arg9: memref<512x256xbf16, #tpu.memory_space<vmem>>, %arg10: memref<1x!tpu.dma_semaphore, #tpu.memory_space<semaphore_mem>>) attributes {dimension_semantics = [#tpu.dimension_semantics<arbitrary>], iteration_bounds = array<i64: 1>, scalar_prefetch = 0 : i64, scratch_operands = 5 : i64, tpu.core_type = #tpu.core_type<tc>, window_params = [{pipeline_mode = #tpu.pipeline_mode<synchronous>, transform_indices = @transform_0, window_bounds = array<i64: 64, 42>}, {pipeline_mode = #tpu.pipeline_mode<synchronous>, transform_indices = @transform_1, window_bounds = array<i64: 432, 192>}, {}, {pipeline_mode = #tpu.pipeline_mode<synchronous>, transform_indices = @transform_3, window_bounds = array<i64: 8, 256>}, {pipeline_mode = #tpu.pipeline_mode<synchronous>, transform_indices = @transform_4, window_bounds = array<i64: 2, 256>}]} {
    %c0_i32 = arith.constant 0 : i32
    %0 = tpu.memref_slice %arg10[%c0_i32] : memref<1x!tpu.dma_semaphore, #tpu.memory_space<semaphore_mem>> -> memref<1x!tpu.dma_semaphore, #tpu.memory_space<semaphore_mem>>
    %1 = tpu.memref_squeeze %0 : memref<1x!tpu.dma_semaphore, #tpu.memory_space<semaphore_mem>> -> memref<!tpu.dma_semaphore, #tpu.memory_space<semaphore_mem>>
    tpu.enqueue_dma source(%arg3 : memref<512x256xbf16, #tpu.memory_space<any>>) target(%arg9 : memref<512x256xbf16, #tpu.memory_space<vmem>>) target_semaphore(%1 : memref<!tpu.dma_semaphore, #tpu.memory_space<semaphore_mem>>)
    %c0 = arith.constant 0 : index
    %c0_0 = arith.constant 0 : index
    %2 = vector.load %arg1[%c0, %c0_0] : memref<64x42xf32, #tpu.memory_space<vmem>>, vector<64x42xf32>
    %c0_1 = arith.constant 0 : index
    %c0_2 = arith.constant 0 : index
    %3 = vector.load %arg2[%c0_1, %c0_2] : memref<432x192xbf16, #tpu.memory_space<vmem>>, vector<144x192xbf16>
    %4 = arith.extf %3 : vector<144x192xbf16> to vector<144x192xf32>
    %c144 = arith.constant 144 : index
    %c0_3 = arith.constant 0 : index
    %5 = vector.load %arg2[%c144, %c0_3] : memref<432x192xbf16, #tpu.memory_space<vmem>>, vector<64x192xbf16>
    %6 = arith.extf %5 : vector<64x192xbf16> to vector<64x192xf32>
    %c208 = arith.constant 208 : index
    %c0_4 = arith.constant 0 : index
    %7 = vector.load %arg2[%c208, %c0_4] : memref<432x192xbf16, #tpu.memory_space<vmem>>, vector<64x192xbf16>
    %8 = arith.extf %7 : vector<64x192xbf16> to vector<64x192xf32>
    %c272 = arith.constant 272 : index
    %c0_5 = arith.constant 0 : index
    %9 = vector.load %arg2[%c272, %c0_5] : memref<432x192xbf16, #tpu.memory_space<vmem>>, vector<64x192xbf16>
    %10 = arith.extf %9 : vector<64x192xbf16> to vector<64x192xf32>
    %c336 = arith.constant 336 : index
    %c0_6 = arith.constant 0 : index
    %11 = vector.load %arg2[%c336, %c0_6] : memref<432x192xbf16, #tpu.memory_space<vmem>>, vector<64x192xbf16>
    %12 = arith.extf %11 : vector<64x192xbf16> to vector<64x192xf32>
    %c400 = arith.constant 400 : index
    %c0_7 = arith.constant 0 : index
    %13 = vector.load %arg2[%c400, %c0_7] : memref<432x192xbf16, #tpu.memory_space<vmem>>, vector<32x128xbf16>
    %14 = arith.extf %13 : vector<32x128xbf16> to vector<32x128xf32>
    %c0_8 = arith.constant 0 : index
    %c0_9 = arith.constant 0 : index
    %15 = vector.load %arg4[%c0_8, %c0_9] : memref<8x256xf32, #tpu.memory_space<vmem>>, vector<1x256xf32>
    %c1 = arith.constant 1 : index
    %c0_10 = arith.constant 0 : index
    %16 = vector.load %arg4[%c1, %c0_10] : memref<8x256xf32, #tpu.memory_space<vmem>>, vector<1x192xf32>
    %c2 = arith.constant 2 : index
    %c0_11 = arith.constant 0 : index
    %17 = vector.load %arg4[%c2, %c0_11] : memref<8x256xf32, #tpu.memory_space<vmem>>, vector<1x64xf32>
    %c3 = arith.constant 3 : index
    %c0_12 = arith.constant 0 : index
    %18 = vector.load %arg4[%c3, %c0_12] : memref<8x256xf32, #tpu.memory_space<vmem>>, vector<1x192xf32>
    %c4 = arith.constant 4 : index
    %c0_13 = arith.constant 0 : index
    %19 = vector.load %arg4[%c4, %c0_13] : memref<8x256xf32, #tpu.memory_space<vmem>>, vector<1x64xf32>
    %c5 = arith.constant 5 : index
    %c0_14 = arith.constant 0 : index
    %20 = vector.load %arg4[%c5, %c0_14] : memref<8x256xf32, #tpu.memory_space<vmem>>, vector<1x128xf32>
    %c6 = arith.constant 6 : index
    %c0_15 = arith.constant 0 : index
    %21 = vector.load %arg4[%c6, %c0_15] : memref<8x256xf32, #tpu.memory_space<vmem>>, vector<1x4xf32>
    %c6_16 = arith.constant 6 : index
    %c4_17 = arith.constant 4 : index
    %22 = vector.load %arg4[%c6_16, %c4_17] : memref<8x256xf32, #tpu.memory_space<vmem>>, vector<1x4xf32>
    %23 = vector.extract_strided_slice %2 {offsets = [0, 0], sizes = [64, 32], strides = [1, 1]} : vector<64x42xf32> to vector<64x32xf32>
    %24 = vector.extract_strided_slice %2 {offsets = [0, 32], sizes = [64, 1], strides = [1, 1]} : vector<64x42xf32> to vector<64x1xf32>
    %25 = vector.extract_strided_slice %2 {offsets = [0, 33], sizes = [64, 1], strides = [1, 1]} : vector<64x42xf32> to vector<64x1xf32>
    %26 = vector.extract_strided_slice %2 {offsets = [0, 34], sizes = [64, 8], strides = [1, 1]} : vector<64x42xf32> to vector<64x8xf32>
    %cst = arith.constant dense<0.000000e+00> : vector<64x128xf32>
    %27 = tpu.matmul %23, %14, %cst {dimension_numbers = #tpu.dot_dimension_numbers<[1], [0], [0], [1], [0, 0, 1, 1], [], []>} : vector<64x32xf32>, vector<32x128xf32>, vector<64x128xf32> -> vector<64x128xf32>
    %28 = vector.broadcast %20 : vector<1x128xf32> to vector<64x128xf32>
    %29 = arith.addf %27, %28 : vector<64x128xf32>
    %cst_18 = arith.constant 0.000000e+00 : f32
    %30 = vector.broadcast %cst_18 : f32 to vector<64x128xf32>
    %31 = arith.maximumf %29, %30 : vector<64x128xf32>
    %32 = vector.broadcast %24 : vector<64x1xf32> to vector<64x4xf32>
    %33 = vector.broadcast %21 : vector<1x4xf32> to vector<64x4xf32>
    %34 = arith.mulf %32, %33 : vector<64x4xf32>
    %35 = vector.broadcast %22 : vector<1x4xf32> to vector<64x4xf32>
    %36 = arith.addf %34, %35 : vector<64x4xf32>
    %37 = vector.broadcast %25 : vector<64x1xf32> to vector<64x4xf32>
    %38 = vector.broadcast %21 : vector<1x4xf32> to vector<64x4xf32>
    %39 = arith.mulf %37, %38 : vector<64x4xf32>
    %40 = vector.broadcast %22 : vector<1x4xf32> to vector<64x4xf32>
    %41 = arith.addf %39, %40 : vector<64x4xf32>
    %42 = tpu.concatenate %31, %26, %36, %41 in 1 : vector<64x128xf32>, vector<64x8xf32>, vector<64x4xf32>, vector<64x4xf32> -> vector<64x144xf32>
    %cst_19 = arith.constant dense<0.000000e+00> : vector<64x192xf32>
    %43 = tpu.matmul %42, %4, %cst_19 {dimension_numbers = #tpu.dot_dimension_numbers<[1], [0], [0], [1], [0, 0, 1, 1], [], []>} : vector<64x144xf32>, vector<144x192xf32>, vector<64x192xf32> -> vector<64x192xf32>
    %44 = vector.broadcast %16 : vector<1x192xf32> to vector<64x192xf32>
    %45 = arith.addf %43, %44 : vector<64x192xf32>
    %cst_20 = arith.constant 0.000000e+00 : f32
    %46 = vector.broadcast %cst_20 : f32 to vector<8x64xf32>
    %cst_21 = arith.constant dense<0.000000e+00> : vector<8x192xf32>
    %47 = tpu.matmul %46, %6, %cst_21 {dimension_numbers = #tpu.dot_dimension_numbers<[1], [0], [0], [1], [0, 0, 1, 1], [], []>} : vector<8x64xf32>, vector<64x192xf32>, vector<8x192xf32> -> vector<8x192xf32>
    %48 = vector.extract_strided_slice %45 {offsets = [0, 0], sizes = [8, 192], strides = [1, 1]} : vector<64x192xf32> to vector<8x192xf32>
    %49 = vector.extract_strided_slice %48 {offsets = [0, 0], sizes = [8, 128], strides = [1, 1]} : vector<8x192xf32> to vector<8x128xf32>
    %50 = vector.extract_strided_slice %47 {offsets = [0, 0], sizes = [8, 128], strides = [1, 1]} : vector<8x192xf32> to vector<8x128xf32>
    %51 = arith.addf %49, %50 : vector<8x128xf32>
    %52 = arith.negf %51 : vector<8x128xf32>
    %53 = math.exp %52 : vector<8x128xf32>
    %cst_22 = arith.constant 1.000000e+00 : f32
    %54 = vector.broadcast %cst_22 : f32 to vector<8x128xf32>
    %55 = arith.addf %54, %53 : vector<8x128xf32>
    %56 = arith.divf %54, %55 : vector<8x128xf32>
    %57 = vector.extract_strided_slice %56 {offsets = [0, 0], sizes = [8, 64], strides = [1, 1]} : vector<8x128xf32> to vector<8x64xf32>
    %58 = vector.extract_strided_slice %56 {offsets = [0, 64], sizes = [8, 64], strides = [1, 1]} : vector<8x128xf32> to vector<8x64xf32>
    %59 = vector.extract_strided_slice %48 {offsets = [0, 128], sizes = [8, 64], strides = [1, 1]} : vector<8x192xf32> to vector<8x64xf32>
    %60 = vector.extract_strided_slice %47 {offsets = [0, 128], sizes = [8, 64], strides = [1, 1]} : vector<8x192xf32> to vector<8x64xf32>
    %61 = vector.broadcast %17 : vector<1x64xf32> to vector<8x64xf32>
    %62 = arith.addf %60, %61 : vector<8x64xf32>
    %63 = arith.mulf %57, %62 : vector<8x64xf32>
    %64 = arith.addf %59, %63 : vector<8x64xf32>
    %65 = math.tanh %64 : vector<8x64xf32>
    %cst_23 = arith.constant 1.000000e+00 : f32
    %66 = vector.broadcast %cst_23 : f32 to vector<8x64xf32>
    %67 = arith.subf %66, %58 : vector<8x64xf32>
    %68 = arith.mulf %67, %65 : vector<8x64xf32>
    %69 = arith.mulf %58, %46 : vector<8x64xf32>
    %70 = arith.addf %68, %69 : vector<8x64xf32>
    %c0_24 = arith.constant 0 : index
    %c0_25 = arith.constant 0 : index
    %71 = vector.load %arg6[%c0_24, %c0_25] : memref<64x64xf32, #tpu.memory_space<vmem>>, vector<8x64xf32>
    tpu.vector_store %arg6[%c0_24, %c0_25], %70 {strides = array<i32>} : memref<64x64xf32, #tpu.memory_space<vmem>>, vector<8x64xf32>,
    %c56 = arith.constant 56 : index
    %c0_26 = arith.constant 0 : index
    %72 = vector.load %arg7[%c56, %c0_26] : memref<64x64xf32, #tpu.memory_space<vmem>>, vector<8x64xf32>
    tpu.vector_store %arg7[%c56, %c0_26], %70 {strides = array<i32>} : memref<64x64xf32, #tpu.memory_space<vmem>>, vector<8x64xf32>,
    %cst_27 = arith.constant dense<0.000000e+00> : vector<8x192xf32>
    %73 = tpu.matmul %70, %6, %cst_27 {dimension_numbers = #tpu.dot_dimension_numbers<[1], [0], [0], [1], [0, 0, 1, 1], [], []>} : vector<8x64xf32>, vector<64x192xf32>, vector<8x192xf32> -> vector<8x192xf32>
    %74 = vector.extract_strided_slice %45 {offsets = [8, 0], sizes = [8, 192], strides = [1, 1]} : vector<64x192xf32> to vector<8x192xf32>
    %75 = vector.extract_strided_slice %74 {offsets = [0, 0], sizes = [8, 128], strides = [1, 1]} : vector<8x192xf32> to vector<8x128xf32>
    %76 = vector.extract_strided_slice %73 {offsets = [0, 0], sizes = [8, 128], strides = [1, 1]} : vector<8x192xf32> to vector<8x128xf32>
    %77 = arith.addf %75, %76 : vector<8x128xf32>
    %78 = arith.negf %77 : vector<8x128xf32>
    %79 = math.exp %78 : vector<8x128xf32>
    %cst_28 = arith.constant 1.000000e+00 : f32
    %80 = vector.broadcast %cst_28 : f32 to vector<8x128xf32>
    %81 = arith.addf %80, %79 : vector<8x128xf32>
    %82 = arith.divf %80, %81 : vector<8x128xf32>
    %83 = vector.extract_strided_slice %82 {offsets = [0, 0], sizes = [8, 64], strides = [1, 1]} : vector<8x128xf32> to vector<8x64xf32>
    %84 = vector.extract_strided_slice %82 {offsets = [0, 64], sizes = [8, 64], strides = [1, 1]} : vector<8x128xf32> to vector<8x64xf32>
    %85 = vector.extract_strided_slice %74 {offsets = [0, 128], sizes = [8, 64], strides = [1, 1]} : vector<8x192xf32> to vector<8x64xf32>
    %86 = vector.extract_strided_slice %73 {offsets = [0, 128], sizes = [8, 64], strides = [1, 1]} : vector<8x192xf32> to vector<8x64xf32>
    %87 = vector.broadcast %17 : vector<1x64xf32> to vector<8x64xf32>
    %88 = arith.addf %86, %87 : vector<8x64xf32>
    %89 = arith.mulf %83, %88 : vector<8x64xf32>
    %90 = arith.addf %85, %89 : vector<8x64xf32>
    %91 = math.tanh %90 : vector<8x64xf32>
    %cst_29 = arith.constant 1.000000e+00 : f32
    %92 = vector.broadcast %cst_29 : f32 to vector<8x64xf32>
    %93 = arith.subf %92, %84 : vector<8x64xf32>
    %94 = arith.mulf %93, %91 : vector<8x64xf32>
    %95 = arith.mulf %84, %70 : vector<8x64xf32>
    %96 = arith.addf %94, %95 : vector<8x64xf32>
    %c8 = arith.constant 8 : index
    %c0_30 = arith.constant 0 : index
    %97 = vector.load %arg6[%c8, %c0_30] : memref<64x64xf32, #tpu.memory_space<vmem>>, vector<8x64xf32>
    tpu.vector_store %arg6[%c8, %c0_30], %96 {strides = array<i32>} : memref<64x64xf32, #tpu.memory_space<vmem>>, vector<8x64xf32>,
    %c48 = arith.constant 48 : index
    %c0_31 = arith.constant 0 : index
    %98 = vector.load %arg7[%c48, %c0_31] : memref<64x64xf32, #tpu.memory_space<vmem>>, vector<8x64xf32>
    tpu.vector_store %arg7[%c48, %c0_31], %96 {strides = array<i32>} : memref<64x64xf32, #tpu.memory_space<vmem>>, vector<8x64xf32>,
    %cst_32 = arith.constant dense<0.000000e+00> : vector<8x192xf32>
    %99 = tpu.matmul %96, %6, %cst_32 {dimension_numbers = #tpu.dot_dimension_numbers<[1], [0], [0], [1], [0, 0, 1, 1], [], []>} : vector<8x64xf32>, vector<64x192xf32>, vector<8x192xf32> -> vector<8x192xf32>
    %100 = vector.extract_strided_slice %45 {offsets = [16, 0], sizes = [8, 192], strides = [1, 1]} : vector<64x192xf32> to vector<8x192xf32>
    %101 = vector.extract_strided_slice %100 {offsets = [0, 0], sizes = [8, 128], strides = [1, 1]} : vector<8x192xf32> to vector<8x128xf32>
    %102 = vector.extract_strided_slice %99 {offsets = [0, 0], sizes = [8, 128], strides = [1, 1]} : vector<8x192xf32> to vector<8x128xf32>
    %103 = arith.addf %101, %102 : vector<8x128xf32>
    %104 = arith.negf %103 : vector<8x128xf32>
    %105 = math.exp %104 : vector<8x128xf32>
    %cst_33 = arith.constant 1.000000e+00 : f32
    %106 = vector.broadcast %cst_33 : f32 to vector<8x128xf32>
    %107 = arith.addf %106, %105 : vector<8x128xf32>
    %108 = arith.divf %106, %107 : vector<8x128xf32>
    %109 = vector.extract_strided_slice %108 {offsets = [0, 0], sizes = [8, 64], strides = [1, 1]} : vector<8x128xf32> to vector<8x64xf32>
    %110 = vector.extract_strided_slice %108 {offsets = [0, 64], sizes = [8, 64], strides = [1, 1]} : vector<8x128xf32> to vector<8x64xf32>
    %111 = vector.extract_strided_slice %100 {offsets = [0, 128], sizes = [8, 64], strides = [1, 1]} : vector<8x192xf32> to vector<8x64xf32>
    %112 = vector.extract_strided_slice %99 {offsets = [0, 128], sizes = [8, 64], strides = [1, 1]} : vector<8x192xf32> to vector<8x64xf32>
    %113 = vector.broadcast %17 : vector<1x64xf32> to vector<8x64xf32>
    %114 = arith.addf %112, %113 : vector<8x64xf32>
    %115 = arith.mulf %109, %114 : vector<8x64xf32>
    %116 = arith.addf %111, %115 : vector<8x64xf32>
    %117 = math.tanh %116 : vector<8x64xf32>
    %cst_34 = arith.constant 1.000000e+00 : f32
    %118 = vector.broadcast %cst_34 : f32 to vector<8x64xf32>
    %119 = arith.subf %118, %110 : vector<8x64xf32>
    %120 = arith.mulf %119, %117 : vector<8x64xf32>
    %121 = arith.mulf %110, %96 : vector<8x64xf32>
    %122 = arith.addf %120, %121 : vector<8x64xf32>
    %c16 = arith.constant 16 : index
    %c0_35 = arith.constant 0 : index
    %123 = vector.load %arg6[%c16, %c0_35] : memref<64x64xf32, #tpu.memory_space<vmem>>, vector<8x64xf32>
    tpu.vector_store %arg6[%c16, %c0_35], %122 {strides = array<i32>} : memref<64x64xf32, #tpu.memory_space<vmem>>, vector<8x64xf32>,
    %c40 = arith.constant 40 : index
    %c0_36 = arith.constant 0 : index
    %124 = vector.load %arg7[%c40, %c0_36] : memref<64x64xf32, #tpu.memory_space<vmem>>, vector<8x64xf32>
    tpu.vector_store %arg7[%c40, %c0_36], %122 {strides = array<i32>} : memref<64x64xf32, #tpu.memory_space<vmem>>, vector<8x64xf32>,
    %cst_37 = arith.constant dense<0.000000e+00> : vector<8x192xf32>
    %125 = tpu.matmul %122, %6, %cst_37 {dimension_numbers = #tpu.dot_dimension_numbers<[1], [0], [0], [1], [0, 0, 1, 1], [], []>} : vector<8x64xf32>, vector<64x192xf32>, vector<8x192xf32> -> vector<8x192xf32>
    %126 = vector.extract_strided_slice %45 {offsets = [24, 0], sizes = [8, 192], strides = [1, 1]} : vector<64x192xf32> to vector<8x192xf32>
    %127 = vector.extract_strided_slice %126 {offsets = [0, 0], sizes = [8, 128], strides = [1, 1]} : vector<8x192xf32> to vector<8x128xf32>
    %128 = vector.extract_strided_slice %125 {offsets = [0, 0], sizes = [8, 128], strides = [1, 1]} : vector<8x192xf32> to vector<8x128xf32>
    %129 = arith.addf %127, %128 : vector<8x128xf32>
    %130 = arith.negf %129 : vector<8x128xf32>
    %131 = math.exp %130 : vector<8x128xf32>
    %cst_38 = arith.constant 1.000000e+00 : f32
    %132 = vector.broadcast %cst_38 : f32 to vector<8x128xf32>
    %133 = arith.addf %132, %131 : vector<8x128xf32>
    %134 = arith.divf %132, %133 : vector<8x128xf32>
    %135 = vector.extract_strided_slice %134 {offsets = [0, 0], sizes = [8, 64], strides = [1, 1]} : vector<8x128xf32> to vector<8x64xf32>
    %136 = vector.extract_strided_slice %134 {offsets = [0, 64], sizes = [8, 64], strides = [1, 1]} : vector<8x128xf32> to vector<8x64xf32>
    %137 = vector.extract_strided_slice %126 {offsets = [0, 128], sizes = [8, 64], strides = [1, 1]} : vector<8x192xf32> to vector<8x64xf32>
    %138 = vector.extract_strided_slice %125 {offsets = [0, 128], sizes = [8, 64], strides = [1, 1]} : vector<8x192xf32> to vector<8x64xf32>
    %139 = vector.broadcast %17 : vector<1x64xf32> to vector<8x64xf32>
    %140 = arith.addf %138, %139 : vector<8x64xf32>
    %141 = arith.mulf %135, %140 : vector<8x64xf32>
    %142 = arith.addf %137, %141 : vector<8x64xf32>
    %143 = math.tanh %142 : vector<8x64xf32>
    %cst_39 = arith.constant 1.000000e+00 : f32
    %144 = vector.broadcast %cst_39 : f32 to vector<8x64xf32>
    %145 = arith.subf %144, %136 : vector<8x64xf32>
    %146 = arith.mulf %145, %143 : vector<8x64xf32>
    %147 = arith.mulf %136, %122 : vector<8x64xf32>
    %148 = arith.addf %146, %147 : vector<8x64xf32>
    %c24 = arith.constant 24 : index
    %c0_40 = arith.constant 0 : index
    %149 = vector.load %arg6[%c24, %c0_40] : memref<64x64xf32, #tpu.memory_space<vmem>>, vector<8x64xf32>
    tpu.vector_store %arg6[%c24, %c0_40], %148 {strides = array<i32>} : memref<64x64xf32, #tpu.memory_space<vmem>>, vector<8x64xf32>,
    %c32 = arith.constant 32 : index
    %c0_41 = arith.constant 0 : index
    %150 = vector.load %arg7[%c32, %c0_41] : memref<64x64xf32, #tpu.memory_space<vmem>>, vector<8x64xf32>
    tpu.vector_store %arg7[%c32, %c0_41], %148 {strides = array<i32>} : memref<64x64xf32, #tpu.memory_space<vmem>>, vector<8x64xf32>,
    %cst_42 = arith.constant dense<0.000000e+00> : vector<8x192xf32>
    %151 = tpu.matmul %148, %6, %cst_42 {dimension_numbers = #tpu.dot_dimension_numbers<[1], [0], [0], [1], [0, 0, 1, 1], [], []>} : vector<8x64xf32>, vector<64x192xf32>, vector<8x192xf32> -> vector<8x192xf32>
    %152 = vector.extract_strided_slice %45 {offsets = [32, 0], sizes = [8, 192], strides = [1, 1]} : vector<64x192xf32> to vector<8x192xf32>
    %153 = vector.extract_strided_slice %152 {offsets = [0, 0], sizes = [8, 128], strides = [1, 1]} : vector<8x192xf32> to vector<8x128xf32>
    %154 = vector.extract_strided_slice %151 {offsets = [0, 0], sizes = [8, 128], strides = [1, 1]} : vector<8x192xf32> to vector<8x128xf32>
    %155 = arith.addf %153, %154 : vector<8x128xf32>
    %156 = arith.negf %155 : vector<8x128xf32>
    %157 = math.exp %156 : vector<8x128xf32>
    %cst_43 = arith.constant 1.000000e+00 : f32
    %158 = vector.broadcast %cst_43 : f32 to vector<8x128xf32>
    %159 = arith.addf %158, %157 : vector<8x128xf32>
    %160 = arith.divf %158, %159 : vector<8x128xf32>
    %161 = vector.extract_strided_slice %160 {offsets = [0, 0], sizes = [8, 64], strides = [1, 1]} : vector<8x128xf32> to vector<8x64xf32>
    %162 = vector.extract_strided_slice %160 {offsets = [0, 64], sizes = [8, 64], strides = [1, 1]} : vector<8x128xf32> to vector<8x64xf32>
    %163 = vector.extract_strided_slice %152 {offsets = [0, 128], sizes = [8, 64], strides = [1, 1]} : vector<8x192xf32> to vector<8x64xf32>
    %164 = vector.extract_strided_slice %151 {offsets = [0, 128], sizes = [8, 64], strides = [1, 1]} : vector<8x192xf32> to vector<8x64xf32>
    %165 = vector.broadcast %17 : vector<1x64xf32> to vector<8x64xf32>
    %166 = arith.addf %164, %165 : vector<8x64xf32>
    %167 = arith.mulf %161, %166 : vector<8x64xf32>
    %168 = arith.addf %163, %167 : vector<8x64xf32>
    %169 = math.tanh %168 : vector<8x64xf32>
    %cst_44 = arith.constant 1.000000e+00 : f32
    %170 = vector.broadcast %cst_44 : f32 to vector<8x64xf32>
    %171 = arith.subf %170, %162 : vector<8x64xf32>
    %172 = arith.mulf %171, %169 : vector<8x64xf32>
    %173 = arith.mulf %162, %148 : vector<8x64xf32>
    %174 = arith.addf %172, %173 : vector<8x64xf32>
    %c32_45 = arith.constant 32 : index
    %c0_46 = arith.constant 0 : index
    %175 = vector.load %arg6[%c32_45, %c0_46] : memref<64x64xf32, #tpu.memory_space<vmem>>, vector<8x64xf32>
    tpu.vector_store %arg6[%c32_45, %c0_46], %174 {strides = array<i32>} : memref<64x64xf32, #tpu.memory_space<vmem>>, vector<8x64xf32>,
    %c24_47 = arith.constant 24 : index
    %c0_48 = arith.constant 0 : index
    %176 = vector.load %arg7[%c24_47, %c0_48] : memref<64x64xf32, #tpu.memory_space<vmem>>, vector<8x64xf32>
    tpu.vector_store %arg7[%c24_47, %c0_48], %174 {strides = array<i32>} : memref<64x64xf32, #tpu.memory_space<vmem>>, vector<8x64xf32>,
    %cst_49 = arith.constant dense<0.000000e+00> : vector<8x192xf32>
    %177 = tpu.matmul %174, %6, %cst_49 {dimension_numbers = #tpu.dot_dimension_numbers<[1], [0], [0], [1], [0, 0, 1, 1], [], []>} : vector<8x64xf32>, vector<64x192xf32>, vector<8x192xf32> -> vector<8x192xf32>
    %178 = vector.extract_strided_slice %45 {offsets = [40, 0], sizes = [8, 192], strides = [1, 1]} : vector<64x192xf32> to vector<8x192xf32>
    %179 = vector.extract_strided_slice %178 {offsets = [0, 0], sizes = [8, 128], strides = [1, 1]} : vector<8x192xf32> to vector<8x128xf32>
    %180 = vector.extract_strided_slice %177 {offsets = [0, 0], sizes = [8, 128], strides = [1, 1]} : vector<8x192xf32> to vector<8x128xf32>
    %181 = arith.addf %179, %180 : vector<8x128xf32>
    %182 = arith.negf %181 : vector<8x128xf32>
    %183 = math.exp %182 : vector<8x128xf32>
    %cst_50 = arith.constant 1.000000e+00 : f32
    %184 = vector.broadcast %cst_50 : f32 to vector<8x128xf32>
    %185 = arith.addf %184, %183 : vector<8x128xf32>
    %186 = arith.divf %184, %185 : vector<8x128xf32>
    %187 = vector.extract_strided_slice %186 {offsets = [0, 0], sizes = [8, 64], strides = [1, 1]} : vector<8x128xf32> to vector<8x64xf32>
    %188 = vector.extract_strided_slice %186 {offsets = [0, 64], sizes = [8, 64], strides = [1, 1]} : vector<8x128xf32> to vector<8x64xf32>
    %189 = vector.extract_strided_slice %178 {offsets = [0, 128], sizes = [8, 64], strides = [1, 1]} : vector<8x192xf32> to vector<8x64xf32>
    %190 = vector.extract_strided_slice %177 {offsets = [0, 128], sizes = [8, 64], strides = [1, 1]} : vector<8x192xf32> to vector<8x64xf32>
    %191 = vector.broadcast %17 : vector<1x64xf32> to vector<8x64xf32>
    %192 = arith.addf %190, %191 : vector<8x64xf32>
    %193 = arith.mulf %187, %192 : vector<8x64xf32>
    %194 = arith.addf %189, %193 : vector<8x64xf32>
    %195 = math.tanh %194 : vector<8x64xf32>
    %cst_51 = arith.constant 1.000000e+00 : f32
    %196 = vector.broadcast %cst_51 : f32 to vector<8x64xf32>
    %197 = arith.subf %196, %188 : vector<8x64xf32>
    %198 = arith.mulf %197, %195 : vector<8x64xf32>
    %199 = arith.mulf %188, %174 : vector<8x64xf32>
    %200 = arith.addf %198, %199 : vector<8x64xf32>
    %c40_52 = arith.constant 40 : index
    %c0_53 = arith.constant 0 : index
    %201 = vector.load %arg6[%c40_52, %c0_53] : memref<64x64xf32, #tpu.memory_space<vmem>>, vector<8x64xf32>
    tpu.vector_store %arg6[%c40_52, %c0_53], %200 {strides = array<i32>} : memref<64x64xf32, #tpu.memory_space<vmem>>, vector<8x64xf32>,
    %c16_54 = arith.constant 16 : index
    %c0_55 = arith.constant 0 : index
    %202 = vector.load %arg7[%c16_54, %c0_55] : memref<64x64xf32, #tpu.memory_space<vmem>>, vector<8x64xf32>
    tpu.vector_store %arg7[%c16_54, %c0_55], %200 {strides = array<i32>} : memref<64x64xf32, #tpu.memory_space<vmem>>, vector<8x64xf32>,
    %cst_56 = arith.constant dense<0.000000e+00> : vector<8x192xf32>
    %203 = tpu.matmul %200, %6, %cst_56 {dimension_numbers = #tpu.dot_dimension_numbers<[1], [0], [0], [1], [0, 0, 1, 1], [], []>} : vector<8x64xf32>, vector<64x192xf32>, vector<8x192xf32> -> vector<8x192xf32>
    %204 = vector.extract_strided_slice %45 {offsets = [48, 0], sizes = [8, 192], strides = [1, 1]} : vector<64x192xf32> to vector<8x192xf32>
    %205 = vector.extract_strided_slice %204 {offsets = [0, 0], sizes = [8, 128], strides = [1, 1]} : vector<8x192xf32> to vector<8x128xf32>
    %206 = vector.extract_strided_slice %203 {offsets = [0, 0], sizes = [8, 128], strides = [1, 1]} : vector<8x192xf32> to vector<8x128xf32>
    %207 = arith.addf %205, %206 : vector<8x128xf32>
    %208 = arith.negf %207 : vector<8x128xf32>
    %209 = math.exp %208 : vector<8x128xf32>
    %cst_57 = arith.constant 1.000000e+00 : f32
    %210 = vector.broadcast %cst_57 : f32 to vector<8x128xf32>
    %211 = arith.addf %210, %209 : vector<8x128xf32>
    %212 = arith.divf %210, %211 : vector<8x128xf32>
    %213 = vector.extract_strided_slice %212 {offsets = [0, 0], sizes = [8, 64], strides = [1, 1]} : vector<8x128xf32> to vector<8x64xf32>
    %214 = vector.extract_strided_slice %212 {offsets = [0, 64], sizes = [8, 64], strides = [1, 1]} : vector<8x128xf32> to vector<8x64xf32>
    %215 = vector.extract_strided_slice %204 {offsets = [0, 128], sizes = [8, 64], strides = [1, 1]} : vector<8x192xf32> to vector<8x64xf32>
    %216 = vector.extract_strided_slice %203 {offsets = [0, 128], sizes = [8, 64], strides = [1, 1]} : vector<8x192xf32> to vector<8x64xf32>
    %217 = vector.broadcast %17 : vector<1x64xf32> to vector<8x64xf32>
    %218 = arith.addf %216, %217 : vector<8x64xf32>
    %219 = arith.mulf %213, %218 : vector<8x64xf32>
    %220 = arith.addf %215, %219 : vector<8x64xf32>
    %221 = math.tanh %220 : vector<8x64xf32>
    %cst_58 = arith.constant 1.000000e+00 : f32
    %222 = vector.broadcast %cst_58 : f32 to vector<8x64xf32>
    %223 = arith.subf %222, %214 : vector<8x64xf32>
    %224 = arith.mulf %223, %221 : vector<8x64xf32>
    %225 = arith.mulf %214, %200 : vector<8x64xf32>
    %226 = arith.addf %224, %225 : vector<8x64xf32>
    %c48_59 = arith.constant 48 : index
    %c0_60 = arith.constant 0 : index
    %227 = vector.load %arg6[%c48_59, %c0_60] : memref<64x64xf32, #tpu.memory_space<vmem>>, vector<8x64xf32>
    tpu.vector_store %arg6[%c48_59, %c0_60], %226 {strides = array<i32>} : memref<64x64xf32, #tpu.memory_space<vmem>>, vector<8x64xf32>,
    %c8_61 = arith.constant 8 : index
    %c0_62 = arith.constant 0 : index
    %228 = vector.load %arg7[%c8_61, %c0_62] : memref<64x64xf32, #tpu.memory_space<vmem>>, vector<8x64xf32>
    tpu.vector_store %arg7[%c8_61, %c0_62], %226 {strides = array<i32>} : memref<64x64xf32, #tpu.memory_space<vmem>>, vector<8x64xf32>,
    %cst_63 = arith.constant dense<0.000000e+00> : vector<8x192xf32>
    %229 = tpu.matmul %226, %6, %cst_63 {dimension_numbers = #tpu.dot_dimension_numbers<[1], [0], [0], [1], [0, 0, 1, 1], [], []>} : vector<8x64xf32>, vector<64x192xf32>, vector<8x192xf32> -> vector<8x192xf32>
    %230 = vector.extract_strided_slice %45 {offsets = [56, 0], sizes = [8, 192], strides = [1, 1]} : vector<64x192xf32> to vector<8x192xf32>
    %231 = vector.extract_strided_slice %230 {offsets = [0, 0], sizes = [8, 128], strides = [1, 1]} : vector<8x192xf32> to vector<8x128xf32>
    %232 = vector.extract_strided_slice %229 {offsets = [0, 0], sizes = [8, 128], strides = [1, 1]} : vector<8x192xf32> to vector<8x128xf32>
    %233 = arith.addf %231, %232 : vector<8x128xf32>
    %234 = arith.negf %233 : vector<8x128xf32>
    %235 = math.exp %234 : vector<8x128xf32>
    %cst_64 = arith.constant 1.000000e+00 : f32
    %236 = vector.broadcast %cst_64 : f32 to vector<8x128xf32>
    %237 = arith.addf %236, %235 : vector<8x128xf32>
    %238 = arith.divf %236, %237 : vector<8x128xf32>
    %239 = vector.extract_strided_slice %238 {offsets = [0, 0], sizes = [8, 64], strides = [1, 1]} : vector<8x128xf32> to vector<8x64xf32>
    %240 = vector.extract_strided_slice %238 {offsets = [0, 64], sizes = [8, 64], strides = [1, 1]} : vector<8x128xf32> to vector<8x64xf32>
    %241 = vector.extract_strided_slice %230 {offsets = [0, 128], sizes = [8, 64], strides = [1, 1]} : vector<8x192xf32> to vector<8x64xf32>
    %242 = vector.extract_strided_slice %229 {offsets = [0, 128], sizes = [8, 64], strides = [1, 1]} : vector<8x192xf32> to vector<8x64xf32>
    %243 = vector.broadcast %17 : vector<1x64xf32> to vector<8x64xf32>
    %244 = arith.addf %242, %243 : vector<8x64xf32>
    %245 = arith.mulf %239, %244 : vector<8x64xf32>
    %246 = arith.addf %241, %245 : vector<8x64xf32>
    %247 = math.tanh %246 : vector<8x64xf32>
    %cst_65 = arith.constant 1.000000e+00 : f32
    %248 = vector.broadcast %cst_65 : f32 to vector<8x64xf32>
    %249 = arith.subf %248, %240 : vector<8x64xf32>
    %250 = arith.mulf %249, %247 : vector<8x64xf32>
    %251 = arith.mulf %240, %226 : vector<8x64xf32>
    %252 = arith.addf %250, %251 : vector<8x64xf32>
    %c56_66 = arith.constant 56 : index
    %c0_67 = arith.constant 0 : index
    %253 = vector.load %arg6[%c56_66, %c0_67] : memref<64x64xf32, #tpu.memory_space<vmem>>, vector<8x64xf32>
    tpu.vector_store %arg6[%c56_66, %c0_67], %252 {strides = array<i32>} : memref<64x64xf32, #tpu.memory_space<vmem>>, vector<8x64xf32>,
    %c0_68 = arith.constant 0 : index
    %c0_69 = arith.constant 0 : index
    %254 = vector.load %arg7[%c0_68, %c0_69] : memref<64x64xf32, #tpu.memory_space<vmem>>, vector<8x64xf32>
    tpu.vector_store %arg7[%c0_68, %c0_69], %252 {strides = array<i32>} : memref<64x64xf32, #tpu.memory_space<vmem>>, vector<8x64xf32>,
    %c0_70 = arith.constant 0 : index
    %c0_71 = arith.constant 0 : index
    %255 = vector.load %arg6[%c0_70, %c0_71] : memref<64x64xf32, #tpu.memory_space<vmem>>, vector<64x64xf32>
    %cst_72 = arith.constant dense<0.000000e+00> : vector<64x192xf32>
    %256 = tpu.matmul %255, %8, %cst_72 {dimension_numbers = #tpu.dot_dimension_numbers<[1], [0], [0], [1], [0, 0, 1, 1], [], []>} : vector<64x64xf32>, vector<64x192xf32>, vector<64x192xf32> -> vector<64x192xf32>
    %c0_73 = arith.constant 0 : index
    %c0_74 = arith.constant 0 : index
    %257 = vector.load %arg7[%c0_73, %c0_74] : memref<64x64xf32, #tpu.memory_space<vmem>>, vector<64x64xf32>
    %cst_75 = arith.constant dense<0.000000e+00> : vector<64x192xf32>
    %258 = tpu.matmul %257, %10, %cst_75 {dimension_numbers = #tpu.dot_dimension_numbers<[1], [0], [0], [1], [0, 0, 1, 1], [], []>} : vector<64x64xf32>, vector<64x192xf32>, vector<64x192xf32> -> vector<64x192xf32>
    %259 = arith.addf %256, %258 : vector<64x192xf32>
    %260 = vector.broadcast %18 : vector<1x192xf32> to vector<64x192xf32>
    %261 = arith.addf %259, %260 : vector<64x192xf32>
    %c0_i32_76 = arith.constant 0 : i32
    %262 = tpu.memref_slice %arg10[%c0_i32_76] : memref<1x!tpu.dma_semaphore, #tpu.memory_space<semaphore_mem>> -> memref<1x!tpu.dma_semaphore, #tpu.memory_space<semaphore_mem>>
    %263 = tpu.memref_squeeze %262 : memref<1x!tpu.dma_semaphore, #tpu.memory_space<semaphore_mem>> -> memref<!tpu.dma_semaphore, #tpu.memory_space<semaphore_mem>>
    tpu.wait_dma2 semaphore(%263 : memref<!tpu.dma_semaphore, #tpu.memory_space<semaphore_mem>>) src(%arg3 : memref<512x256xbf16, #tpu.memory_space<any>>) dst(%arg9 : memref<512x256xbf16, #tpu.memory_space<vmem>>)
    %264 = vector.shape_cast %15 : vector<1x256xf32> to vector<1x256xf32>
    %265 = vector.broadcast %264 : vector<1x256xf32> to vector<8x256xf32>
    %c0_77 = arith.constant 0 : index
    %c0_78 = arith.constant 0 : index
    %266 = vector.load %arg8[%c0_77, %c0_78] : memref<8x256xf32, #tpu.memory_space<vmem>>, vector<8x256xf32>
    tpu.vector_store %arg8[%c0_77, %c0_78], %265 {strides = array<i32>} : memref<8x256xf32, #tpu.memory_space<vmem>>, vector<8x256xf32>,
    %cst_79 = arith.constant 0.000000e+00 : f32
    %267 = vector.broadcast %cst_79 : f32 to vector<8x64xf32>
    %cst_80 = arith.constant dense<0.000000e+00> : vector<8x192xf32>
    %268 = tpu.matmul %267, %12, %cst_80 {dimension_numbers = #tpu.dot_dimension_numbers<[1], [0], [0], [1], [0, 0, 1, 1], [], []>} : vector<8x64xf32>, vector<64x192xf32>, vector<8x192xf32> -> vector<8x192xf32>
    %269 = vector.extract_strided_slice %261 {offsets = [0, 0], sizes = [8, 192], strides = [1, 1]} : vector<64x192xf32> to vector<8x192xf32>
    %270 = vector.extract_strided_slice %269 {offsets = [0, 0], sizes = [8, 128], strides = [1, 1]} : vector<8x192xf32> to vector<8x128xf32>
    %271 = vector.extract_strided_slice %268 {offsets = [0, 0], sizes = [8, 128], strides = [1, 1]} : vector<8x192xf32> to vector<8x128xf32>
    %272 = arith.addf %270, %271 : vector<8x128xf32>
    %273 = arith.negf %272 : vector<8x128xf32>
    %274 = math.exp %273 : vector<8x128xf32>
    %cst_81 = arith.constant 1.000000e+00 : f32
    %275 = vector.broadcast %cst_81 : f32 to vector<8x128xf32>
    %276 = arith.addf %275, %274 : vector<8x128xf32>
    %277 = arith.divf %275, %276 : vector<8x128xf32>
    %278 = vector.extract_strided_slice %277 {offsets = [0, 0], sizes = [8, 64], strides = [1, 1]} : vector<8x128xf32> to vector<8x64xf32>
    %279 = vector.extract_strided_slice %277 {offsets = [0, 64], sizes = [8, 64], strides = [1, 1]} : vector<8x128xf32> to vector<8x64xf32>
    %280 = vector.extract_strided_slice %269 {offsets = [0, 128], sizes = [8, 64], strides = [1, 1]} : vector<8x192xf32> to vector<8x64xf32>
    %281 = vector.extract_strided_slice %268 {offsets = [0, 128], sizes = [8, 64], strides = [1, 1]} : vector<8x192xf32> to vector<8x64xf32>
    %282 = vector.broadcast %19 : vector<1x64xf32> to vector<8x64xf32>
    %283 = arith.addf %281, %282 : vector<8x64xf32>
    %284 = arith.mulf %278, %283 : vector<8x64xf32>
    %285 = arith.addf %280, %284 : vector<8x64xf32>
    %286 = math.tanh %285 : vector<8x64xf32>
    %cst_82 = arith.constant 1.000000e+00 : f32
    %287 = vector.broadcast %cst_82 : f32 to vector<8x64xf32>
    %288 = arith.subf %287, %279 : vector<8x64xf32>
    %289 = arith.mulf %288, %286 : vector<8x64xf32>
    %290 = arith.mulf %279, %267 : vector<8x64xf32>
    %291 = arith.addf %289, %290 : vector<8x64xf32>
    %c0_83 = arith.constant 0 : index
    %c0_84 = arith.constant 0 : index
    %292 = vector.load %arg9[%c0_83, %c0_84] : memref<512x256xbf16, #tpu.memory_space<vmem>>, vector<64x256xbf16>
    %293 = arith.extf %292 : vector<64x256xbf16> to vector<64x256xf32>
    %c0_85 = arith.constant 0 : index
    %c0_86 = arith.constant 0 : index
    %294 = vector.load %arg8[%c0_85, %c0_86] : memref<8x256xf32, #tpu.memory_space<vmem>>, vector<8x256xf32>
    %cst_87 = arith.constant dense<0.000000e+00> : vector<8x256xf32>
    %295 = tpu.matmul %291, %293, %cst_87 {dimension_numbers = #tpu.dot_dimension_numbers<[1], [0], [0], [1], [0, 0, 1, 1], [], []>} : vector<8x64xf32>, vector<64x256xf32>, vector<8x256xf32> -> vector<8x256xf32>
    %296 = arith.addf %294, %295 : vector<8x256xf32>
    %c0_88 = arith.constant 0 : index
    %c0_89 = arith.constant 0 : index
    %297 = vector.load %arg8[%c0_88, %c0_89] : memref<8x256xf32, #tpu.memory_space<vmem>>, vector<8x256xf32>
    tpu.vector_store %arg8[%c0_88, %c0_89], %296 {strides = array<i32>} : memref<8x256xf32, #tpu.memory_space<vmem>>, vector<8x256xf32>,
    %cst_90 = arith.constant dense<0.000000e+00> : vector<8x192xf32>
    %298 = tpu.matmul %291, %12, %cst_90 {dimension_numbers = #tpu.dot_dimension_numbers<[1], [0], [0], [1], [0, 0, 1, 1], [], []>} : vector<8x64xf32>, vector<64x192xf32>, vector<8x192xf32> -> vector<8x192xf32>
    %299 = vector.extract_strided_slice %261 {offsets = [8, 0], sizes = [8, 192], strides = [1, 1]} : vector<64x192xf32> to vector<8x192xf32>
    %300 = vector.extract_strided_slice %299 {offsets = [0, 0], sizes = [8, 128], strides = [1, 1]} : vector<8x192xf32> to vector<8x128xf32>
    %301 = vector.extract_strided_slice %298 {offsets = [0, 0], sizes = [8, 128], strides = [1, 1]} : vector<8x192xf32> to vector<8x128xf32>
    %302 = arith.addf %300, %301 : vector<8x128xf32>
    %303 = arith.negf %302 : vector<8x128xf32>
    %304 = math.exp %303 : vector<8x128xf32>
    %cst_91 = arith.constant 1.000000e+00 : f32
    %305 = vector.broadcast %cst_91 : f32 to vector<8x128xf32>
    %306 = arith.addf %305, %304 : vector<8x128xf32>
    %307 = arith.divf %305, %306 : vector<8x128xf32>
    %308 = vector.extract_strided_slice %307 {offsets = [0, 0], sizes = [8, 64], strides = [1, 1]} : vector<8x128xf32> to vector<8x64xf32>
    %309 = vector.extract_strided_slice %307 {offsets = [0, 64], sizes = [8, 64], strides = [1, 1]} : vector<8x128xf32> to vector<8x64xf32>
    %310 = vector.extract_strided_slice %299 {offsets = [0, 128], sizes = [8, 64], strides = [1, 1]} : vector<8x192xf32> to vector<8x64xf32>
    %311 = vector.extract_strided_slice %298 {offsets = [0, 128], sizes = [8, 64], strides = [1, 1]} : vector<8x192xf32> to vector<8x64xf32>
    %312 = vector.broadcast %19 : vector<1x64xf32> to vector<8x64xf32>
    %313 = arith.addf %311, %312 : vector<8x64xf32>
    %314 = arith.mulf %308, %313 : vector<8x64xf32>
    %315 = arith.addf %310, %314 : vector<8x64xf32>
    %316 = math.tanh %315 : vector<8x64xf32>
    %cst_92 = arith.constant 1.000000e+00 : f32
    %317 = vector.broadcast %cst_92 : f32 to vector<8x64xf32>
    %318 = arith.subf %317, %309 : vector<8x64xf32>
    %319 = arith.mulf %318, %316 : vector<8x64xf32>
    %320 = arith.mulf %309, %291 : vector<8x64xf32>
    %321 = arith.addf %319, %320 : vector<8x64xf32>
    %c64 = arith.constant 64 : index
    %c0_93 = arith.constant 0 : index
    %322 = vector.load %arg9[%c64, %c0_93] : memref<512x256xbf16, #tpu.memory_space<vmem>>, vector<64x256xbf16>
    %323 = arith.extf %322 : vector<64x256xbf16> to vector<64x256xf32>
    %c0_94 = arith.constant 0 : index
    %c0_95 = arith.constant 0 : index
    %324 = vector.load %arg8[%c0_94, %c0_95] : memref<8x256xf32, #tpu.memory_space<vmem>>, vector<8x256xf32>
    %cst_96 = arith.constant dense<0.000000e+00> : vector<8x256xf32>
    %325 = tpu.matmul %321, %323, %cst_96 {dimension_numbers = #tpu.dot_dimension_numbers<[1], [0], [0], [1], [0, 0, 1, 1], [], []>} : vector<8x64xf32>, vector<64x256xf32>, vector<8x256xf32> -> vector<8x256xf32>
    %326 = arith.addf %324, %325 : vector<8x256xf32>
    %c0_97 = arith.constant 0 : index
    %c0_98 = arith.constant 0 : index
    %327 = vector.load %arg8[%c0_97, %c0_98] : memref<8x256xf32, #tpu.memory_space<vmem>>, vector<8x256xf32>
    tpu.vector_store %arg8[%c0_97, %c0_98], %326 {strides = array<i32>} : memref<8x256xf32, #tpu.memory_space<vmem>>, vector<8x256xf32>,
    %cst_99 = arith.constant dense<0.000000e+00> : vector<8x192xf32>
    %328 = tpu.matmul %321, %12, %cst_99 {dimension_numbers = #tpu.dot_dimension_numbers<[1], [0], [0], [1], [0, 0, 1, 1], [], []>} : vector<8x64xf32>, vector<64x192xf32>, vector<8x192xf32> -> vector<8x192xf32>
    %329 = vector.extract_strided_slice %261 {offsets = [16, 0], sizes = [8, 192], strides = [1, 1]} : vector<64x192xf32> to vector<8x192xf32>
    %330 = vector.extract_strided_slice %329 {offsets = [0, 0], sizes = [8, 128], strides = [1, 1]} : vector<8x192xf32> to vector<8x128xf32>
    %331 = vector.extract_strided_slice %328 {offsets = [0, 0], sizes = [8, 128], strides = [1, 1]} : vector<8x192xf32> to vector<8x128xf32>
    %332 = arith.addf %330, %331 : vector<8x128xf32>
    %333 = arith.negf %332 : vector<8x128xf32>
    %334 = math.exp %333 : vector<8x128xf32>
    %cst_100 = arith.constant 1.000000e+00 : f32
    %335 = vector.broadcast %cst_100 : f32 to vector<8x128xf32>
    %336 = arith.addf %335, %334 : vector<8x128xf32>
    %337 = arith.divf %335, %336 : vector<8x128xf32>
    %338 = vector.extract_strided_slice %337 {offsets = [0, 0], sizes = [8, 64], strides = [1, 1]} : vector<8x128xf32> to vector<8x64xf32>
    %339 = vector.extract_strided_slice %337 {offsets = [0, 64], sizes = [8, 64], strides = [1, 1]} : vector<8x128xf32> to vector<8x64xf32>
    %340 = vector.extract_strided_slice %329 {offsets = [0, 128], sizes = [8, 64], strides = [1, 1]} : vector<8x192xf32> to vector<8x64xf32>
    %341 = vector.extract_strided_slice %328 {offsets = [0, 128], sizes = [8, 64], strides = [1, 1]} : vector<8x192xf32> to vector<8x64xf32>
    %342 = vector.broadcast %19 : vector<1x64xf32> to vector<8x64xf32>
    %343 = arith.addf %341, %342 : vector<8x64xf32>
    %344 = arith.mulf %338, %343 : vector<8x64xf32>
    %345 = arith.addf %340, %344 : vector<8x64xf32>
    %346 = math.tanh %345 : vector<8x64xf32>
    %cst_101 = arith.constant 1.000000e+00 : f32
    %347 = vector.broadcast %cst_101 : f32 to vector<8x64xf32>
    %348 = arith.subf %347, %339 : vector<8x64xf32>
    %349 = arith.mulf %348, %346 : vector<8x64xf32>
    %350 = arith.mulf %339, %321 : vector<8x64xf32>
    %351 = arith.addf %349, %350 : vector<8x64xf32>
    %c128 = arith.constant 128 : index
    %c0_102 = arith.constant 0 : index
    %352 = vector.load %arg9[%c128, %c0_102] : memref<512x256xbf16, #tpu.memory_space<vmem>>, vector<64x256xbf16>
    %353 = arith.extf %352 : vector<64x256xbf16> to vector<64x256xf32>
    %c0_103 = arith.constant 0 : index
    %c0_104 = arith.constant 0 : index
    %354 = vector.load %arg8[%c0_103, %c0_104] : memref<8x256xf32, #tpu.memory_space<vmem>>, vector<8x256xf32>
    %cst_105 = arith.constant dense<0.000000e+00> : vector<8x256xf32>
    %355 = tpu.matmul %351, %353, %cst_105 {dimension_numbers = #tpu.dot_dimension_numbers<[1], [0], [0], [1], [0, 0, 1, 1], [], []>} : vector<8x64xf32>, vector<64x256xf32>, vector<8x256xf32> -> vector<8x256xf32>
    %356 = arith.addf %354, %355 : vector<8x256xf32>
    %c0_106 = arith.constant 0 : index
    %c0_107 = arith.constant 0 : index
    %357 = vector.load %arg8[%c0_106, %c0_107] : memref<8x256xf32, #tpu.memory_space<vmem>>, vector<8x256xf32>
    tpu.vector_store %arg8[%c0_106, %c0_107], %356 {strides = array<i32>} : memref<8x256xf32, #tpu.memory_space<vmem>>, vector<8x256xf32>,
    %cst_108 = arith.constant dense<0.000000e+00> : vector<8x192xf32>
    %358 = tpu.matmul %351, %12, %cst_108 {dimension_numbers = #tpu.dot_dimension_numbers<[1], [0], [0], [1], [0, 0, 1, 1], [], []>} : vector<8x64xf32>, vector<64x192xf32>, vector<8x192xf32> -> vector<8x192xf32>
    %359 = vector.extract_strided_slice %261 {offsets = [24, 0], sizes = [8, 192], strides = [1, 1]} : vector<64x192xf32> to vector<8x192xf32>
    %360 = vector.extract_strided_slice %359 {offsets = [0, 0], sizes = [8, 128], strides = [1, 1]} : vector<8x192xf32> to vector<8x128xf32>
    %361 = vector.extract_strided_slice %358 {offsets = [0, 0], sizes = [8, 128], strides = [1, 1]} : vector<8x192xf32> to vector<8x128xf32>
    %362 = arith.addf %360, %361 : vector<8x128xf32>
    %363 = arith.negf %362 : vector<8x128xf32>
    %364 = math.exp %363 : vector<8x128xf32>
    %cst_109 = arith.constant 1.000000e+00 : f32
    %365 = vector.broadcast %cst_109 : f32 to vector<8x128xf32>
    %366 = arith.addf %365, %364 : vector<8x128xf32>
    %367 = arith.divf %365, %366 : vector<8x128xf32>
    %368 = vector.extract_strided_slice %367 {offsets = [0, 0], sizes = [8, 64], strides = [1, 1]} : vector<8x128xf32> to vector<8x64xf32>
    %369 = vector.extract_strided_slice %367 {offsets = [0, 64], sizes = [8, 64], strides = [1, 1]} : vector<8x128xf32> to vector<8x64xf32>
    %370 = vector.extract_strided_slice %359 {offsets = [0, 128], sizes = [8, 64], strides = [1, 1]} : vector<8x192xf32> to vector<8x64xf32>
    %371 = vector.extract_strided_slice %358 {offsets = [0, 128], sizes = [8, 64], strides = [1, 1]} : vector<8x192xf32> to vector<8x64xf32>
    %372 = vector.broadcast %19 : vector<1x64xf32> to vector<8x64xf32>
    %373 = arith.addf %371, %372 : vector<8x64xf32>
    %374 = arith.mulf %368, %373 : vector<8x64xf32>
    %375 = arith.addf %370, %374 : vector<8x64xf32>
    %376 = math.tanh %375 : vector<8x64xf32>
    %cst_110 = arith.constant 1.000000e+00 : f32
    %377 = vector.broadcast %cst_110 : f32 to vector<8x64xf32>
    %378 = arith.subf %377, %369 : vector<8x64xf32>
    %379 = arith.mulf %378, %376 : vector<8x64xf32>
    %380 = arith.mulf %369, %351 : vector<8x64xf32>
    %381 = arith.addf %379, %380 : vector<8x64xf32>
    %c192 = arith.constant 192 : index
    %c0_111 = arith.constant 0 : index
    %382 = vector.load %arg9[%c192, %c0_111] : memref<512x256xbf16, #tpu.memory_space<vmem>>, vector<64x256xbf16>
    %383 = arith.extf %382 : vector<64x256xbf16> to vector<64x256xf32>
    %c0_112 = arith.constant 0 : index
    %c0_113 = arith.constant 0 : index
    %384 = vector.load %arg8[%c0_112, %c0_113] : memref<8x256xf32, #tpu.memory_space<vmem>>, vector<8x256xf32>
    %cst_114 = arith.constant dense<0.000000e+00> : vector<8x256xf32>
    %385 = tpu.matmul %381, %383, %cst_114 {dimension_numbers = #tpu.dot_dimension_numbers<[1], [0], [0], [1], [0, 0, 1, 1], [], []>} : vector<8x64xf32>, vector<64x256xf32>, vector<8x256xf32> -> vector<8x256xf32>
    %386 = arith.addf %384, %385 : vector<8x256xf32>
    %c0_115 = arith.constant 0 : index
    %c0_116 = arith.constant 0 : index
    %387 = vector.load %arg8[%c0_115, %c0_116] : memref<8x256xf32, #tpu.memory_space<vmem>>, vector<8x256xf32>
    tpu.vector_store %arg8[%c0_115, %c0_116], %386 {strides = array<i32>} : memref<8x256xf32, #tpu.memory_space<vmem>>, vector<8x256xf32>,
    %cst_117 = arith.constant dense<0.000000e+00> : vector<8x192xf32>
    %388 = tpu.matmul %381, %12, %cst_117 {dimension_numbers = #tpu.dot_dimension_numbers<[1], [0], [0], [1], [0, 0, 1, 1], [], []>} : vector<8x64xf32>, vector<64x192xf32>, vector<8x192xf32> -> vector<8x192xf32>
    %389 = vector.extract_strided_slice %261 {offsets = [32, 0], sizes = [8, 192], strides = [1, 1]} : vector<64x192xf32> to vector<8x192xf32>
    %390 = vector.extract_strided_slice %389 {offsets = [0, 0], sizes = [8, 128], strides = [1, 1]} : vector<8x192xf32> to vector<8x128xf32>
    %391 = vector.extract_strided_slice %388 {offsets = [0, 0], sizes = [8, 128], strides = [1, 1]} : vector<8x192xf32> to vector<8x128xf32>
    %392 = arith.addf %390, %391 : vector<8x128xf32>
    %393 = arith.negf %392 : vector<8x128xf32>
    %394 = math.exp %393 : vector<8x128xf32>
    %cst_118 = arith.constant 1.000000e+00 : f32
    %395 = vector.broadcast %cst_118 : f32 to vector<8x128xf32>
    %396 = arith.addf %395, %394 : vector<8x128xf32>
    %397 = arith.divf %395, %396 : vector<8x128xf32>
    %398 = vector.extract_strided_slice %397 {offsets = [0, 0], sizes = [8, 64], strides = [1, 1]} : vector<8x128xf32> to vector<8x64xf32>
    %399 = vector.extract_strided_slice %397 {offsets = [0, 64], sizes = [8, 64], strides = [1, 1]} : vector<8x128xf32> to vector<8x64xf32>
    %400 = vector.extract_strided_slice %389 {offsets = [0, 128], sizes = [8, 64], strides = [1, 1]} : vector<8x192xf32> to vector<8x64xf32>
    %401 = vector.extract_strided_slice %388 {offsets = [0, 128], sizes = [8, 64], strides = [1, 1]} : vector<8x192xf32> to vector<8x64xf32>
    %402 = vector.broadcast %19 : vector<1x64xf32> to vector<8x64xf32>
    %403 = arith.addf %401, %402 : vector<8x64xf32>
    %404 = arith.mulf %398, %403 : vector<8x64xf32>
    %405 = arith.addf %400, %404 : vector<8x64xf32>
    %406 = math.tanh %405 : vector<8x64xf32>
    %cst_119 = arith.constant 1.000000e+00 : f32
    %407 = vector.broadcast %cst_119 : f32 to vector<8x64xf32>
    %408 = arith.subf %407, %399 : vector<8x64xf32>
    %409 = arith.mulf %408, %406 : vector<8x64xf32>
    %410 = arith.mulf %399, %381 : vector<8x64xf32>
    %411 = arith.addf %409, %410 : vector<8x64xf32>
    %c256 = arith.constant 256 : index
    %c0_120 = arith.constant 0 : index
    %412 = vector.load %arg9[%c256, %c0_120] : memref<512x256xbf16, #tpu.memory_space<vmem>>, vector<64x256xbf16>
    %413 = arith.extf %412 : vector<64x256xbf16> to vector<64x256xf32>
    %c0_121 = arith.constant 0 : index
    %c0_122 = arith.constant 0 : index
    %414 = vector.load %arg8[%c0_121, %c0_122] : memref<8x256xf32, #tpu.memory_space<vmem>>, vector<8x256xf32>
    %cst_123 = arith.constant dense<0.000000e+00> : vector<8x256xf32>
    %415 = tpu.matmul %411, %413, %cst_123 {dimension_numbers = #tpu.dot_dimension_numbers<[1], [0], [0], [1], [0, 0, 1, 1], [], []>} : vector<8x64xf32>, vector<64x256xf32>, vector<8x256xf32> -> vector<8x256xf32>
    %416 = arith.addf %414, %415 : vector<8x256xf32>
    %c0_124 = arith.constant 0 : index
    %c0_125 = arith.constant 0 : index
    %417 = vector.load %arg8[%c0_124, %c0_125] : memref<8x256xf32, #tpu.memory_space<vmem>>, vector<8x256xf32>
    tpu.vector_store %arg8[%c0_124, %c0_125], %416 {strides = array<i32>} : memref<8x256xf32, #tpu.memory_space<vmem>>, vector<8x256xf32>,
    %cst_126 = arith.constant dense<0.000000e+00> : vector<8x192xf32>
    %418 = tpu.matmul %411, %12, %cst_126 {dimension_numbers = #tpu.dot_dimension_numbers<[1], [0], [0], [1], [0, 0, 1, 1], [], []>} : vector<8x64xf32>, vector<64x192xf32>, vector<8x192xf32> -> vector<8x192xf32>
    %419 = vector.extract_strided_slice %261 {offsets = [40, 0], sizes = [8, 192], strides = [1, 1]} : vector<64x192xf32> to vector<8x192xf32>
    %420 = vector.extract_strided_slice %419 {offsets = [0, 0], sizes = [8, 128], strides = [1, 1]} : vector<8x192xf32> to vector<8x128xf32>
    %421 = vector.extract_strided_slice %418 {offsets = [0, 0], sizes = [8, 128], strides = [1, 1]} : vector<8x192xf32> to vector<8x128xf32>
    %422 = arith.addf %420, %421 : vector<8x128xf32>
    %423 = arith.negf %422 : vector<8x128xf32>
    %424 = math.exp %423 : vector<8x128xf32>
    %cst_127 = arith.constant 1.000000e+00 : f32
    %425 = vector.broadcast %cst_127 : f32 to vector<8x128xf32>
    %426 = arith.addf %425, %424 : vector<8x128xf32>
    %427 = arith.divf %425, %426 : vector<8x128xf32>
    %428 = vector.extract_strided_slice %427 {offsets = [0, 0], sizes = [8, 64], strides = [1, 1]} : vector<8x128xf32> to vector<8x64xf32>
    %429 = vector.extract_strided_slice %427 {offsets = [0, 64], sizes = [8, 64], strides = [1, 1]} : vector<8x128xf32> to vector<8x64xf32>
    %430 = vector.extract_strided_slice %419 {offsets = [0, 128], sizes = [8, 64], strides = [1, 1]} : vector<8x192xf32> to vector<8x64xf32>
    %431 = vector.extract_strided_slice %418 {offsets = [0, 128], sizes = [8, 64], strides = [1, 1]} : vector<8x192xf32> to vector<8x64xf32>
    %432 = vector.broadcast %19 : vector<1x64xf32> to vector<8x64xf32>
    %433 = arith.addf %431, %432 : vector<8x64xf32>
    %434 = arith.mulf %428, %433 : vector<8x64xf32>
    %435 = arith.addf %430, %434 : vector<8x64xf32>
    %436 = math.tanh %435 : vector<8x64xf32>
    %cst_128 = arith.constant 1.000000e+00 : f32
    %437 = vector.broadcast %cst_128 : f32 to vector<8x64xf32>
    %438 = arith.subf %437, %429 : vector<8x64xf32>
    %439 = arith.mulf %438, %436 : vector<8x64xf32>
    %440 = arith.mulf %429, %411 : vector<8x64xf32>
    %441 = arith.addf %439, %440 : vector<8x64xf32>
    %c320 = arith.constant 320 : index
    %c0_129 = arith.constant 0 : index
    %442 = vector.load %arg9[%c320, %c0_129] : memref<512x256xbf16, #tpu.memory_space<vmem>>, vector<64x256xbf16>
    %443 = arith.extf %442 : vector<64x256xbf16> to vector<64x256xf32>
    %c0_130 = arith.constant 0 : index
    %c0_131 = arith.constant 0 : index
    %444 = vector.load %arg8[%c0_130, %c0_131] : memref<8x256xf32, #tpu.memory_space<vmem>>, vector<8x256xf32>
    %cst_132 = arith.constant dense<0.000000e+00> : vector<8x256xf32>
    %445 = tpu.matmul %441, %443, %cst_132 {dimension_numbers = #tpu.dot_dimension_numbers<[1], [0], [0], [1], [0, 0, 1, 1], [], []>} : vector<8x64xf32>, vector<64x256xf32>, vector<8x256xf32> -> vector<8x256xf32>
    %446 = arith.addf %444, %445 : vector<8x256xf32>
    %c0_133 = arith.constant 0 : index
    %c0_134 = arith.constant 0 : index
    %447 = vector.load %arg8[%c0_133, %c0_134] : memref<8x256xf32, #tpu.memory_space<vmem>>, vector<8x256xf32>
    tpu.vector_store %arg8[%c0_133, %c0_134], %446 {strides = array<i32>} : memref<8x256xf32, #tpu.memory_space<vmem>>, vector<8x256xf32>,
    %cst_135 = arith.constant dense<0.000000e+00> : vector<8x192xf32>
    %448 = tpu.matmul %441, %12, %cst_135 {dimension_numbers = #tpu.dot_dimension_numbers<[1], [0], [0], [1], [0, 0, 1, 1], [], []>} : vector<8x64xf32>, vector<64x192xf32>, vector<8x192xf32> -> vector<8x192xf32>
    %449 = vector.extract_strided_slice %261 {offsets = [48, 0], sizes = [8, 192], strides = [1, 1]} : vector<64x192xf32> to vector<8x192xf32>
    %450 = vector.extract_strided_slice %449 {offsets = [0, 0], sizes = [8, 128], strides = [1, 1]} : vector<8x192xf32> to vector<8x128xf32>
    %451 = vector.extract_strided_slice %448 {offsets = [0, 0], sizes = [8, 128], strides = [1, 1]} : vector<8x192xf32> to vector<8x128xf32>
    %452 = arith.addf %450, %451 : vector<8x128xf32>
    %453 = arith.negf %452 : vector<8x128xf32>
    %454 = math.exp %453 : vector<8x128xf32>
    %cst_136 = arith.constant 1.000000e+00 : f32
    %455 = vector.broadcast %cst_136 : f32 to vector<8x128xf32>
    %456 = arith.addf %455, %454 : vector<8x128xf32>
    %457 = arith.divf %455, %456 : vector<8x128xf32>
    %458 = vector.extract_strided_slice %457 {offsets = [0, 0], sizes = [8, 64], strides = [1, 1]} : vector<8x128xf32> to vector<8x64xf32>
    %459 = vector.extract_strided_slice %457 {offsets = [0, 64], sizes = [8, 64], strides = [1, 1]} : vector<8x128xf32> to vector<8x64xf32>
    %460 = vector.extract_strided_slice %449 {offsets = [0, 128], sizes = [8, 64], strides = [1, 1]} : vector<8x192xf32> to vector<8x64xf32>
    %461 = vector.extract_strided_slice %448 {offsets = [0, 128], sizes = [8, 64], strides = [1, 1]} : vector<8x192xf32> to vector<8x64xf32>
    %462 = vector.broadcast %19 : vector<1x64xf32> to vector<8x64xf32>
    %463 = arith.addf %461, %462 : vector<8x64xf32>
    %464 = arith.mulf %458, %463 : vector<8x64xf32>
    %465 = arith.addf %460, %464 : vector<8x64xf32>
    %466 = math.tanh %465 : vector<8x64xf32>
    %cst_137 = arith.constant 1.000000e+00 : f32
    %467 = vector.broadcast %cst_137 : f32 to vector<8x64xf32>
    %468 = arith.subf %467, %459 : vector<8x64xf32>
    %469 = arith.mulf %468, %466 : vector<8x64xf32>
    %470 = arith.mulf %459, %441 : vector<8x64xf32>
    %471 = arith.addf %469, %470 : vector<8x64xf32>
    %c384 = arith.constant 384 : index
    %c0_138 = arith.constant 0 : index
    %472 = vector.load %arg9[%c384, %c0_138] : memref<512x256xbf16, #tpu.memory_space<vmem>>, vector<64x256xbf16>
    %473 = arith.extf %472 : vector<64x256xbf16> to vector<64x256xf32>
    %c0_139 = arith.constant 0 : index
    %c0_140 = arith.constant 0 : index
    %474 = vector.load %arg8[%c0_139, %c0_140] : memref<8x256xf32, #tpu.memory_space<vmem>>, vector<8x256xf32>
    %cst_141 = arith.constant dense<0.000000e+00> : vector<8x256xf32>
    %475 = tpu.matmul %471, %473, %cst_141 {dimension_numbers = #tpu.dot_dimension_numbers<[1], [0], [0], [1], [0, 0, 1, 1], [], []>} : vector<8x64xf32>, vector<64x256xf32>, vector<8x256xf32> -> vector<8x256xf32>
    %476 = arith.addf %474, %475 : vector<8x256xf32>
    %c0_142 = arith.constant 0 : index
    %c0_143 = arith.constant 0 : index
    %477 = vector.load %arg8[%c0_142, %c0_143] : memref<8x256xf32, #tpu.memory_space<vmem>>, vector<8x256xf32>
    tpu.vector_store %arg8[%c0_142, %c0_143], %476 {strides = array<i32>} : memref<8x256xf32, #tpu.memory_space<vmem>>, vector<8x256xf32>,
    %cst_144 = arith.constant dense<0.000000e+00> : vector<8x192xf32>
    %478 = tpu.matmul %471, %12, %cst_144 {dimension_numbers = #tpu.dot_dimension_numbers<[1], [0], [0], [1], [0, 0, 1, 1], [], []>} : vector<8x64xf32>, vector<64x192xf32>, vector<8x192xf32> -> vector<8x192xf32>
    %479 = vector.extract_strided_slice %261 {offsets = [56, 0], sizes = [8, 192], strides = [1, 1]} : vector<64x192xf32> to vector<8x192xf32>
    %480 = vector.extract_strided_slice %479 {offsets = [0, 0], sizes = [8, 128], strides = [1, 1]} : vector<8x192xf32> to vector<8x128xf32>
    %481 = vector.extract_strided_slice %478 {offsets = [0, 0], sizes = [8, 128], strides = [1, 1]} : vector<8x192xf32> to vector<8x128xf32>
    %482 = arith.addf %480, %481 : vector<8x128xf32>
    %483 = arith.negf %482 : vector<8x128xf32>
    %484 = math.exp %483 : vector<8x128xf32>
    %cst_145 = arith.constant 1.000000e+00 : f32
    %485 = vector.broadcast %cst_145 : f32 to vector<8x128xf32>
    %486 = arith.addf %485, %484 : vector<8x128xf32>
    %487 = arith.divf %485, %486 : vector<8x128xf32>
    %488 = vector.extract_strided_slice %487 {offsets = [0, 0], sizes = [8, 64], strides = [1, 1]} : vector<8x128xf32> to vector<8x64xf32>
    %489 = vector.extract_strided_slice %487 {offsets = [0, 64], sizes = [8, 64], strides = [1, 1]} : vector<8x128xf32> to vector<8x64xf32>
    %490 = vector.extract_strided_slice %479 {offsets = [0, 128], sizes = [8, 64], strides = [1, 1]} : vector<8x192xf32> to vector<8x64xf32>
    %491 = vector.extract_strided_slice %478 {offsets = [0, 128], sizes = [8, 64], strides = [1, 1]} : vector<8x192xf32> to vector<8x64xf32>
    %492 = vector.broadcast %19 : vector<1x64xf32> to vector<8x64xf32>
    %493 = arith.addf %491, %492 : vector<8x64xf32>
    %494 = arith.mulf %488, %493 : vector<8x64xf32>
    %495 = arith.addf %490, %494 : vector<8x64xf32>
    %496 = math.tanh %495 : vector<8x64xf32>
    %cst_146 = arith.constant 1.000000e+00 : f32
    %497 = vector.broadcast %cst_146 : f32 to vector<8x64xf32>
    %498 = arith.subf %497, %489 : vector<8x64xf32>
    %499 = arith.mulf %498, %496 : vector<8x64xf32>
    %500 = arith.mulf %489, %471 : vector<8x64xf32>
    %501 = arith.addf %499, %500 : vector<8x64xf32>
    %c448 = arith.constant 448 : index
    %c0_147 = arith.constant 0 : index
    %502 = vector.load %arg9[%c448, %c0_147] : memref<512x256xbf16, #tpu.memory_space<vmem>>, vector<64x256xbf16>
    %503 = arith.extf %502 : vector<64x256xbf16> to vector<64x256xf32>
    %c0_148 = arith.constant 0 : index
    %c0_149 = arith.constant 0 : index
    %504 = vector.load %arg8[%c0_148, %c0_149] : memref<8x256xf32, #tpu.memory_space<vmem>>, vector<8x256xf32>
    %cst_150 = arith.constant dense<0.000000e+00> : vector<8x256xf32>
    %505 = tpu.matmul %501, %503, %cst_150 {dimension_numbers = #tpu.dot_dimension_numbers<[1], [0], [0], [1], [0, 0, 1, 1], [], []>} : vector<8x64xf32>, vector<64x256xf32>, vector<8x256xf32> -> vector<8x256xf32>
    %506 = arith.addf %504, %505 : vector<8x256xf32>
    %c0_151 = arith.constant 0 : index
    %c0_152 = arith.constant 0 : index
    %507 = vector.load %arg8[%c0_151, %c0_152] : memref<8x256xf32, #tpu.memory_space<vmem>>, vector<8x256xf32>
    tpu.vector_store %arg8[%c0_151, %c0_152], %506 {strides = array<i32>} : memref<8x256xf32, #tpu.memory_space<vmem>>, vector<8x256xf32>,
    %c0_153 = arith.constant 0 : index
    %c0_154 = arith.constant 0 : index
    %508 = vector.load %arg8[%c0_153, %c0_154] : memref<8x256xf32, #tpu.memory_space<vmem>>, vector<2x256xf32>
    %cst_155 = arith.constant dense<0xFF800000> : vector<2xf32>
    %509 = vector.multi_reduction <maximumf>, %508, %cst_155 [1] : vector<2x256xf32> to vector<2xf32>
    %510 = vector.shape_cast %509 : vector<2xf32> to vector<2x1xf32>
    %511 = vector.broadcast %510 : vector<2x1xf32> to vector<2x256xf32>
    %512 = arith.subf %508, %511 : vector<2x256xf32>
    %513 = math.exp %512 : vector<2x256xf32>
    %cst_156 = arith.constant dense<0.000000e+00> : vector<2xf32>
    %514 = vector.multi_reduction <add>, %513, %cst_156 [1] : vector<2x256xf32> to vector<2xf32>
    %515 = vector.shape_cast %514 : vector<2xf32> to vector<2x1xf32>
    %516 = vector.broadcast %515 : vector<2x1xf32> to vector<2x256xf32>
    %517 = arith.divf %513, %516 : vector<2x256xf32>
    %c0_157 = arith.constant 0 : index
    %c0_158 = arith.constant 0 : index
    %518 = vector.load %arg5[%c0_157, %c0_158] : memref<2x256xf32, #tpu.memory_space<vmem>>, vector<2x256xf32>
    tpu.vector_store %arg5[%c0_157, %c0_158], %517 {strides = array<i32>} : memref<2x256xf32, #tpu.memory_space<vmem>>, vector<2x256xf32>,
    return
  }
  func.func @transform_0(%arg0: i32) -> (i32, i32) {
    %c0_i32 = arith.constant 0 : i32
    %c0_i32_0 = arith.constant 0 : i32
    %c0_i32_1 = arith.constant 0 : i32
    return %c0_i32, %c0_i32_0 : i32, i32
  }
  func.func @transform_1(%arg0: i32) -> (i32, i32) {
    %c0_i32 = arith.constant 0 : i32
    %c0_i32_0 = arith.constant 0 : i32
    %c0_i32_1 = arith.constant 0 : i32
    return %c0_i32, %c0_i32_0 : i32, i32
  }
  func.func @transform_3(%arg0: i32) -> (i32, i32) {
    %c0_i32 = arith.constant 0 : i32
    %c0_i32_0 = arith.constant 0 : i32
    %c0_i32_1 = arith.constant 0 : i32
    return %c0_i32, %c0_i32_0 : i32, i32
  }
  func.func @transform_4(%arg0: i32) -> (i32, i32) {
    %c0_i32 = arith.constant 0 : i32
    %c0_i32_0 = arith.constant 0 : i32
    %c0_i32_1 = arith.constant 0 : i32
    return %c0_i32, %c0_i32_0 : i32, i32
  }
}

</mosaic_0001>

<llo_original>
// kernel: tpu_custom_call.1
$region0: #{tpu_custom_call.1}
  #allocation0 [shape = 'u32[]', space=smem, size = 0x4, offset = 0x4, fixed_abs, tag = 'smem constant byte address 0x4 - core index']
  #allocation1 [shape = 'u32[72,128]{1,0:T(1,128)}', space=vmem, size = 0x9000, scoped, tag = 'internal scratch']
  #allocation2 [shape = 'f32[64,64]{1,0:T(8,128)}', space=vmem, size = 0x8000, scoped, tag = 'scratch operand']
  #allocation3 [shape = 'f32[64,64]{1,0:T(8,128)}', space=vmem, size = 0x8000, scoped, tag = 'scratch operand']
  #allocation4 [shape = 'f32[8,256]{1,0:T(8,128)}', space=vmem, size = 0x2000, scoped, tag = 'scratch operand']
  #allocation5 [shape = 'bf16[512,256]{1,0:T(8,128)(2,1)}', space=vmem, size = 0x40000, scoped, tag = 'scratch operand']
  #allocation6 [shape = 's32[1]{0}', space=sflag, size = 0x4, scoped, tag = 'scratch operand']
  #allocation9 [shape = 's32[]', space=sflag, size = 0x4, offset = 0, fixed_abs, tag = 'sflag constant byte address 0x0 - dummy sync flag']
  %s0 = inlined_call_operand.vmem [shape: f32[64,42], index: 0, kind: input, shape index: {}]
  %s1 = inlined_call_operand.vmem [shape: bf16[432,192], index: 1, kind: input, shape index: {}]
  %s2 = inlined_call_operand.vmem [shape: bf16[512,256], index: 2, kind: input, shape index: {}]
  %s3 = inlined_call_operand.vmem [shape: f32[8,256], index: 3, kind: input, shape index: {}]
  %s4 = inlined_call_operand.hbm [shape: f32[2,256], index: 4, kind: output, shape index: {}]
  %s5 = sld [smem:[#allocation0]]
  $region41: #{tpu_custom_call.1} parent=0
    _
  %s7 = ssub.s32 1, %s5
  %s8 = scalar_select 0, %s7, %s5
  $region1: #{tpu_custom_call.1} parent=0
    #allocation7 [shape = 'u8[2048]{0}', space=vmem, size = 0x800, scoped, tag = 'output window, operand 0, single buffered']
    #allocation8 [shape = 's32[1]{0}', space=sflag, size = 0x4, scoped, tag = 'scoped memory for tpu_custom_call.1']
    %9 = vsyncpa [#allocation8], 0
    // Predicated region
    $region2: #{tpu_custom_call.1} parent=1 // pred_check
      _
    $region3: #{tpu_custom_call.1} parent=1 // pred_check_branch
      %11 = sbr.rel (0) target = $region5
    $region4: #{tpu_custom_call.1} parent=1 // pred_region
      _
    $region5: #{tpu_custom_call.1} parent=1 // pred_fallthru
      _
    // Predicated region
    $region6: #{tpu_custom_call.1} parent=1 // pred_check
      _
    $region7: #{tpu_custom_call.1} parent=1 // pred_check_branch
      %13 = sbr.rel (0) target = $region9
    $region8: #{tpu_custom_call.1} parent=1 // pred_region
      _
    $region9: #{tpu_custom_call.1} parent=1 // pred_fallthru
      _
    // Predicated region
    $region10: #{tpu_custom_call.1} parent=1 // pred_check
      _
    $region11: #{tpu_custom_call.1} parent=1 // pred_check_branch
      %15 = sbr.rel (0) target = $region13
    $region12: #{tpu_custom_call.1} parent=1 // pred_region
      _
    $region13: #{tpu_custom_call.1} parent=1 // pred_fallthru
      _
    // Predicated region
    $region14: #{tpu_custom_call.1} parent=1 // pred_check
      _
    $region15: #{tpu_custom_call.1} parent=1 // pred_check_branch
      %17 = sbr.rel (0) target = $region17
    $region16: #{tpu_custom_call.1} parent=1 // pred_region
      loop: start=0, step=1, limit=1
      $region18: #{tpu_custom_call.1} parent=16 // loop_pre_header
        _
      $region19: #{tpu_custom_call.1} parent=16 // loop_header
        %s19 = sphi 0, %s23
        %p20 = scmp.ge.s32.totalorder %s19, 1
        %s24 = sphi %s2, %s2
        %s25 = sphi [#allocation5], [#allocation5]
      $region20: #{tpu_custom_call.1} parent=16 // loop_header_branch
        %22 = sbr.rel (%p20) target = $region24
      $region21: #{tpu_custom_call.1} parent=16 // loop_body
        %v26 = vld [vmem:[%s24] sm:$0xff]
        %27 = vst [vmem:[%s25] sm:$0xff] %v26
        %v28 = vld [vmem:[%s24 + $0x8] sm:$0xff]
        %29 = vst [vmem:[%s25 + $0x8] sm:$0xff] %v28
        %v30 = vld [vmem:[%s24 + $0x10] sm:$0xff]
        %31 = vst [vmem:[%s25 + $0x10] sm:$0xff] %v30
        %v32 = vld [vmem:[%s24 + $0x18] sm:$0xff]
        %33 = vst [vmem:[%s25 + $0x18] sm:$0xff] %v32
        %v34 = vld [vmem:[%s24 + $0x20] sm:$0xff]
        %35 = vst [vmem:[%s25 + $0x20] sm:$0xff] %v34
        %v36 = vld [vmem:[%s24 + $0x28] sm:$0xff]
        %37 = vst [vmem:[%s25 + $0x28] sm:$0xff] %v36
        %v38 = vld [vmem:[%s24 + $0x30] sm:$0xff]
        %39 = vst [vmem:[%s25 + $0x30] sm:$0xff] %v38
        %v40 = vld [vmem:[%s24 + $0x38] sm:$0xff]
        %41 = vst [vmem:[%s25 + $0x38] sm:$0xff] %v40
        %v42 = vld [vmem:[%s24 + $0x40] sm:$0xff]
        %43 = vst [vmem:[%s25 + $0x40] sm:$0xff] %v42
        %v44 = vld [vmem:[%s24 + $0x48] sm:$0xff]
        %45 = vst [vmem:[%s25 + $0x48] sm:$0xff] %v44
        %v46 = vld [vmem:[%s24 + $0x50] sm:$0xff]
        %47 = vst [vmem:[%s25 + $0x50] sm:$0xff] %v46
        %v48 = vld [vmem:[%s24 + $0x58] sm:$0xff]
        %49 = vst [vmem:[%s25 + $0x58] sm:$0xff] %v48
        %v50 = vld [vmem:[%s24 + $0x60] sm:$0xff]
        %51 = vst [vmem:[%s25 + $0x60] sm:$0xff] %v50
        %v52 = vld [vmem:[%s24 + $0x68] sm:$0xff]
        %53 = vst [vmem:[%s25 + $0x68] sm:$0xff] %v52
        %v54 = vld [vmem:[%s24 + $0x70] sm:$0xff]
        %55 = vst [vmem:[%s25 + $0x70] sm:$0xff] %v54
        %v56 = vld [vmem:[%s24 + $0x78] sm:$0xff]
        %57 = vst [vmem:[%s25 + $0x78] sm:$0xff] %v56
        %v58 = vld [vmem:[%s24 + $0x80] sm:$0xff]
        %59 = vst [vmem:[%s25 + $0x80] sm:$0xff] %v58
        %v60 = vld [vmem:[%s24 + $0x88] sm:$0xff]
        %61 = vst [vmem:[%s25 + $0x88] sm:$0xff] %v60
        %v62 = vld [vmem:[%s24 + $0x90] sm:$0xff]
        %63 = vst [vmem:[%s25 + $0x90] sm:$0xff] %v62
        %v64 = vld [vmem:[%s24 + $0x98] sm:$0xff]
        %65 = vst [vmem:[%s25 + $0x98] sm:$0xff] %v64
        %v66 = vld [vmem:[%s24 + $0xa0] sm:$0xff]
        %67 = vst [vmem:[%s25 + $0xa0] sm:$0xff] %v66
        %v68 = vld [vmem:[%s24 + $0xa8] sm:$0xff]
        %69 = vst [vmem:[%s25 + $0xa8] sm:$0xff] %v68
        %v70 = vld [vmem:[%s24 + $0xb0] sm:$0xff]
        %71 = vst [vmem:[%s25 + $0xb0] sm:$0xff] %v70
        %v72 = vld [vmem:[%s24 + $0xb8] sm:$0xff]
        %73 = vst [vmem:[%s25 + $0xb8] sm:$0xff] %v72
        %v74 = vld [vmem:[%s24 + $0xc0] sm:$0xff]
        %75 = vst [vmem:[%s25 + $0xc0] sm:$0xff] %v74
        %v76 = vld [vmem:[%s24 + $0xc8] sm:$0xff]
        %77 = vst [vmem:[%s25 + $0xc8] sm:$0xff] %v76
        %v78 = vld [vmem:[%s24 + $0xd0] sm:$0xff]
        %79 = vst [vmem:[%s25 + $0xd0] sm:$0xff] %v78
        %v80 = vld [vmem:[%s24 + $0xd8] sm:$0xff]
        %81 = vst [vmem:[%s25 + $0xd8] sm:$0xff] %v80
        %v82 = vld [vmem:[%s24 + $0xe0] sm:$0xff]
        %83 = vst [vmem:[%s25 + $0xe0] sm:$0xff] %v82
        %v84 = vld [vmem:[%s24 + $0xe8] sm:$0xff]
        %85 = vst [vmem:[%s25 + $0xe8] sm:$0xff] %v84
        %v86 = vld [vmem:[%s24 + $0xf0] sm:$0xff]
        %87 = vst [vmem:[%s25 + $0xf0] sm:$0xff] %v86
        %v88 = vld [vmem:[%s24 + $0xf8] sm:$0xff]
        %89 = vst [vmem:[%s25 + $0xf8] sm:$0xff] %v88
        %v90 = vld [vmem:[%s24 + $0x100] sm:$0xff]
        %91 = vst [vmem:[%s25 + $0x100] sm:$0xff] %v90
        %v92 = vld [vmem:[%s24 + $0x108] sm:$0xff]
        %93 = vst [vmem:[%s25 + $0x108] sm:$0xff] %v92
        %v94 = vld [vmem:[%s24 + $0x110] sm:$0xff]
        %95 = vst [vmem:[%s25 + $0x110] sm:$0xff] %v94
        %v96 = vld [vmem:[%s24 + $0x118] sm:$0xff]
        %97 = vst [vmem:[%s25 + $0x118] sm:$0xff] %v96
        %v98 = vld [vmem:[%s24 + $0x120] sm:$0xff]
        %99 = vst [vmem:[%s25 + $0x120] sm:$0xff] %v98
        %v100 = vld [vmem:[%s24 + $0x128] sm:$0xff]
        %101 = vst [vmem:[%s25 + $0x128] sm:$0xff] %v100
        %v102 = vld [vmem:[%s24 + $0x130] sm:$0xff]
        %103 = vst [vmem:[%s25 + $0x130] sm:$0xff] %v102
        %v104 = vld [vmem:[%s24 + $0x138] sm:$0xff]
        %105 = vst [vmem:[%s25 + $0x138] sm:$0xff] %v104
        %v106 = vld [vmem:[%s24 + $0x140] sm:$0xff]
        %107 = vst [vmem:[%s25 + $0x140] sm:$0xff] %v106
        %v108 = vld [vmem:[%s24 + $0x148] sm:$0xff]
        %109 = vst [vmem:[%s25 + $0x148] sm:$0xff] %v108
        %v110 = vld [vmem:[%s24 + $0x150] sm:$0xff]
        %111 = vst [vmem:[%s25 + $0x150] sm:$0xff] %v110
        %v112 = vld [vmem:[%s24 + $0x158] sm:$0xff]
        %113 = vst [vmem:[%s25 + $0x158] sm:$0xff] %v112
        %v114 = vld [vmem:[%s24 + $0x160] sm:$0xff]
        %115 = vst [vmem:[%s25 + $0x160] sm:$0xff] %v114
        %v116 = vld [vmem:[%s24 + $0x168] sm:$0xff]
        %117 = vst [vmem:[%s25 + $0x168] sm:$0xff] %v116
        %v118 = vld [vmem:[%s24 + $0x170] sm:$0xff]
        %119 = vst [vmem:[%s25 + $0x170] sm:$0xff] %v118
        %v120 = vld [vmem:[%s24 + $0x178] sm:$0xff]
        %121 = vst [vmem:[%s25 + $0x178] sm:$0xff] %v120
        %v122 = vld [vmem:[%s24 + $0x180] sm:$0xff]
        %123 = vst [vmem:[%s25 + $0x180] sm:$0xff] %v122
        %v124 = vld [vmem:[%s24 + $0x188] sm:$0xff]
        %125 = vst [vmem:[%s25 + $0x188] sm:$0xff] %v124
        %v126 = vld [vmem:[%s24 + $0x190] sm:$0xff]
        %127 = vst [vmem:[%s25 + $0x190] sm:$0xff] %v126
        %v128 = vld [vmem:[%s24 + $0x198] sm:$0xff]
        %129 = vst [vmem:[%s25 + $0x198] sm:$0xff] %v128
        %v130 = vld [vmem:[%s24 + $0x1a0] sm:$0xff]
        %131 = vst [vmem:[%s25 + $0x1a0] sm:$0xff] %v130
        %v132 = vld [vmem:[%s24 + $0x1a8] sm:$0xff]
        %133 = vst [vmem:[%s25 + $0x1a8] sm:$0xff] %v132
        %v134 = vld [vmem:[%s24 + $0x1b0] sm:$0xff]
        %135 = vst [vmem:[%s25 + $0x1b0] sm:$0xff] %v134
        %v136 = vld [vmem:[%s24 + $0x1b8] sm:$0xff]
        %137 = vst [vmem:[%s25 + $0x1b8] sm:$0xff] %v136
        %v138 = vld [vmem:[%s24 + $0x1c0] sm:$0xff]
        %139 = vst [vmem:[%s25 + $0x1c0] sm:$0xff] %v138
        %v140 = vld [vmem:[%s24 + $0x1c8] sm:$0xff]
        %141 = vst [vmem:[%s25 + $0x1c8] sm:$0xff] %v140
        %v142 = vld [vmem:[%s24 + $0x1d0] sm:$0xff]
        %143 = vst [vmem:[%s25 + $0x1d0] sm:$0xff] %v142
        %v144 = vld [vmem:[%s24 + $0x1d8] sm:$0xff]
        %145 = vst [vmem:[%s25 + $0x1d8] sm:$0xff] %v144
        %v146 = vld [vmem:[%s24 + $0x1e0] sm:$0xff]
        %147 = vst [vmem:[%s25 + $0x1e0] sm:$0xff] %v146
        %v148 = vld [vmem:[%s24 + $0x1e8] sm:$0xff]
        %149 = vst [vmem:[%s25 + $0x1e8] sm:$0xff] %v148
        %v150 = vld [vmem:[%s24 + $0x1f0] sm:$0xff]
        %151 = vst [vmem:[%s25 + $0x1f0] sm:$0xff] %v150
        %v152 = vld [vmem:[%s24 + $0x1f8] sm:$0xff]
        %153 = vst [vmem:[%s25 + $0x1f8] sm:$0xff] %v152
      $region22: #{tpu_custom_call.1} parent=16 // loop_footer
        %s23 = sadd.s32 1, %s19
      $region23: #{tpu_custom_call.1} parent=16 // loop_footer_branch
        %18 = sbr.rel target = $region19
      $region24: #{tpu_custom_call.1} parent=16 // loop_exit
        _
    $region17: #{tpu_custom_call.1} parent=1 // pred_fallthru
      _
    // Predicated region
    $region25: #{tpu_custom_call.1} parent=1 // pred_check
      _
    $region26: #{tpu_custom_call.1} parent=1 // pred_check_branch
      %155 = sbr.rel target = $region28
    $region27: #{tpu_custom_call.1} parent=1 // pred_region
      _
    $region28: #{tpu_custom_call.1} parent=1 // pred_fallthru
      _
    // Predicated region
    $region29: #{tpu_custom_call.1} parent=1 // pred_check
      _
    $region30: #{tpu_custom_call.1} parent=1 // pred_check_branch
      %158 = sbr.rel (0) target = $region32
    $region31: #{tpu_custom_call.1} parent=1 // pred_region
      %159 = vsyncadd [#allocation6], 8192
    $region32: #{tpu_custom_call.1} parent=1 // pred_fallthru
      _
    %v160 = vld [vmem:[%s0] sm:$0xff]
    %v161 = vld [vmem:[%s0 + $0x8] sm:$0xff]
    %v162 = vld [vmem:[%s0 + $0x10] sm:$0xff]
    %v163 = vld [vmem:[%s0 + $0x18] sm:$0xff]
    %v164 = vld [vmem:[%s0 + $0x20] sm:$0xff]
    %v165 = vld [vmem:[%s0 + $0x28] sm:$0xff]
    %v166 = vld [vmem:[%s0 + $0x30] sm:$0xff]
    %v167 = vld [vmem:[%s0 + $0x38] sm:$0xff]
    %v168 = vld [vmem:[%s1] sm:$0xff]
    %v169 = vld [vmem:[%s1 + $0x8] sm:$0xff]
    %v170 = vld [vmem:[%s1 + $0x10] sm:$0xff]
    %v171 = vld [vmem:[%s1 + $0x18] sm:$0xff]
    %v172 = vld [vmem:[%s1 + $0x20] sm:$0xff]
    %v173 = vld [vmem:[%s1 + $0x28] sm:$0xff]
    %v174 = vld [vmem:[%s1 + $0x30] sm:$0xff]
    %v175 = vld [vmem:[%s1 + $0x38] sm:$0xff]
    %v176 = vld [vmem:[%s1 + $0x40] sm:$0xff]
    %v177 = vld [vmem:[%s1 + $0x48] sm:$0xff]
    %v178 = vld [vmem:[%s1 + $0x50] sm:$0xff]
    %v179 = vld [vmem:[%s1 + $0x58] sm:$0xff]
    %v180 = vld [vmem:[%s1 + $0x60] sm:$0xff]
    %v181 = vld [vmem:[%s1 + $0x68] sm:$0xff]
    %v182 = vld [vmem:[%s1 + $0x70] sm:$0xff]
    %v183 = vld [vmem:[%s1 + $0x78] sm:$0xff]
    %v184 = vld [vmem:[%s1 + $0x80] sm:$0xff]
    %v185 = vld [vmem:[%s1 + $0x88] sm:$0xff]
    %v186 = vunpack.c.l.bf16 %v168
    %v187 = vunpack.c.h.bf16 %v168
    %v188 = vunpack.c.l.bf16 %v169
    %v189 = vunpack.c.h.bf16 %v169
    %v190 = vunpack.c.l.bf16 %v170
    %v191 = vunpack.c.h.bf16 %v170
    %v192 = vunpack.c.l.bf16 %v171
    %v193 = vunpack.c.h.bf16 %v171
    %v194 = vunpack.c.l.bf16 %v172
    %v195 = vunpack.c.h.bf16 %v172
    %v196 = vunpack.c.l.bf16 %v173
    %v197 = vunpack.c.h.bf16 %v173
    %v198 = vunpack.c.l.bf16 %v174
    %v199 = vunpack.c.h.bf16 %v174
    %v200 = vunpack.c.l.bf16 %v175
    %v201 = vunpack.c.h.bf16 %v175
    %v202 = vunpack.c.l.bf16 %v176
    %v203 = vunpack.c.h.bf16 %v176
    %v204 = vunpack.c.l.bf16 %v177
    %v205 = vunpack.c.h.bf16 %v177
    %v206 = vunpack.c.l.bf16 %v178
    %v207 = vunpack.c.h.bf16 %v178
    %v208 = vunpack.c.l.bf16 %v179
    %v209 = vunpack.c.h.bf16 %v179
    %v210 = vunpack.c.l.bf16 %v180
    %v211 = vunpack.c.h.bf16 %v180
    %v212 = vunpack.c.l.bf16 %v181
    %v213 = vunpack.c.h.bf16 %v181
    %v214 = vunpack.c.l.bf16 %v182
    %v215 = vunpack.c.h.bf16 %v182
    %v216 = vunpack.c.l.bf16 %v183
    %v217 = vunpack.c.h.bf16 %v183
    %v218 = vunpack.c.l.bf16 %v184
    %v219 = vunpack.c.h.bf16 %v184
    %v220 = vunpack.c.l.bf16 %v185
    %v221 = vunpack.c.h.bf16 %v185
    %v222 = vld [vmem:[%s1 + $0x90] sm:$0xff]
    %v223 = vld [vmem:[%s1 + $0x98] sm:$0xff]
    %v224 = vld [vmem:[%s1 + $0xa0] sm:$0xff]
    %v225 = vld [vmem:[%s1 + $0xa8] sm:$0xff]
    %v226 = vld [vmem:[%s1 + $0xb0] sm:$0xff]
    %v227 = vld [vmem:[%s1 + $0xb8] sm:$0xff]
    %v228 = vld [vmem:[%s1 + $0xc0] sm:$0xff]
    %v229 = vld [vmem:[%s1 + $0xc8] sm:$0xff]
    %v230 = vunpack.c.l.bf16 %v222
    %v231 = vunpack.c.h.bf16 %v222
    %v232 = vunpack.c.l.bf16 %v223
    %v233 = vunpack.c.h.bf16 %v223
    %v234 = vunpack.c.l.bf16 %v224
    %v235 = vunpack.c.h.bf16 %v224
    %v236 = vunpack.c.l.bf16 %v225
    %v237 = vunpack.c.h.bf16 %v225
    %v238 = vunpack.c.l.bf16 %v226
    %v239 = vunpack.c.h.bf16 %v226
    %v240 = vunpack.c.l.bf16 %v227
    %v241 = vunpack.c.h.bf16 %v227
    %v242 = vunpack.c.l.bf16 %v228
    %v243 = vunpack.c.h.bf16 %v228
    %v244 = vunpack.c.l.bf16 %v229
    %v245 = vunpack.c.h.bf16 %v229
    %v246 = vld [vmem:[%s1 + $0xd0] sm:$0xff]
    %v247 = vld [vmem:[%s1 + $0xd8] sm:$0xff]
    %v248 = vld [vmem:[%s1 + $0xe0] sm:$0xff]
    %v249 = vld [vmem:[%s1 + $0xe8] sm:$0xff]
    %v250 = vld [vmem:[%s1 + $0xf0] sm:$0xff]
    %v251 = vld [vmem:[%s1 + $0xf8] sm:$0xff]
    %v252 = vld [vmem:[%s1 + $0x100] sm:$0xff]
    %v253 = vld [vmem:[%s1 + $0x108] sm:$0xff]
    %v254 = vunpack.c.l.bf16 %v246
    %v255 = vunpack.c.h.bf16 %v246
    %v256 = vunpack.c.l.bf16 %v247
    %v257 = vunpack.c.h.bf16 %v247
    %v258 = vunpack.c.l.bf16 %v248
    %v259 = vunpack.c.h.bf16 %v248
    %v260 = vunpack.c.l.bf16 %v249
    %v261 = vunpack.c.h.bf16 %v249
    %v262 = vunpack.c.l.bf16 %v250
    %v263 = vunpack.c.h.bf16 %v250
    %v264 = vunpack.c.l.bf16 %v251
    %v265 = vunpack.c.h.bf16 %v251
    %v266 = vunpack.c.l.bf16 %v252
    %v267 = vunpack.c.h.bf16 %v252
    %v268 = vunpack.c.l.bf16 %v253
    %v269 = vunpack.c.h.bf16 %v253
    %v270 = vld [vmem:[%s1 + $0x110] sm:$0xff]
    %v271 = vld [vmem:[%s1 + $0x118] sm:$0xff]
    %v272 = vld [vmem:[%s1 + $0x120] sm:$0xff]
    %v273 = vld [vmem:[%s1 + $0x128] sm:$0xff]
    %v274 = vld [vmem:[%s1 + $0x130] sm:$0xff]
    %v275 = vld [vmem:[%s1 + $0x138] sm:$0xff]
    %v276 = vld [vmem:[%s1 + $0x140] sm:$0xff]
    %v277 = vld [vmem:[%s1 + $0x148] sm:$0xff]
    %v278 = vunpack.c.l.bf16 %v270
    %v279 = vunpack.c.h.bf16 %v270
    %v280 = vunpack.c.l.bf16 %v271
    %v281 = vunpack.c.h.bf16 %v271
    %v282 = vunpack.c.l.bf16 %v272
    %v283 = vunpack.c.h.bf16 %v272
    %v284 = vunpack.c.l.bf16 %v273
    %v285 = vunpack.c.h.bf16 %v273
    %v286 = vunpack.c.l.bf16 %v274
    %v287 = vunpack.c.h.bf16 %v274
    %v288 = vunpack.c.l.bf16 %v275
    %v289 = vunpack.c.h.bf16 %v275
    %v290 = vunpack.c.l.bf16 %v276
    %v291 = vunpack.c.h.bf16 %v276
    %v292 = vunpack.c.l.bf16 %v277
    %v293 = vunpack.c.h.bf16 %v277
    %v294 = vld [vmem:[%s1 + $0x150] sm:$0xff]
    %v295 = vld [vmem:[%s1 + $0x158] sm:$0xff]
    %v296 = vld [vmem:[%s1 + $0x160] sm:$0xff]
    %v297 = vld [vmem:[%s1 + $0x168] sm:$0xff]
    %v298 = vld [vmem:[%s1 + $0x170] sm:$0xff]
    %v299 = vld [vmem:[%s1 + $0x178] sm:$0xff]
    %v300 = vld [vmem:[%s1 + $0x180] sm:$0xff]
    %v301 = vld [vmem:[%s1 + $0x188] sm:$0xff]
    %v302 = vunpack.c.l.bf16 %v294
    %v303 = vunpack.c.h.bf16 %v294
    %v304 = vunpack.c.l.bf16 %v295
    %v305 = vunpack.c.h.bf16 %v295
    %v306 = vunpack.c.l.bf16 %v296
    %v307 = vunpack.c.h.bf16 %v296
    %v308 = vunpack.c.l.bf16 %v297
    %v309 = vunpack.c.h.bf16 %v297
    %v310 = vunpack.c.l.bf16 %v298
    %v311 = vunpack.c.h.bf16 %v298
    %v312 = vunpack.c.l.bf16 %v299
    %v313 = vunpack.c.h.bf16 %v299
    %v314 = vunpack.c.l.bf16 %v300
    %v315 = vunpack.c.h.bf16 %v300
    %v316 = vunpack.c.l.bf16 %v301
    %v317 = vunpack.c.h.bf16 %v301
    %v318 = vld [vmem:[%s1 + $0x190] sm:$0xf]
    %v319 = vld [vmem:[%s1 + $0x198] sm:$0xf]
    %v320 = vld [vmem:[%s1 + $0x1a0] sm:$0xf]
    %v321 = vld [vmem:[%s1 + $0x1a8] sm:$0xf]
    %v322 = vunpack.c.l.bf16 %v318
    %v323 = vunpack.c.l.bf16 %v319
    %v324 = vunpack.c.l.bf16 %v320
    %v325 = vunpack.c.l.bf16 %v321
    %v326 = vld [vmem:[%s3] ss:$8 sm:$0x3]
    %s327 = scalar_lea.vmem %s3, 1
    %v328 = vld [vmem:[%s327] ss:$8 sm:$0x3]
    %v329 = vld [vmem:[%s3 + $0x2] ss:$0 sm:$0xff]
    %s330 = scalar_lea.vmem %s3, 3
    %v331 = vld [vmem:[%s330] ss:$8 sm:$0x3]
    %v332 = vld [vmem:[%s3 + $0x4] ss:$0 sm:$0xff]
    %v333 = vld [vmem:[%s3 + $0x5] ss:$0 sm:$0xff]
    %v334 = vld [vmem:[%s3 + $0x6] ss:$0 sm:$0xff]
    %vm335 = vcmask 261120
    %v337 = vsel %vm335, %v160, 0
    %v340 = vsel %vm335, %v161, 0
    %v343 = vsel %vm335, %v162, 0
    %v346 = vsel %vm335, %v163, 0
    %v349 = vsel %vm335, %v164, 0
    %v352 = vsel %vm335, %v165, 0
    %v355 = vsel %vm335, %v166, 0
    %v358 = vsel %vm335, %v167, 0
    %360 = vmatpush.msra.mxu0 0.0
    %361 = vmatpush.msra.mxu0 0.0
    %362 = vmatpush.msra.mxu0 0.0
    %363 = vmatpush.msra.mxu0 0.0
    %364 = vmatpush.msra.mxu0 0.0
    %365 = vmatpush.msra.mxu0 0.0
    %366 = vmatpush.msra.mxu0 0.0
    %367 = vmatpush.msra.mxu0 0.0
    %368 = vmatpush.msra.mxu0 0.0
    %369 = vmatpush.msra.mxu0 0.0
    %370 = vmatpush.msra.mxu0 0.0
    %371 = vmatpush.msra.mxu0 0.0
    %372 = vmatpush.msra.mxu0 %v325
    %373 = vmatpush.msra.mxu0 %v324
    %374 = vmatpush.msra.mxu0 %v323
    %375 = vmatpush.msra.mxu0 %v322
    %376 = vmatmul.f32.gmra.mxu0 %v337
    %v377 = vpop.f32.mrf.mxu0
    %v378 = vadd.f32 %v333, %v377
    %379 = vmatmul.f32.gmra.mxu0 %v340
    %v380 = vpop.f32.mrf.mxu0
    %v381 = vadd.f32 %v333, %v380
    %382 = vmatmul.f32.gmra.mxu0 %v343
    %v383 = vpop.f32.mrf.mxu0
    %v384 = vadd.f32 %v333, %v383
    %385 = vmatmul.f32.gmra.mxu0 %v346
    %v386 = vpop.f32.mrf.mxu0
    %v387 = vadd.f32 %v333, %v386
    %388 = vmatmul.f32.gmra.mxu0 %v349
    %v389 = vpop.f32.mrf.mxu0
    %v390 = vadd.f32 %v333, %v389
    %391 = vmatmul.f32.gmra.mxu0 %v352
    %v392 = vpop.f32.mrf.mxu0
    %v393 = vadd.f32 %v333, %v392
    %394 = vmatmul.f32.gmra.mxu0 %v355
    %v395 = vpop.f32.mrf.mxu0
    %v396 = vadd.f32 %v333, %v395
    %397 = vmatmul.f32.gmra.mxu0 %v358
    %v398 = vpop.f32.mrf.mxu0
    %v399 = vadd.f32 %v333, %v398
    %400 = vdwg.mxu0
    %v401 = vmax.f32 %v378, 0.0
    %v402 = vmax.f32 %v381, 0.0
    %v403 = vmax.f32 %v384, 0.0
    %v404 = vmax.f32 %v387, 0.0
    %v405 = vmax.f32 %v390, 0.0
    %v406 = vmax.f32 %v393, 0.0
    %v407 = vmax.f32 %v396, 0.0
    %v408 = vmax.f32 %v399, 0.0
    %409 = vset.pattern.permute.xlu0 32
    %410 = vperm.xlu0 %409, %v160
    %v411 = vpop.permute.xlu0 %410
    %413 = vset.pattern.permute.xlu0 32
    %414 = vperm.xlu0 %413, %v161
    %v415 = vpop.permute.xlu0 %414
    %417 = vset.pattern.permute.xlu0 32
    %418 = vperm.xlu0 %417, %v162
    %v419 = vpop.permute.xlu0 %418
    %421 = vset.pattern.permute.xlu0 32
    %422 = vperm.xlu0 %421, %v163
    %v423 = vpop.permute.xlu0 %422
    %425 = vset.pattern.permute.xlu0 32
    %426 = vperm.xlu0 %425, %v164
    %v427 = vpop.permute.xlu0 %426
    %429 = vset.pattern.permute.xlu0 32
    %430 = vperm.xlu0 %429, %v165
    %v431 = vpop.permute.xlu0 %430
    %433 = vset.pattern.permute.xlu0 32
    %434 = vperm.xlu0 %433, %v166
    %v435 = vpop.permute.xlu0 %434
    %437 = vset.pattern.permute.xlu0 32
    %438 = vperm.xlu0 %437, %v167
    %v439 = vpop.permute.xlu0 %438
    %v441 = vmul.f32 %v411, %v334
    %v442 = vmul.f32 %v415, %v334
    %v443 = vmul.f32 %v419, %v334
    %v444 = vmul.f32 %v423, %v334
    %v445 = vmul.f32 %v427, %v334
    %v446 = vmul.f32 %v431, %v334
    %v447 = vmul.f32 %v435, %v334
    %v448 = vmul.f32 %v439, %v334
    %450 = vrot.lane.b32.xlu0 %v334, 124
    %v451 = vpop.permute.xlu0 %450
    %v453 = vadd.f32 %v441, %v451
    %v454 = vadd.f32 %v442, %v451
    %v455 = vadd.f32 %v443, %v451
    %v456 = vadd.f32 %v444, %v451
    %v457 = vadd.f32 %v445, %v451
    %v458 = vadd.f32 %v446, %v451
    %v459 = vadd.f32 %v447, %v451
    %v460 = vadd.f32 %v448, %v451
    %461 = vset.pattern.permute.xlu0 33
    %462 = vperm.xlu0 %461, %v160
    %v463 = vpop.permute.xlu0 %462
    %465 = vset.pattern.permute.xlu0 33
    %466 = vperm.xlu0 %465, %v161
    %v467 = vpop.permute.xlu0 %466
    %469 = vset.pattern.permute.xlu0 33
    %470 = vperm.xlu0 %469, %v162
    %v471 = vpop.permute.xlu0 %470
    %473 = vset.pattern.permute.xlu0 33
    %474 = vperm.xlu0 %473, %v163
    %v475 = vpop.permute.xlu0 %474
    %477 = vset.pattern.permute.xlu0 33
    %478 = vperm.xlu0 %477, %v164
    %v479 = vpop.permute.xlu0 %478
    %481 = vset.pattern.permute.xlu0 33
    %482 = vperm.xlu0 %481, %v165
    %v483 = vpop.permute.xlu0 %482
    %485 = vset.pattern.permute.xlu0 33
    %486 = vperm.xlu0 %485, %v166
    %v487 = vpop.permute.xlu0 %486
    %489 = vset.pattern.permute.xlu0 33
    %490 = vperm.xlu0 %489, %v167
    %v491 = vpop.permute.xlu0 %490
    %v493 = vmul.f32 %v463, %v334
    %v494 = vmul.f32 %v467, %v334
    %v495 = vmul.f32 %v471, %v334
    %v496 = vmul.f32 %v475, %v334
    %v497 = vmul.f32 %v479, %v334
    %v498 = vmul.f32 %v483, %v334
    %v499 = vmul.f32 %v487, %v334
    %v500 = vmul.f32 %v491, %v334
    %v501 = vadd.f32 %v493, %v451
    %v502 = vadd.f32 %v494, %v451
    %v503 = vadd.f32 %v495, %v451
    %v504 = vadd.f32 %v496, %v451
    %v505 = vadd.f32 %v497, %v451
    %v506 = vadd.f32 %v498, %v451
    %v507 = vadd.f32 %v499, %v451
    %v508 = vadd.f32 %v500, %v451
    %509 = vrot.lane.b32.xlu0 %v160, 94
    %v510 = vpop.permute.xlu0 %509
    %511 = vrot.lane.b32.xlu0 %v161, 94
    %v512 = vpop.permute.xlu0 %511
    %513 = vrot.lane.b32.xlu0 %v162, 94
    %v514 = vpop.permute.xlu0 %513
    %515 = vrot.lane.b32.xlu0 %v163, 94
    %v516 = vpop.permute.xlu0 %515
    %517 = vrot.lane.b32.xlu0 %v164, 94
    %v518 = vpop.permute.xlu0 %517
    %519 = vrot.lane.b32.xlu0 %v165, 94
    %v520 = vpop.permute.xlu0 %519
    %521 = vrot.lane.b32.xlu0 %v166, 94
    %v522 = vpop.permute.xlu0 %521
    %523 = vrot.lane.b32.xlu0 %v167, 94
    %v524 = vpop.permute.xlu0 %523
    %541 = vrot.lane.b32.xlu0 %v453, 8
    %v542 = vpop.permute.xlu0 %541
    %543 = vrot.lane.b32.xlu0 %v454, 8
    %v544 = vpop.permute.xlu0 %543
    %545 = vrot.lane.b32.xlu0 %v455, 8
    %v546 = vpop.permute.xlu0 %545
    %547 = vrot.lane.b32.xlu0 %v456, 8
    %v548 = vpop.permute.xlu0 %547
    %549 = vrot.lane.b32.xlu0 %v457, 8
    %v550 = vpop.permute.xlu0 %549
    %551 = vrot.lane.b32.xlu0 %v458, 8
    %v552 = vpop.permute.xlu0 %551
    %553 = vrot.lane.b32.xlu0 %v459, 8
    %v554 = vpop.permute.xlu0 %553
    %555 = vrot.lane.b32.xlu0 %v460, 8
    %v556 = vpop.permute.xlu0 %555
    %573 = vrot.lane.b32.xlu0 %v501, 12
    %v574 = vpop.permute.xlu0 %573
    %575 = vrot.lane.b32.xlu0 %v502, 12
    %v576 = vpop.permute.xlu0 %575
    %577 = vrot.lane.b32.xlu0 %v503, 12
    %v578 = vpop.permute.xlu0 %577
    %579 = vrot.lane.b32.xlu0 %v504, 12
    %v580 = vpop.permute.xlu0 %579
    %581 = vrot.lane.b32.xlu0 %v505, 12
    %v582 = vpop.permute.xlu0 %581
    %583 = vrot.lane.b32.xlu0 %v506, 12
    %v584 = vpop.permute.xlu0 %583
    %585 = vrot.lane.b32.xlu0 %v507, 12
    %v586 = vpop.permute.xlu0 %585
    %587 = vrot.lane.b32.xlu0 %v508, 12
    %v588 = vpop.permute.xlu0 %587
    %vm597 = vcmask 64512
    %v598 = vsel %vm597, %v510, %v542
    %v599 = vsel %vm597, %v512, %v544
    %v600 = vsel %vm597, %v514, %v546
    %v601 = vsel %vm597, %v516, %v548
    %v602 = vsel %vm597, %v518, %v550
    %v603 = vsel %vm597, %v520, %v552
    %v604 = vsel %vm597, %v522, %v554
    %v605 = vsel %vm597, %v524, %v556
    %vm606 = vcmask 97280
    %v607 = vsel %vm606, %v598, %v574
    %v608 = vsel %vm606, %v599, %v576
    %v609 = vsel %vm606, %v600, %v578
    %v610 = vsel %vm606, %v601, %v580
    %v611 = vsel %vm606, %v602, %v582
    %v612 = vsel %vm606, %v603, %v584
    %v613 = vsel %vm606, %v604, %v586
    %v614 = vsel %vm606, %v605, %v588
    %v616 = vperm.slane %v328, 0
    %v617 = vperm.slane %v328, 1
    %vm620 = vcmask 130048
    %v622 = vsel %vm620, %v607, 0
    %v625 = vsel %vm620, %v608, 0
    %v628 = vsel %vm620, %v609, 0
    %v631 = vsel %vm620, %v610, 0
    %v634 = vsel %vm620, %v611, 0
    %v637 = vsel %vm620, %v612, 0
    %v640 = vsel %vm620, %v613, 0
    %v643 = vsel %vm620, %v614, 0
    %645 = vmatpush.msra.mxu0 %v216
    %646 = vmatpush.msra.mxu0 %v214
    %647 = vmatpush.msra.mxu0 %v212
    %648 = vmatpush.msra.mxu0 %v210
    %649 = vmatpush.msra.mxu0 %v208
    %650 = vmatpush.msra.mxu0 %v206
    %651 = vmatpush.msra.mxu0 %v204
    %652 = vmatpush.msra.mxu0 %v202
    %653 = vmatpush.msra.mxu0 %v200
    %654 = vmatpush.msra.mxu0 %v198
    %655 = vmatpush.msra.mxu0 %v196
    %656 = vmatpush.msra.mxu0 %v194
    %657 = vmatpush.msra.mxu0 %v192
    %658 = vmatpush.msra.mxu0 %v190
    %659 = vmatpush.msra.mxu0 %v188
    %660 = vmatpush.msra.mxu0 %v186
    %661 = vmatmul.f32.gmra.mxu0 %v401
    %v662 = vpop.f32.mrf.mxu0
    %v663 = vadd.f32 %v616, %v662
    %664 = vmatmul.f32.gmra.mxu0 %v402
    %v665 = vpop.f32.mrf.mxu0
    %v666 = vadd.f32 %v616, %v665
    %667 = vmatmul.f32.gmra.mxu0 %v403
    %v668 = vpop.f32.mrf.mxu0
    %v669 = vadd.f32 %v616, %v668
    %670 = vmatmul.f32.gmra.mxu0 %v404
    %v671 = vpop.f32.mrf.mxu0
    %v672 = vadd.f32 %v616, %v671
    %673 = vmatmul.f32.gmra.mxu0 %v405
    %v674 = vpop.f32.mrf.mxu0
    %v675 = vadd.f32 %v616, %v674
    %676 = vmatmul.f32.gmra.mxu0 %v406
    %v677 = vpop.f32.mrf.mxu0
    %v678 = vadd.f32 %v616, %v677
    %679 = vmatmul.f32.gmra.mxu0 %v407
    %v680 = vpop.f32.mrf.mxu0
    %v681 = vadd.f32 %v616, %v680
    %682 = vmatmul.f32.gmra.mxu0 %v408
    %v683 = vpop.f32.mrf.mxu0
    %v684 = vadd.f32 %v616, %v683
    %685 = vdwg.mxu0
    %686 = vmatpush.msra.mxu0 0.0
    %687 = vmatpush.msra.mxu0 0.0
    %688 = vmatpush.msra.mxu0 0.0
    %689 = vmatpush.msra.mxu0 0.0
    %690 = vmatpush.msra.mxu0 0.0
    %691 = vmatpush.msra.mxu0 0.0
    %692 = vmatpush.msra.mxu0 0.0
    %693 = vmatpush.msra.mxu0 0.0
    %694 = vmatpush.msra.mxu0 0.0
    %695 = vmatpush.msra.mxu0 0.0
    %696 = vmatpush.msra.mxu0 0.0
    %697 = vmatpush.msra.mxu0 0.0
    %698 = vmatpush.msra.mxu0 0.0
    %699 = vmatpush.msra.mxu0 0.0
    %700 = vmatpush.msra.mxu0 %v220
    %701 = vmatpush.msra.mxu0 %v218
    %702 = vmatmul.f32.gmra.mxu0 %v622
    %v703 = vpop.f32.mrf.mxu0
    %v704 = vadd.f32 %v663, %v703
    %705 = vmatmul.f32.gmra.mxu0 %v625
    %v706 = vpop.f32.mrf.mxu0
    %v707 = vadd.f32 %v666, %v706
    %708 = vmatmul.f32.gmra.mxu0 %v628
    %v709 = vpop.f32.mrf.mxu0
    %v710 = vadd.f32 %v669, %v709
    %711 = vmatmul.f32.gmra.mxu0 %v631
    %v712 = vpop.f32.mrf.mxu0
    %v713 = vadd.f32 %v672, %v712
    %714 = vmatmul.f32.gmra.mxu0 %v634
    %v715 = vpop.f32.mrf.mxu0
    %v716 = vadd.f32 %v675, %v715
    %717 = vmatmul.f32.gmra.mxu0 %v637
    %v718 = vpop.f32.mrf.mxu0
    %v719 = vadd.f32 %v678, %v718
    %720 = vmatmul.f32.gmra.mxu0 %v640
    %v721 = vpop.f32.mrf.mxu0
    %v722 = vadd.f32 %v681, %v721
    %723 = vmatmul.f32.gmra.mxu0 %v643
    %v724 = vpop.f32.mrf.mxu0
    %v725 = vadd.f32 %v684, %v724
    %726 = vdwg.mxu0
    %727 = vmatpush.msra.mxu0 %v217
    %728 = vmatpush.msra.mxu0 %v215
    %729 = vmatpush.msra.mxu0 %v213
    %730 = vmatpush.msra.mxu0 %v211
    %731 = vmatpush.msra.mxu0 %v209
    %732 = vmatpush.msra.mxu0 %v207
    %733 = vmatpush.msra.mxu0 %v205
    %734 = vmatpush.msra.mxu0 %v203
    %735 = vmatpush.msra.mxu0 %v201
    %736 = vmatpush.msra.mxu0 %v199
    %737 = vmatpush.msra.mxu0 %v197
    %738 = vmatpush.msra.mxu0 %v195
    %739 = vmatpush.msra.mxu0 %v193
    %740 = vmatpush.msra.mxu0 %v191
    %741 = vmatpush.msra.mxu0 %v189
    %742 = vmatpush.msra.mxu0 %v187
    %743 = vmatmul.f32.gmra.mxu0 %v401
    %v744 = vpop.f32.mrf.mxu0
    %v745 = vadd.f32 %v617, %v744
    %746 = vmatmul.f32.gmra.mxu0 %v402
    %v747 = vpop.f32.mrf.mxu0
    %v748 = vadd.f32 %v617, %v747
    %749 = vmatmul.f32.gmra.mxu0 %v403
    %v750 = vpop.f32.mrf.mxu0
    %v751 = vadd.f32 %v617, %v750
    %752 = vmatmul.f32.gmra.mxu0 %v404
    %v753 = vpop.f32.mrf.mxu0
    %v754 = vadd.f32 %v617, %v753
    %755 = vmatmul.f32.gmra.mxu0 %v405
    %v756 = vpop.f32.mrf.mxu0
    %v757 = vadd.f32 %v617, %v756
    %758 = vmatmul.f32.gmra.mxu0 %v406
    %v759 = vpop.f32.mrf.mxu0
    %v760 = vadd.f32 %v617, %v759
    %761 = vmatmul.f32.gmra.mxu0 %v407
    %v762 = vpop.f32.mrf.mxu0
    %v763 = vadd.f32 %v617, %v762
    %764 = vmatmul.f32.gmra.mxu0 %v408
    %v765 = vpop.f32.mrf.mxu0
    %v766 = vadd.f32 %v617, %v765
    %767 = vdwg.mxu0
    %768 = vmatpush.msra.mxu0 0.0
    %769 = vmatpush.msra.mxu0 0.0
    %770 = vmatpush.msra.mxu0 0.0
    %771 = vmatpush.msra.mxu0 0.0
    %772 = vmatpush.msra.mxu0 0.0
    %773 = vmatpush.msra.mxu0 0.0
    %774 = vmatpush.msra.mxu0 0.0
    %775 = vmatpush.msra.mxu0 0.0
    %776 = vmatpush.msra.mxu0 0.0
    %777 = vmatpush.msra.mxu0 0.0
    %778 = vmatpush.msra.mxu0 0.0
    %779 = vmatpush.msra.mxu0 0.0
    %780 = vmatpush.msra.mxu0 0.0
    %781 = vmatpush.msra.mxu0 0.0
    %782 = vmatpush.msra.mxu0 %v221
    %783 = vmatpush.msra.mxu0 %v219
    %784 = vmatmul.f32.gmra.mxu0 %v622
    %v785 = vpop.f32.mrf.mxu0
    %v786 = vadd.f32 %v745, %v785
    %787 = vmatmul.f32.gmra.mxu0 %v625
    %v788 = vpop.f32.mrf.mxu0
    %v789 = vadd.f32 %v748, %v788
    %790 = vmatmul.f32.gmra.mxu0 %v628
    %v791 = vpop.f32.mrf.mxu0
    %v792 = vadd.f32 %v751, %v791
    %793 = vmatmul.f32.gmra.mxu0 %v631
    %v794 = vpop.f32.mrf.mxu0
    %v795 = vadd.f32 %v754, %v794
    %796 = vmatmul.f32.gmra.mxu0 %v634
    %v797 = vpop.f32.mrf.mxu0
    %v798 = vadd.f32 %v757, %v797
    %799 = vmatmul.f32.gmra.mxu0 %v637
    %v800 = vpop.f32.mrf.mxu0
    %v801 = vadd.f32 %v760, %v800
    %802 = vmatmul.f32.gmra.mxu0 %v640
    %v803 = vpop.f32.mrf.mxu0
    %v804 = vadd.f32 %v763, %v803
    %805 = vmatmul.f32.gmra.mxu0 %v643
    %v806 = vpop.f32.mrf.mxu0
    %v807 = vadd.f32 %v766, %v806
    %808 = vdwg.mxu0
    %vm809 = vcmask 523264
    %v811 = vsel %vm809, 0.0, 0
    %813 = vmatpush.msra.mxu0 0.0
    %814 = vmatpush.msra.mxu0 0.0
    %815 = vmatpush.msra.mxu0 0.0
    %816 = vmatpush.msra.mxu0 0.0
    %817 = vmatpush.msra.mxu0 0.0
    %818 = vmatpush.msra.mxu0 0.0
    %819 = vmatpush.msra.mxu0 0.0
    %820 = vmatpush.msra.mxu0 0.0
    %821 = vmatpush.msra.mxu0 %v244
    %822 = vmatpush.msra.mxu0 %v242
    %823 = vmatpush.msra.mxu0 %v240
    %824 = vmatpush.msra.mxu0 %v238
    %825 = vmatpush.msra.mxu0 %v236
    %826 = vmatpush.msra.mxu0 %v234
    %827 = vmatpush.msra.mxu0 %v232
    %828 = vmatpush.msra.mxu0 %v230
    %829 = vmatmul.f32.gmra.mxu0 %v811
    %v830 = vpop.f32.mrf.mxu0
    %v831 = vadd.f32 0.0, %v830
    %832 = vdwg.mxu0
    %833 = vmatpush.msra.mxu0 0.0
    %834 = vmatpush.msra.mxu0 0.0
    %835 = vmatpush.msra.mxu0 0.0
    %836 = vmatpush.msra.mxu0 0.0
    %837 = vmatpush.msra.mxu0 0.0
    %838 = vmatpush.msra.mxu0 0.0
    %839 = vmatpush.msra.mxu0 0.0
    %840 = vmatpush.msra.mxu0 0.0
    %841 = vmatpush.msra.mxu0 %v245
    %842 = vmatpush.msra.mxu0 %v243
    %843 = vmatpush.msra.mxu0 %v241
    %844 = vmatpush.msra.mxu0 %v239
    %845 = vmatpush.msra.mxu0 %v237
    %846 = vmatpush.msra.mxu0 %v235
    %847 = vmatpush.msra.mxu0 %v233
    %848 = vmatpush.msra.mxu0 %v231
    %849 = vmatmul.f32.gmra.mxu0 %v811
    %v850 = vpop.f32.mrf.mxu0
    %v851 = vadd.f32 0.0, %v850
    %852 = vdwg.mxu0
    %v853 = vadd.f32 %v704, %v831
    %v854 = vxor.u32 %v853, 2147483648
    %v855 = vmul.f32 %v854, 1.442695
    %v856 = vpow.pop %v855
    %v857 = vadd.f32 %v856, 1.0
    %v858 = vrcp.pop %v857
    %v859 = vmul.f32 %v857, %v858
    %v860 = vsub.f32 1.0, %v859
    %v861 = vmul.f32 %v858, %v860
    %v862 = vadd.f32 %v858, %v861
    %vm863 = vweird.f32 %v857
    %vm864 = vweird.f32 %v858
    %vm865 = vmor %vm863, %vm864
    %v866 = vsel %vm865, %v858, %v862
    %v867 = vand.u32 2147483647, %v857
    %vm868 = vcmp.eq.f32.partialorder %v867, 8.507059e+37
    %v869 = vand.u32 %v857, 2147483648
    %v870 = vor.u32 1.1754944e-38, %v869
    %v871 = vsel %vm868, %v870, %v866
    %v872 = vmul.f32 1.0, %v871
    %v873 = vadd.f32 %v851, %v329
    %v874 = vmul.f32 %v872, %v873
    %v875 = vadd.f32 %v786, %v874
    %v876 = vtanh.pop %v875
    %v877 = vsub.f32 1.0, %v872
    %879 = vrot.lane.b32.xlu0 %v876, 64
    %v880 = vpop.permute.xlu0 %879
    %v882 = vmul.f32 %v877, %v880
    %v883 = vmul.f32 %v872, 0.0
    %v884 = vadd.f32 %v882, %v883
    %886 = vrot.lane.b32.xlu0 %v884, 64
    %v887 = vpop.permute.xlu0 %886
    %889 = vst.msk [vmem:[#allocation2] sm:$0xff] %vm809, %v887
    %890 = vst.msk [vmem:[#allocation3 + $0x38] sm:$0xff] %vm809, %v887
    %v891 = vsel %vm809, %v887, 0
    %893 = vmatpush.msra.mxu0 0.0
    %894 = vmatpush.msra.mxu0 0.0
    %895 = vmatpush.msra.mxu0 0.0
    %896 = vmatpush.msra.mxu0 0.0
    %897 = vmatpush.msra.mxu0 0.0
    %898 = vmatpush.msra.mxu0 0.0
    %899 = vmatpush.msra.mxu0 0.0
    %900 = vmatpush.msra.mxu0 0.0
    %901 = vmatpush.msra.mxu0 %v244
    %902 = vmatpush.msra.mxu0 %v242
    %903 = vmatpush.msra.mxu0 %v240
    %904 = vmatpush.msra.mxu0 %v238
    %905 = vmatpush.msra.mxu0 %v236
    %906 = vmatpush.msra.mxu0 %v234
    %907 = vmatpush.msra.mxu0 %v232
    %908 = vmatpush.msra.mxu0 %v230
    %909 = vmatmul.f32.gmra.mxu0 %v891
    %v910 = vpop.f32.mrf.mxu0
    %v911 = vadd.f32 0.0, %v910
    %912 = vdwg.mxu0
    %913 = vmatpush.msra.mxu0 0.0
    %914 = vmatpush.msra.mxu0 0.0
    %915 = vmatpush.msra.mxu0 0.0
    %916 = vmatpush.msra.mxu0 0.0
    %917 = vmatpush.msra.mxu0 0.0
    %918 = vmatpush.msra.mxu0 0.0
    %919 = vmatpush.msra.mxu0 0.0
    %920 = vmatpush.msra.mxu0 0.0
    %921 = vmatpush.msra.mxu0 %v245
    %922 = vmatpush.msra.mxu0 %v243
    %923 = vmatpush.msra.mxu0 %v241
    %924 = vmatpush.msra.mxu0 %v239
    %925 = vmatpush.msra.mxu0 %v237
    %926 = vmatpush.msra.mxu0 %v235
    %927 = vmatpush.msra.mxu0 %v233
    %928 = vmatpush.msra.mxu0 %v231
    %929 = vmatmul.f32.gmra.mxu0 %v891
    %v930 = vpop.f32.mrf.mxu0
    %v931 = vadd.f32 0.0, %v930
    %932 = vdwg.mxu0
    %v933 = vadd.f32 %v707, %v911
    %v934 = vxor.u32 %v933, 2147483648
    %v935 = vmul.f32 %v934, 1.442695
    %v936 = vpow.pop %v935
    %v937 = vadd.f32 %v936, 1.0
    %v938 = vrcp.pop %v937
    %v939 = vmul.f32 %v937, %v938
    %v940 = vsub.f32 1.0, %v939
    %v941 = vmul.f32 %v938, %v940
    %v942 = vadd.f32 %v938, %v941
    %vm943 = vweird.f32 %v937
    %vm944 = vweird.f32 %v938
    %vm945 = vmor %vm943, %vm944
    %v946 = vsel %vm945, %v938, %v942
    %v947 = vand.u32 2147483647, %v937
    %vm948 = vcmp.eq.f32.partialorder %v947, 8.507059e+37
    %v949 = vand.u32 %v937, 2147483648
    %v950 = vor.u32 1.1754944e-38, %v949
    %v951 = vsel %vm948, %v950, %v946
    %v952 = vmul.f32 1.0, %v951
    %v953 = vadd.f32 %v931, %v329
    %v954 = vmul.f32 %v952, %v953
    %v955 = vadd.f32 %v789, %v954
    %v956 = vtanh.pop %v955
    %v957 = vsub.f32 1.0, %v952
    %959 = vrot.lane.b32.xlu0 %v956, 64
    %v960 = vpop.permute.xlu0 %959
    %v962 = vmul.f32 %v957, %v960
    %v963 = vmul.f32 %v952, %v884
    %v964 = vadd.f32 %v962, %v963
    %966 = vrot.lane.b32.xlu0 %v964, 64
    %v967 = vpop.permute.xlu0 %966
    %969 = vst.msk [vmem:[#allocation2 + $0x8] sm:$0xff] %vm809, %v967
    %970 = vst.msk [vmem:[#allocation3 + $0x30] sm:$0xff] %vm809, %v967
    %v971 = vsel %vm809, %v967, 0
    %973 = vmatpush.msra.mxu0 0.0
    %974 = vmatpush.msra.mxu0 0.0
    %975 = vmatpush.msra.mxu0 0.0
    %976 = vmatpush.msra.mxu0 0.0
    %977 = vmatpush.msra.mxu0 0.0
    %978 = vmatpush.msra.mxu0 0.0
    %979 = vmatpush.msra.mxu0 0.0
    %980 = vmatpush.msra.mxu0 0.0
    %981 = vmatpush.msra.mxu0 %v244
    %982 = vmatpush.msra.mxu0 %v242
    %983 = vmatpush.msra.mxu0 %v240
    %984 = vmatpush.msra.mxu0 %v238
    %985 = vmatpush.msra.mxu0 %v236
    %986 = vmatpush.msra.mxu0 %v234
    %987 = vmatpush.msra.mxu0 %v232
    %988 = vmatpush.msra.mxu0 %v230
    %989 = vmatmul.f32.gmra.mxu0 %v971
    %v990 = vpop.f32.mrf.mxu0
    %v991 = vadd.f32 0.0, %v990
    %992 = vdwg.mxu0
    %993 = vmatpush.msra.mxu0 0.0
    %994 = vmatpush.msra.mxu0 0.0
    %995 = vmatpush.msra.mxu0 0.0
    %996 = vmatpush.msra.mxu0 0.0
    %997 = vmatpush.msra.mxu0 0.0
    %998 = vmatpush.msra.mxu0 0.0
    %999 = vmatpush.msra.mxu0 0.0
    %1000 = vmatpush.msra.mxu0 0.0
    %1001 = vmatpush.msra.mxu0 %v245
    %1002 = vmatpush.msra.mxu0 %v243
    %1003 = vmatpush.msra.mxu0 %v241
    %1004 = vmatpush.msra.mxu0 %v239
    %1005 = vmatpush.msra.mxu0 %v237
    %1006 = vmatpush.msra.mxu0 %v235
    %1007 = vmatpush.msra.mxu0 %v233
    %1008 = vmatpush.msra.mxu0 %v231
    %1009 = vmatmul.f32.gmra.mxu0 %v971
    %v1010 = vpop.f32.mrf.mxu0
    %v1011 = vadd.f32 0.0, %v1010
    %1012 = vdwg.mxu0
    %v1013 = vadd.f32 %v710, %v991
    %v1014 = vxor.u32 %v1013, 2147483648
    %v1015 = vmul.f32 %v1014, 1.442695
    %v1016 = vpow.pop %v1015
    %v1017 = vadd.f32 %v1016, 1.0
    %v1018 = vrcp.pop %v1017
    %v1019 = vmul.f32 %v1017, %v1018
    %v1020 = vsub.f32 1.0, %v1019
    %v1021 = vmul.f32 %v1018, %v1020
    %v1022 = vadd.f32 %v1018, %v1021
    %vm1023 = vweird.f32 %v1017
    %vm1024 = vweird.f32 %v1018
    %vm1025 = vmor %vm1023, %vm1024
    %v1026 = vsel %vm1025, %v1018, %v1022
    %v1027 = vand.u32 2147483647, %v1017
    %vm1028 = vcmp.eq.f32.partialorder %v1027, 8.507059e+37
    %v1029 = vand.u32 %v1017, 2147483648
    %v1030 = vor.u32 1.1754944e-38, %v1029
    %v1031 = vsel %vm1028, %v1030, %v1026
    %v1032 = vmul.f32 1.0, %v1031
    %v1033 = vadd.f32 %v1011, %v329
    %v1034 = vmul.f32 %v1032, %v1033
    %v1035 = vadd.f32 %v792, %v1034
    %v1036 = vtanh.pop %v1035
    %v1037 = vsub.f32 1.0, %v1032
    %1039 = vrot.lane.b32.xlu0 %v1036, 64
    %v1040 = vpop.permute.xlu0 %1039
    %v1042 = vmul.f32 %v1037, %v1040
    %v1043 = vmul.f32 %v1032, %v964
    %v1044 = vadd.f32 %v1042, %v1043
    %1046 = vrot.lane.b32.xlu0 %v1044, 64
    %v1047 = vpop.permute.xlu0 %1046
    %1049 = vst.msk [vmem:[#allocation2 + $0x10] sm:$0xff] %vm809, %v1047
    %1050 = vst.msk [vmem:[#allocation3 + $0x28] sm:$0xff] %vm809, %v1047
    %v1051 = vsel %vm809, %v1047, 0
    %1053 = vmatpush.msra.mxu0 0.0
    %1054 = vmatpush.msra.mxu0 0.0
    %1055 = vmatpush.msra.mxu0 0.0
    %1056 = vmatpush.msra.mxu0 0.0
    %1057 = vmatpush.msra.mxu0 0.0
    %1058 = vmatpush.msra.mxu0 0.0
    %1059 = vmatpush.msra.mxu0 0.0
    %1060 = vmatpush.msra.mxu0 0.0
    %1061 = vmatpush.msra.mxu0 %v244
    %1062 = vmatpush.msra.mxu0 %v242
    %1063 = vmatpush.msra.mxu0 %v240
    %1064 = vmatpush.msra.mxu0 %v238
    %1065 = vmatpush.msra.mxu0 %v236
    %1066 = vmatpush.msra.mxu0 %v234
    %1067 = vmatpush.msra.mxu0 %v232
    %1068 = vmatpush.msra.mxu0 %v230
    %1069 = vmatmul.f32.gmra.mxu0 %v1051
    %v1070 = vpop.f32.mrf.mxu0
    %v1071 = vadd.f32 0.0, %v1070
    %1072 = vdwg.mxu0
    %1073 = vmatpush.msra.mxu0 0.0
    %1074 = vmatpush.msra.mxu0 0.0
    %1075 = vmatpush.msra.mxu0 0.0
    %1076 = vmatpush.msra.mxu0 0.0
    %1077 = vmatpush.msra.mxu0 0.0
    %1078 = vmatpush.msra.mxu0 0.0
    %1079 = vmatpush.msra.mxu0 0.0
    %1080 = vmatpush.msra.mxu0 0.0
    %1081 = vmatpush.msra.mxu0 %v245
    %1082 = vmatpush.msra.mxu0 %v243
    %1083 = vmatpush.msra.mxu0 %v241
    %1084 = vmatpush.msra.mxu0 %v239
    %1085 = vmatpush.msra.mxu0 %v237
    %1086 = vmatpush.msra.mxu0 %v235
    %1087 = vmatpush.msra.mxu0 %v233
    %1088 = vmatpush.msra.mxu0 %v231
    %1089 = vmatmul.f32.gmra.mxu0 %v1051
    %v1090 = vpop.f32.mrf.mxu0
    %v1091 = vadd.f32 0.0, %v1090
    %1092 = vdwg.mxu0
    %v1093 = vadd.f32 %v713, %v1071
    %v1094 = vxor.u32 %v1093, 2147483648
    %v1095 = vmul.f32 %v1094, 1.442695
    %v1096 = vpow.pop %v1095
    %v1097 = vadd.f32 %v1096, 1.0
    %v1098 = vrcp.pop %v1097
    %v1099 = vmul.f32 %v1097, %v1098
    %v1100 = vsub.f32 1.0, %v1099
    %v1101 = vmul.f32 %v1098, %v1100
    %v1102 = vadd.f32 %v1098, %v1101
    %vm1103 = vweird.f32 %v1097
    %vm1104 = vweird.f32 %v1098
    %vm1105 = vmor %vm1103, %vm1104
    %v1106 = vsel %vm1105, %v1098, %v1102
    %v1107 = vand.u32 2147483647, %v1097
    %vm1108 = vcmp.eq.f32.partialorder %v1107, 8.507059e+37
    %v1109 = vand.u32 %v1097, 2147483648
    %v1110 = vor.u32 1.1754944e-38, %v1109
    %v1111 = vsel %vm1108, %v1110, %v1106
    %v1112 = vmul.f32 1.0, %v1111
    %v1113 = vadd.f32 %v1091, %v329
    %v1114 = vmul.f32 %v1112, %v1113
    %v1115 = vadd.f32 %v795, %v1114
    %v1116 = vtanh.pop %v1115
    %v1117 = vsub.f32 1.0, %v1112
    %1119 = vrot.lane.b32.xlu0 %v1116, 64
    %v1120 = vpop.permute.xlu0 %1119
    %v1122 = vmul.f32 %v1117, %v1120
    %v1123 = vmul.f32 %v1112, %v1044
    %v1124 = vadd.f32 %v1122, %v1123
    %1126 = vrot.lane.b32.xlu0 %v1124, 64
    %v1127 = vpop.permute.xlu0 %1126
    %1129 = vst.msk [vmem:[#allocation2 + $0x18] sm:$0xff] %vm809, %v1127
    %1130 = vst.msk [vmem:[#allocation3 + $0x20] sm:$0xff] %vm809, %v1127
    %v1131 = vsel %vm809, %v1127, 0
    %1133 = vmatpush.msra.mxu0 0.0
    %1134 = vmatpush.msra.mxu0 0.0
    %1135 = vmatpush.msra.mxu0 0.0
    %1136 = vmatpush.msra.mxu0 0.0
    %1137 = vmatpush.msra.mxu0 0.0
    %1138 = vmatpush.msra.mxu0 0.0
    %1139 = vmatpush.msra.mxu0 0.0
    %1140 = vmatpush.msra.mxu0 0.0
    %1141 = vmatpush.msra.mxu0 %v244
    %1142 = vmatpush.msra.mxu0 %v242
    %1143 = vmatpush.msra.mxu0 %v240
    %1144 = vmatpush.msra.mxu0 %v238
    %1145 = vmatpush.msra.mxu0 %v236
    %1146 = vmatpush.msra.mxu0 %v234
    %1147 = vmatpush.msra.mxu0 %v232
    %1148 = vmatpush.msra.mxu0 %v230
    %1149 = vmatmul.f32.gmra.mxu0 %v1131
    %v1150 = vpop.f32.mrf.mxu0
    %v1151 = vadd.f32 0.0, %v1150
    %1152 = vdwg.mxu0
    %1153 = vmatpush.msra.mxu0 0.0
    %1154 = vmatpush.msra.mxu0 0.0
    %1155 = vmatpush.msra.mxu0 0.0
    %1156 = vmatpush.msra.mxu0 0.0
    %1157 = vmatpush.msra.mxu0 0.0
    %1158 = vmatpush.msra.mxu0 0.0
    %1159 = vmatpush.msra.mxu0 0.0
    %1160 = vmatpush.msra.mxu0 0.0
    %1161 = vmatpush.msra.mxu0 %v245
    %1162 = vmatpush.msra.mxu0 %v243
    %1163 = vmatpush.msra.mxu0 %v241
    %1164 = vmatpush.msra.mxu0 %v239
    %1165 = vmatpush.msra.mxu0 %v237
    %1166 = vmatpush.msra.mxu0 %v235
    %1167 = vmatpush.msra.mxu0 %v233
    %1168 = vmatpush.msra.mxu0 %v231
    %1169 = vmatmul.f32.gmra.mxu0 %v1131
    %v1170 = vpop.f32.mrf.mxu0
    %v1171 = vadd.f32 0.0, %v1170
    %1172 = vdwg.mxu0
    %v1173 = vadd.f32 %v716, %v1151
    %v1174 = vxor.u32 %v1173, 2147483648
    %v1175 = vmul.f32 %v1174, 1.442695
    %v1176 = vpow.pop %v1175
    %v1177 = vadd.f32 %v1176, 1.0
    %v1178 = vrcp.pop %v1177
    %v1179 = vmul.f32 %v1177, %v1178
    %v1180 = vsub.f32 1.0, %v1179
    %v1181 = vmul.f32 %v1178, %v1180
    %v1182 = vadd.f32 %v1178, %v1181
    %vm1183 = vweird.f32 %v1177
    %vm1184 = vweird.f32 %v1178
    %vm1185 = vmor %vm1183, %vm1184
    %v1186 = vsel %vm1185, %v1178, %v1182
    %v1187 = vand.u32 2147483647, %v1177
    %vm1188 = vcmp.eq.f32.partialorder %v1187, 8.507059e+37
    %v1189 = vand.u32 %v1177, 2147483648
    %v1190 = vor.u32 1.1754944e-38, %v1189
    %v1191 = vsel %vm1188, %v1190, %v1186
    %v1192 = vmul.f32 1.0, %v1191
    %v1193 = vadd.f32 %v1171, %v329
    %v1194 = vmul.f32 %v1192, %v1193
    %v1195 = vadd.f32 %v798, %v1194
    %v1196 = vtanh.pop %v1195
    %v1197 = vsub.f32 1.0, %v1192
    %1199 = vrot.lane.b32.xlu0 %v1196, 64
    %v1200 = vpop.permute.xlu0 %1199
    %v1202 = vmul.f32 %v1197, %v1200
    %v1203 = vmul.f32 %v1192, %v1124
    %v1204 = vadd.f32 %v1202, %v1203
    %1206 = vrot.lane.b32.xlu0 %v1204, 64
    %v1207 = vpop.permute.xlu0 %1206
    %1209 = vst.msk [vmem:[#allocation2 + $0x20] sm:$0xff] %vm809, %v1207
    %1210 = vst.msk [vmem:[#allocation3 + $0x18] sm:$0xff] %vm809, %v1207
    %v1211 = vsel %vm809, %v1207, 0
    %1213 = vmatpush.msra.mxu0 0.0
    %1214 = vmatpush.msra.mxu0 0.0
    %1215 = vmatpush.msra.mxu0 0.0
    %1216 = vmatpush.msra.mxu0 0.0
    %1217 = vmatpush.msra.mxu0 0.0
    %1218 = vmatpush.msra.mxu0 0.0
    %1219 = vmatpush.msra.mxu0 0.0
    %1220 = vmatpush.msra.mxu0 0.0
    %1221 = vmatpush.msra.mxu0 %v244
    %1222 = vmatpush.msra.mxu0 %v242
    %1223 = vmatpush.msra.mxu0 %v240
    %1224 = vmatpush.msra.mxu0 %v238
    %1225 = vmatpush.msra.mxu0 %v236
    %1226 = vmatpush.msra.mxu0 %v234
    %1227 = vmatpush.msra.mxu0 %v232
    %1228 = vmatpush.msra.mxu0 %v230
    %1229 = vmatmul.f32.gmra.mxu0 %v1211
    %v1230 = vpop.f32.mrf.mxu0
    %v1231 = vadd.f32 0.0, %v1230
    %1232 = vdwg.mxu0
    %1233 = vmatpush.msra.mxu0 0.0
    %1234 = vmatpush.msra.mxu0 0.0
    %1235 = vmatpush.msra.mxu0 0.0
    %1236 = vmatpush.msra.mxu0 0.0
    %1237 = vmatpush.msra.mxu0 0.0
    %1238 = vmatpush.msra.mxu0 0.0
    %1239 = vmatpush.msra.mxu0 0.0
    %1240 = vmatpush.msra.mxu0 0.0
    %1241 = vmatpush.msra.mxu0 %v245
    %1242 = vmatpush.msra.mxu0 %v243
    %1243 = vmatpush.msra.mxu0 %v241
    %1244 = vmatpush.msra.mxu0 %v239
    %1245 = vmatpush.msra.mxu0 %v237
    %1246 = vmatpush.msra.mxu0 %v235
    %1247 = vmatpush.msra.mxu0 %v233
    %1248 = vmatpush.msra.mxu0 %v231
    %1249 = vmatmul.f32.gmra.mxu0 %v1211
    %v1250 = vpop.f32.mrf.mxu0
    %v1251 = vadd.f32 0.0, %v1250
    %1252 = vdwg.mxu0
    %v1253 = vadd.f32 %v719, %v1231
    %v1254 = vxor.u32 %v1253, 2147483648
    %v1255 = vmul.f32 %v1254, 1.442695
    %v1256 = vpow.pop %v1255
    %v1257 = vadd.f32 %v1256, 1.0
    %v1258 = vrcp.pop %v1257
    %v1259 = vmul.f32 %v1257, %v1258
    %v1260 = vsub.f32 1.0, %v1259
    %v1261 = vmul.f32 %v1258, %v1260
    %v1262 = vadd.f32 %v1258, %v1261
    %vm1263 = vweird.f32 %v1257
    %vm1264 = vweird.f32 %v1258
    %vm1265 = vmor %vm1263, %vm1264
    %v1266 = vsel %vm1265, %v1258, %v1262
    %v1267 = vand.u32 2147483647, %v1257
    %vm1268 = vcmp.eq.f32.partialorder %v1267, 8.507059e+37
    %v1269 = vand.u32 %v1257, 2147483648
    %v1270 = vor.u32 1.1754944e-38, %v1269
    %v1271 = vsel %vm1268, %v1270, %v1266
    %v1272 = vmul.f32 1.0, %v1271
    %v1273 = vadd.f32 %v1251, %v329
    %v1274 = vmul.f32 %v1272, %v1273
    %v1275 = vadd.f32 %v801, %v1274
    %v1276 = vtanh.pop %v1275
    %v1277 = vsub.f32 1.0, %v1272
    %1279 = vrot.lane.b32.xlu0 %v1276, 64
    %v1280 = vpop.permute.xlu0 %1279
    %v1282 = vmul.f32 %v1277, %v1280
    %v1283 = vmul.f32 %v1272, %v1204
    %v1284 = vadd.f32 %v1282, %v1283
    %1286 = vrot.lane.b32.xlu0 %v1284, 64
    %v1287 = vpop.permute.xlu0 %1286
    %1289 = vst.msk [vmem:[#allocation2 + $0x28] sm:$0xff] %vm809, %v1287
    %1290 = vst.msk [vmem:[#allocation3 + $0x10] sm:$0xff] %vm809, %v1287
    %v1291 = vsel %vm809, %v1287, 0
    %1293 = vmatpush.msra.mxu0 0.0
    %1294 = vmatpush.msra.mxu0 0.0
    %1295 = vmatpush.msra.mxu0 0.0
    %1296 = vmatpush.msra.mxu0 0.0
    %1297 = vmatpush.msra.mxu0 0.0
    %1298 = vmatpush.msra.mxu0 0.0
    %1299 = vmatpush.msra.mxu0 0.0
    %1300 = vmatpush.msra.mxu0 0.0
    %1301 = vmatpush.msra.mxu0 %v244
    %1302 = vmatpush.msra.mxu0 %v242
    %1303 = vmatpush.msra.mxu0 %v240
    %1304 = vmatpush.msra.mxu0 %v238
    %1305 = vmatpush.msra.mxu0 %v236
    %1306 = vmatpush.msra.mxu0 %v234
    %1307 = vmatpush.msra.mxu0 %v232
    %1308 = vmatpush.msra.mxu0 %v230
    %1309 = vmatmul.f32.gmra.mxu0 %v1291
    %v1310 = vpop.f32.mrf.mxu0
    %v1311 = vadd.f32 0.0, %v1310
    %1312 = vdwg.mxu0
    %1313 = vmatpush.msra.mxu0 0.0
    %1314 = vmatpush.msra.mxu0 0.0
    %1315 = vmatpush.msra.mxu0 0.0
    %1316 = vmatpush.msra.mxu0 0.0
    %1317 = vmatpush.msra.mxu0 0.0
    %1318 = vmatpush.msra.mxu0 0.0
    %1319 = vmatpush.msra.mxu0 0.0
    %1320 = vmatpush.msra.mxu0 0.0
    %1321 = vmatpush.msra.mxu0 %v245
    %1322 = vmatpush.msra.mxu0 %v243
    %1323 = vmatpush.msra.mxu0 %v241
    %1324 = vmatpush.msra.mxu0 %v239
    %1325 = vmatpush.msra.mxu0 %v237
    %1326 = vmatpush.msra.mxu0 %v235
    %1327 = vmatpush.msra.mxu0 %v233
    %1328 = vmatpush.msra.mxu0 %v231
    %1329 = vmatmul.f32.gmra.mxu0 %v1291
    %v1330 = vpop.f32.mrf.mxu0
    %v1331 = vadd.f32 0.0, %v1330
    %1332 = vdwg.mxu0
    %v1333 = vadd.f32 %v722, %v1311
    %v1334 = vxor.u32 %v1333, 2147483648
    %v1335 = vmul.f32 %v1334, 1.442695
    %v1336 = vpow.pop %v1335
    %v1337 = vadd.f32 %v1336, 1.0
    %v1338 = vrcp.pop %v1337
    %v1339 = vmul.f32 %v1337, %v1338
    %v1340 = vsub.f32 1.0, %v1339
    %v1341 = vmul.f32 %v1338, %v1340
    %v1342 = vadd.f32 %v1338, %v1341
    %vm1343 = vweird.f32 %v1337
    %vm1344 = vweird.f32 %v1338
    %vm1345 = vmor %vm1343, %vm1344
    %v1346 = vsel %vm1345, %v1338, %v1342
    %v1347 = vand.u32 2147483647, %v1337
    %vm1348 = vcmp.eq.f32.partialorder %v1347, 8.507059e+37
    %v1349 = vand.u32 %v1337, 2147483648
    %v1350 = vor.u32 1.1754944e-38, %v1349
    %v1351 = vsel %vm1348, %v1350, %v1346
    %v1352 = vmul.f32 1.0, %v1351
    %v1353 = vadd.f32 %v1331, %v329
    %v1354 = vmul.f32 %v1352, %v1353
    %v1355 = vadd.f32 %v804, %v1354
    %v1356 = vtanh.pop %v1355
    %v1357 = vsub.f32 1.0, %v1352
    %1359 = vrot.lane.b32.xlu0 %v1356, 64
    %v1360 = vpop.permute.xlu0 %1359
    %v1362 = vmul.f32 %v1357, %v1360
    %v1363 = vmul.f32 %v1352, %v1284
    %v1364 = vadd.f32 %v1362, %v1363
    %1366 = vrot.lane.b32.xlu0 %v1364, 64
    %v1367 = vpop.permute.xlu0 %1366
    %1369 = vst.msk [vmem:[#allocation2 + $0x30] sm:$0xff] %vm809, %v1367
    %1370 = vst.msk [vmem:[#allocation3 + $0x8] sm:$0xff] %vm809, %v1367
    %v1371 = vsel %vm809, %v1367, 0
    %1373 = vmatpush.msra.mxu0 0.0
    %1374 = vmatpush.msra.mxu0 0.0
    %1375 = vmatpush.msra.mxu0 0.0
    %1376 = vmatpush.msra.mxu0 0.0
    %1377 = vmatpush.msra.mxu0 0.0
    %1378 = vmatpush.msra.mxu0 0.0
    %1379 = vmatpush.msra.mxu0 0.0
    %1380 = vmatpush.msra.mxu0 0.0
    %1381 = vmatpush.msra.mxu0 %v244
    %1382 = vmatpush.msra.mxu0 %v242
    %1383 = vmatpush.msra.mxu0 %v240
    %1384 = vmatpush.msra.mxu0 %v238
    %1385 = vmatpush.msra.mxu0 %v236
    %1386 = vmatpush.msra.mxu0 %v234
    %1387 = vmatpush.msra.mxu0 %v232
    %1388 = vmatpush.msra.mxu0 %v230
    %1389 = vmatmul.f32.gmra.mxu0 %v1371
    %v1390 = vpop.f32.mrf.mxu0
    %v1391 = vadd.f32 0.0, %v1390
    %1392 = vdwg.mxu0
    %1393 = vmatpush.msra.mxu0 0.0
    %1394 = vmatpush.msra.mxu0 0.0
    %1395 = vmatpush.msra.mxu0 0.0
    %1396 = vmatpush.msra.mxu0 0.0
    %1397 = vmatpush.msra.mxu0 0.0
    %1398 = vmatpush.msra.mxu0 0.0
    %1399 = vmatpush.msra.mxu0 0.0
    %1400 = vmatpush.msra.mxu0 0.0
    %1401 = vmatpush.msra.mxu0 %v245
    %1402 = vmatpush.msra.mxu0 %v243
    %1403 = vmatpush.msra.mxu0 %v241
    %1404 = vmatpush.msra.mxu0 %v239
    %1405 = vmatpush.msra.mxu0 %v237
    %1406 = vmatpush.msra.mxu0 %v235
    %1407 = vmatpush.msra.mxu0 %v233
    %1408 = vmatpush.msra.mxu0 %v231
    %1409 = vmatmul.f32.gmra.mxu0 %v1371
    %v1410 = vpop.f32.mrf.mxu0
    %v1411 = vadd.f32 0.0, %v1410
    %1412 = vdwg.mxu0
    %v1413 = vadd.f32 %v725, %v1391
    %v1414 = vxor.u32 %v1413, 2147483648
    %v1415 = vmul.f32 %v1414, 1.442695
    %v1416 = vpow.pop %v1415
    %v1417 = vadd.f32 %v1416, 1.0
    %v1418 = vrcp.pop %v1417
    %v1419 = vmul.f32 %v1417, %v1418
    %v1420 = vsub.f32 1.0, %v1419
    %v1421 = vmul.f32 %v1418, %v1420
    %v1422 = vadd.f32 %v1418, %v1421
    %vm1423 = vweird.f32 %v1417
    %vm1424 = vweird.f32 %v1418
    %vm1425 = vmor %vm1423, %vm1424
    %v1426 = vsel %vm1425, %v1418, %v1422
    %v1427 = vand.u32 2147483647, %v1417
    %vm1428 = vcmp.eq.f32.partialorder %v1427, 8.507059e+37
    %v1429 = vand.u32 %v1417, 2147483648
    %v1430 = vor.u32 1.1754944e-38, %v1429
    %v1431 = vsel %vm1428, %v1430, %v1426
    %v1432 = vmul.f32 1.0, %v1431
    %v1433 = vadd.f32 %v1411, %v329
    %v1434 = vmul.f32 %v1432, %v1433
    %v1435 = vadd.f32 %v807, %v1434
    %v1436 = vtanh.pop %v1435
    %v1437 = vsub.f32 1.0, %v1432
    %1439 = vrot.lane.b32.xlu0 %v1436, 64
    %v1440 = vpop.permute.xlu0 %1439
    %v1442 = vmul.f32 %v1437, %v1440
    %v1443 = vmul.f32 %v1432, %v1364
    %v1444 = vadd.f32 %v1442, %v1443
    %1446 = vrot.lane.b32.xlu0 %v1444, 64
    %v1447 = vpop.permute.xlu0 %1446
    %1449 = vst.msk [vmem:[#allocation2 + $0x38] sm:$0xff] %vm809, %v1447
    %1450 = vst.msk [vmem:[#allocation3] sm:$0xff] %vm809, %v1447
    %v1451 = vld [vmem:[#allocation2] sm:$0xff]
    %v1452 = vld [vmem:[#allocation2 + $0x8] sm:$0xff]
    %v1453 = vld [vmem:[#allocation2 + $0x10] sm:$0xff]
    %v1454 = vld [vmem:[#allocation2 + $0x18] sm:$0xff]
    %v1455 = vld [vmem:[#allocation2 + $0x20] sm:$0xff]
    %v1456 = vld [vmem:[#allocation2 + $0x28] sm:$0xff]
    %v1457 = vld [vmem:[#allocation2 + $0x30] sm:$0xff]
    %v1458 = vld [vmem:[#allocation2 + $0x38] sm:$0xff]
    %v1459 = vld [vmem:[#allocation3] sm:$0xff]
    %v1460 = vld [vmem:[#allocation3 + $0x8] sm:$0xff]
    %v1461 = vld [vmem:[#allocation3 + $0x10] sm:$0xff]
    %v1462 = vld [vmem:[#allocation3 + $0x18] sm:$0xff]
    %v1463 = vld [vmem:[#allocation3 + $0x20] sm:$0xff]
    %v1464 = vld [vmem:[#allocation3 + $0x28] sm:$0xff]
    %v1465 = vld [vmem:[#allocation3 + $0x30] sm:$0xff]
    %v1466 = vld [vmem:[#allocation3 + $0x38] sm:$0xff]
    %v1468 = vsel %vm809, %v1459, 0
    %v1471 = vsel %vm809, %v1460, 0
    %v1474 = vsel %vm809, %v1461, 0
    %v1477 = vsel %vm809, %v1462, 0
    %v1480 = vsel %vm809, %v1463, 0
    %v1483 = vsel %vm809, %v1464, 0
    %v1486 = vsel %vm809, %v1465, 0
    %v1489 = vsel %vm809, %v1466, 0
    %1491 = vmatpush.msra.mxu0 0.0
    %1492 = vmatpush.msra.mxu0 0.0
    %1493 = vmatpush.msra.mxu0 0.0
    %1494 = vmatpush.msra.mxu0 0.0
    %1495 = vmatpush.msra.mxu0 0.0
    %1496 = vmatpush.msra.mxu0 0.0
    %1497 = vmatpush.msra.mxu0 0.0
    %1498 = vmatpush.msra.mxu0 0.0
    %1499 = vmatpush.msra.mxu0 %v292
    %1500 = vmatpush.msra.mxu0 %v290
    %1501 = vmatpush.msra.mxu0 %v288
    %1502 = vmatpush.msra.mxu0 %v286
    %1503 = vmatpush.msra.mxu0 %v284
    %1504 = vmatpush.msra.mxu0 %v282
    %1505 = vmatpush.msra.mxu0 %v280
    %1506 = vmatpush.msra.mxu0 %v278
    %1507 = vmatmul.f32.gmra.mxu0 %v1468
    %v1508 = vpop.f32.mrf.mxu0
    %v1509 = vadd.f32 0.0, %v1508
    %1510 = vmatmul.f32.gmra.mxu0 %v1471
    %v1511 = vpop.f32.mrf.mxu0
    %v1512 = vadd.f32 0.0, %v1511
    %1513 = vmatmul.f32.gmra.mxu0 %v1474
    %v1514 = vpop.f32.mrf.mxu0
    %v1515 = vadd.f32 0.0, %v1514
    %1516 = vmatmul.f32.gmra.mxu0 %v1477
    %v1517 = vpop.f32.mrf.mxu0
    %v1518 = vadd.f32 0.0, %v1517
    %1519 = vmatmul.f32.gmra.mxu0 %v1480
    %v1520 = vpop.f32.mrf.mxu0
    %v1521 = vadd.f32 0.0, %v1520
    %1522 = vmatmul.f32.gmra.mxu0 %v1483
    %v1523 = vpop.f32.mrf.mxu0
    %v1524 = vadd.f32 0.0, %v1523
    %1525 = vmatmul.f32.gmra.mxu0 %v1486
    %v1526 = vpop.f32.mrf.mxu0
    %v1527 = vadd.f32 0.0, %v1526
    %1528 = vmatmul.f32.gmra.mxu0 %v1489
    %v1529 = vpop.f32.mrf.mxu0
    %v1530 = vadd.f32 0.0, %v1529
    %1531 = vdwg.mxu0
    %1532 = vmatpush.msra.mxu0 0.0
    %1533 = vmatpush.msra.mxu0 0.0
    %1534 = vmatpush.msra.mxu0 0.0
    %1535 = vmatpush.msra.mxu0 0.0
    %1536 = vmatpush.msra.mxu0 0.0
    %1537 = vmatpush.msra.mxu0 0.0
    %1538 = vmatpush.msra.mxu0 0.0
    %1539 = vmatpush.msra.mxu0 0.0
    %1540 = vmatpush.msra.mxu0 %v293
    %1541 = vmatpush.msra.mxu0 %v291
    %1542 = vmatpush.msra.mxu0 %v289
    %1543 = vmatpush.msra.mxu0 %v287
    %1544 = vmatpush.msra.mxu0 %v285
    %1545 = vmatpush.msra.mxu0 %v283
    %1546 = vmatpush.msra.mxu0 %v281
    %1547 = vmatpush.msra.mxu0 %v279
    %1548 = vmatmul.f32.gmra.mxu0 %v1468
    %v1549 = vpop.f32.mrf.mxu0
    %v1550 = vadd.f32 0.0, %v1549
    %1551 = vmatmul.f32.gmra.mxu0 %v1471
    %v1552 = vpop.f32.mrf.mxu0
    %v1553 = vadd.f32 0.0, %v1552
    %1554 = vmatmul.f32.gmra.mxu0 %v1474
    %v1555 = vpop.f32.mrf.mxu0
    %v1556 = vadd.f32 0.0, %v1555
    %1557 = vmatmul.f32.gmra.mxu0 %v1477
    %v1558 = vpop.f32.mrf.mxu0
    %v1559 = vadd.f32 0.0, %v1558
    %1560 = vmatmul.f32.gmra.mxu0 %v1480
    %v1561 = vpop.f32.mrf.mxu0
    %v1562 = vadd.f32 0.0, %v1561
    %1563 = vmatmul.f32.gmra.mxu0 %v1483
    %v1564 = vpop.f32.mrf.mxu0
    %v1565 = vadd.f32 0.0, %v1564
    %1566 = vmatmul.f32.gmra.mxu0 %v1486
    %v1567 = vpop.f32.mrf.mxu0
    %v1568 = vadd.f32 0.0, %v1567
    %1569 = vmatmul.f32.gmra.mxu0 %v1489
    %v1570 = vpop.f32.mrf.mxu0
    %v1571 = vadd.f32 0.0, %v1570
    %1572 = vdwg.mxu0
    %v1574 = vsel %vm809, %v1451, 0
    %v1577 = vsel %vm809, %v1452, 0
    %v1580 = vsel %vm809, %v1453, 0
    %v1583 = vsel %vm809, %v1454, 0
    %v1586 = vsel %vm809, %v1455, 0
    %v1589 = vsel %vm809, %v1456, 0
    %v1592 = vsel %vm809, %v1457, 0
    %v1595 = vsel %vm809, %v1458, 0
    %1597 = vmatpush.msra.mxu0 0.0
    %1598 = vmatpush.msra.mxu0 0.0
    %1599 = vmatpush.msra.mxu0 0.0
    %1600 = vmatpush.msra.mxu0 0.0
    %1601 = vmatpush.msra.mxu0 0.0
    %1602 = vmatpush.msra.mxu0 0.0
    %1603 = vmatpush.msra.mxu0 0.0
    %1604 = vmatpush.msra.mxu0 0.0
    %1605 = vmatpush.msra.mxu0 %v268
    %1606 = vmatpush.msra.mxu0 %v266
    %1607 = vmatpush.msra.mxu0 %v264
    %1608 = vmatpush.msra.mxu0 %v262
    %1609 = vmatpush.msra.mxu0 %v260
    %1610 = vmatpush.msra.mxu0 %v258
    %1611 = vmatpush.msra.mxu0 %v256
    %1612 = vmatpush.msra.mxu0 %v254
    %1613 = vmatmul.f32.gmra.mxu0 %v1574
    %v1614 = vpop.f32.mrf.mxu0
    %v1615 = vadd.f32 %v1509, %v1614
    %1616 = vmatmul.f32.gmra.mxu0 %v1577
    %v1617 = vpop.f32.mrf.mxu0
    %v1618 = vadd.f32 %v1512, %v1617
    %1619 = vmatmul.f32.gmra.mxu0 %v1580
    %v1620 = vpop.f32.mrf.mxu0
    %v1621 = vadd.f32 %v1515, %v1620
    %1622 = vmatmul.f32.gmra.mxu0 %v1583
    %v1623 = vpop.f32.mrf.mxu0
    %v1624 = vadd.f32 %v1518, %v1623
    %1625 = vmatmul.f32.gmra.mxu0 %v1586
    %v1626 = vpop.f32.mrf.mxu0
    %v1627 = vadd.f32 %v1521, %v1626
    %1628 = vmatmul.f32.gmra.mxu0 %v1589
    %v1629 = vpop.f32.mrf.mxu0
    %v1630 = vadd.f32 %v1524, %v1629
    %1631 = vmatmul.f32.gmra.mxu0 %v1592
    %v1632 = vpop.f32.mrf.mxu0
    %v1633 = vadd.f32 %v1527, %v1632
    %1634 = vmatmul.f32.gmra.mxu0 %v1595
    %v1635 = vpop.f32.mrf.mxu0
    %v1636 = vadd.f32 %v1530, %v1635
    %1637 = vdwg.mxu0
    %1638 = vmatpush.msra.mxu0 0.0
    %1639 = vmatpush.msra.mxu0 0.0
    %1640 = vmatpush.msra.mxu0 0.0
    %1641 = vmatpush.msra.mxu0 0.0
    %1642 = vmatpush.msra.mxu0 0.0
    %1643 = vmatpush.msra.mxu0 0.0
    %1644 = vmatpush.msra.mxu0 0.0
    %1645 = vmatpush.msra.mxu0 0.0
    %1646 = vmatpush.msra.mxu0 %v269
    %1647 = vmatpush.msra.mxu0 %v267
    %1648 = vmatpush.msra.mxu0 %v265
    %1649 = vmatpush.msra.mxu0 %v263
    %1650 = vmatpush.msra.mxu0 %v261
    %1651 = vmatpush.msra.mxu0 %v259
    %1652 = vmatpush.msra.mxu0 %v257
    %1653 = vmatpush.msra.mxu0 %v255
    %1654 = vmatmul.f32.gmra.mxu0 %v1574
    %v1655 = vpop.f32.mrf.mxu0
    %v1656 = vadd.f32 %v1550, %v1655
    %1657 = vmatmul.f32.gmra.mxu0 %v1577
    %v1658 = vpop.f32.mrf.mxu0
    %v1659 = vadd.f32 %v1553, %v1658
    %1660 = vmatmul.f32.gmra.mxu0 %v1580
    %v1661 = vpop.f32.mrf.mxu0
    %v1662 = vadd.f32 %v1556, %v1661
    %1663 = vmatmul.f32.gmra.mxu0 %v1583
    %v1664 = vpop.f32.mrf.mxu0
    %v1665 = vadd.f32 %v1559, %v1664
    %1666 = vmatmul.f32.gmra.mxu0 %v1586
    %v1667 = vpop.f32.mrf.mxu0
    %v1668 = vadd.f32 %v1562, %v1667
    %1669 = vmatmul.f32.gmra.mxu0 %v1589
    %v1670 = vpop.f32.mrf.mxu0
    %v1671 = vadd.f32 %v1565, %v1670
    %1672 = vmatmul.f32.gmra.mxu0 %v1592
    %v1673 = vpop.f32.mrf.mxu0
    %v1674 = vadd.f32 %v1568, %v1673
    %1675 = vmatmul.f32.gmra.mxu0 %v1595
    %v1676 = vpop.f32.mrf.mxu0
    %v1677 = vadd.f32 %v1571, %v1676
    %1678 = vdwg.mxu0
    %v1680 = vperm.slane %v331, 0
    %v1681 = vperm.slane %v331, 1
    %v1684 = vadd.f32 %v1615, %v1680
    %v1685 = vadd.f32 %v1656, %v1681
    %v1686 = vadd.f32 %v1618, %v1680
    %v1687 = vadd.f32 %v1659, %v1681
    %v1688 = vadd.f32 %v1621, %v1680
    %v1689 = vadd.f32 %v1662, %v1681
    %v1690 = vadd.f32 %v1624, %v1680
    %v1691 = vadd.f32 %v1665, %v1681
    %v1692 = vadd.f32 %v1627, %v1680
    %v1693 = vadd.f32 %v1668, %v1681
    %v1694 = vadd.f32 %v1630, %v1680
    %v1695 = vadd.f32 %v1671, %v1681
    %v1696 = vadd.f32 %v1633, %v1680
    %v1697 = vadd.f32 %v1674, %v1681
    %v1698 = vadd.f32 %v1636, %v1680
    %v1699 = vadd.f32 %v1677, %v1681
    %s1700 = smul.u32 4, 64
    %s1701 = smul.u32 %s1700, 2
    %s1702 = sshll.u32 %s1701, 4
    %1703 = dma.done [#allocation6], %s1702
    %v1705 = vperm.slane %v326, 0
    %v1706 = vperm.slane %v326, 1
    %1709 = vst [vmem:[#allocation4] sm:$0xff] %v1705
    %1710 = vst [vmem:[#allocation4 + $0x8] sm:$0xff] %v1706
    %1711 = vmatpush.msra.mxu0 0.0
    %1712 = vmatpush.msra.mxu0 0.0
    %1713 = vmatpush.msra.mxu0 0.0
    %1714 = vmatpush.msra.mxu0 0.0
    %1715 = vmatpush.msra.mxu0 0.0
    %1716 = vmatpush.msra.mxu0 0.0
    %1717 = vmatpush.msra.mxu0 0.0
    %1718 = vmatpush.msra.mxu0 0.0
    %1719 = vmatpush.msra.mxu0 %v316
    %1720 = vmatpush.msra.mxu0 %v314
    %1721 = vmatpush.msra.mxu0 %v312
    %1722 = vmatpush.msra.mxu0 %v310
    %1723 = vmatpush.msra.mxu0 %v308
    %1724 = vmatpush.msra.mxu0 %v306
    %1725 = vmatpush.msra.mxu0 %v304
    %1726 = vmatpush.msra.mxu0 %v302
    %1727 = vmatmul.f32.gmra.mxu0 %v811
    %v1728 = vpop.f32.mrf.mxu0
    %v1729 = vadd.f32 0.0, %v1728
    %1730 = vdwg.mxu0
    %1731 = vmatpush.msra.mxu0 0.0
    %1732 = vmatpush.msra.mxu0 0.0
    %1733 = vmatpush.msra.mxu0 0.0
    %1734 = vmatpush.msra.mxu0 0.0
    %1735 = vmatpush.msra.mxu0 0.0
    %1736 = vmatpush.msra.mxu0 0.0
    %1737 = vmatpush.msra.mxu0 0.0
    %1738 = vmatpush.msra.mxu0 0.0
    %1739 = vmatpush.msra.mxu0 %v317
    %1740 = vmatpush.msra.mxu0 %v315
    %1741 = vmatpush.msra.mxu0 %v313
    %1742 = vmatpush.msra.mxu0 %v311
    %1743 = vmatpush.msra.mxu0 %v309
    %1744 = vmatpush.msra.mxu0 %v307
    %1745 = vmatpush.msra.mxu0 %v305
    %1746 = vmatpush.msra.mxu0 %v303
    %1747 = vmatmul.f32.gmra.mxu0 %v811
    %v1748 = vpop.f32.mrf.mxu0
    %v1749 = vadd.f32 0.0, %v1748
    %1750 = vdwg.mxu0
    %v1751 = vadd.f32 %v1684, %v1729
    %v1752 = vxor.u32 %v1751, 2147483648
    %v1753 = vmul.f32 %v1752, 1.442695
    %v1754 = vpow.pop %v1753
    %v1755 = vadd.f32 %v1754, 1.0
    %v1756 = vrcp.pop %v1755
    %v1757 = vmul.f32 %v1755, %v1756
    %v1758 = vsub.f32 1.0, %v1757
    %v1759 = vmul.f32 %v1756, %v1758
    %v1760 = vadd.f32 %v1756, %v1759
    %vm1761 = vweird.f32 %v1755
    %vm1762 = vweird.f32 %v1756
    %vm1763 = vmor %vm1761, %vm1762
    %v1764 = vsel %vm1763, %v1756, %v1760
    %v1765 = vand.u32 2147483647, %v1755
    %vm1766 = vcmp.eq.f32.partialorder %v1765, 8.507059e+37
    %v1767 = vand.u32 %v1755, 2147483648
    %v1768 = vor.u32 1.1754944e-38, %v1767
    %v1769 = vsel %vm1766, %v1768, %v1764
    %v1770 = vmul.f32 1.0, %v1769
    %v1771 = vadd.f32 %v1749, %v332
    %v1772 = vmul.f32 %v1770, %v1771
    %v1773 = vadd.f32 %v1685, %v1772
    %v1774 = vtanh.pop %v1773
    %v1775 = vsub.f32 1.0, %v1770
    %1777 = vrot.lane.b32.xlu0 %v1774, 64
    %v1778 = vpop.permute.xlu0 %1777
    %v1780 = vmul.f32 %v1775, %v1778
    %v1781 = vmul.f32 %v1770, 0.0
    %v1782 = vadd.f32 %v1780, %v1781
    %v1783 = vld [vmem:[#allocation5] sm:$0xff]
    %v1784 = vld [vmem:[#allocation5 + $0x8] sm:$0xff]
    %v1785 = vld [vmem:[#allocation5 + $0x10] sm:$0xff]
    %v1786 = vld [vmem:[#allocation5 + $0x18] sm:$0xff]
    %v1787 = vld [vmem:[#allocation5 + $0x20] sm:$0xff]
    %v1788 = vld [vmem:[#allocation5 + $0x28] sm:$0xff]
    %v1789 = vld [vmem:[#allocation5 + $0x30] sm:$0xff]
    %v1790 = vld [vmem:[#allocation5 + $0x38] sm:$0xff]
    %v1791 = vunpack.c.l.bf16 %v1783
    %v1792 = vunpack.c.h.bf16 %v1783
    %v1793 = vunpack.c.l.bf16 %v1784
    %v1794 = vunpack.c.h.bf16 %v1784
    %v1795 = vunpack.c.l.bf16 %v1785
    %v1796 = vunpack.c.h.bf16 %v1785
    %v1797 = vunpack.c.l.bf16 %v1786
    %v1798 = vunpack.c.h.bf16 %v1786
    %v1799 = vunpack.c.l.bf16 %v1787
    %v1800 = vunpack.c.h.bf16 %v1787
    %v1801 = vunpack.c.l.bf16 %v1788
    %v1802 = vunpack.c.h.bf16 %v1788
    %v1803 = vunpack.c.l.bf16 %v1789
    %v1804 = vunpack.c.h.bf16 %v1789
    %v1805 = vunpack.c.l.bf16 %v1790
    %v1806 = vunpack.c.h.bf16 %v1790
    %v1807 = vld [vmem:[#allocation4] sm:$0xff]
    %v1808 = vld [vmem:[#allocation4 + $0x8] sm:$0xff]
    %1810 = vrot.lane.b32.xlu0 %v1782, 64
    %v1811 = vpop.permute.xlu0 %1810
    %v1812 = vsel %vm809, %v1811, 0
    %1814 = vmatpush.msra.mxu0 0.0
    %1815 = vmatpush.msra.mxu0 0.0
    %1816 = vmatpush.msra.mxu0 0.0
    %1817 = vmatpush.msra.mxu0 0.0
    %1818 = vmatpush.msra.mxu0 0.0
    %1819 = vmatpush.msra.mxu0 0.0
    %1820 = vmatpush.msra.mxu0 0.0
    %1821 = vmatpush.msra.mxu0 0.0
    %1822 = vmatpush.msra.mxu0 %v1805
    %1823 = vmatpush.msra.mxu0 %v1803
    %1824 = vmatpush.msra.mxu0 %v1801
    %1825 = vmatpush.msra.mxu0 %v1799
    %1826 = vmatpush.msra.mxu0 %v1797
    %1827 = vmatpush.msra.mxu0 %v1795
    %1828 = vmatpush.msra.mxu0 %v1793
    %1829 = vmatpush.msra.mxu0 %v1791
    %1830 = vmatmul.f32.gmra.mxu0 %v1812
    %v1831 = vpop.f32.mrf.mxu0
    %v1832 = vadd.f32 0.0, %v1831
    %1833 = vdwg.mxu0
    %1834 = vmatpush.msra.mxu0 0.0
    %1835 = vmatpush.msra.mxu0 0.0
    %1836 = vmatpush.msra.mxu0 0.0
    %1837 = vmatpush.msra.mxu0 0.0
    %1838 = vmatpush.msra.mxu0 0.0
    %1839 = vmatpush.msra.mxu0 0.0
    %1840 = vmatpush.msra.mxu0 0.0
    %1841 = vmatpush.msra.mxu0 0.0
    %1842 = vmatpush.msra.mxu0 %v1806
    %1843 = vmatpush.msra.mxu0 %v1804
    %1844 = vmatpush.msra.mxu0 %v1802
    %1845 = vmatpush.msra.mxu0 %v1800
    %1846 = vmatpush.msra.mxu0 %v1798
    %1847 = vmatpush.msra.mxu0 %v1796
    %1848 = vmatpush.msra.mxu0 %v1794
    %1849 = vmatpush.msra.mxu0 %v1792
    %1850 = vmatmul.f32.gmra.mxu0 %v1812
    %v1851 = vpop.f32.mrf.mxu0
    %v1852 = vadd.f32 0.0, %v1851
    %1853 = vdwg.mxu0
    %v1854 = vadd.f32 %v1807, %v1832
    %v1855 = vadd.f32 %v1808, %v1852
    %1856 = vst [vmem:[#allocation4] sm:$0xff] %v1854
    %1857 = vst [vmem:[#allocation4 + $0x8] sm:$0xff] %v1855
    %1858 = vmatpush.msra.mxu0 0.0
    %1859 = vmatpush.msra.mxu0 0.0
    %1860 = vmatpush.msra.mxu0 0.0
    %1861 = vmatpush.msra.mxu0 0.0
    %1862 = vmatpush.msra.mxu0 0.0
    %1863 = vmatpush.msra.mxu0 0.0
    %1864 = vmatpush.msra.mxu0 0.0
    %1865 = vmatpush.msra.mxu0 0.0
    %1866 = vmatpush.msra.mxu0 %v316
    %1867 = vmatpush.msra.mxu0 %v314
    %1868 = vmatpush.msra.mxu0 %v312
    %1869 = vmatpush.msra.mxu0 %v310
    %1870 = vmatpush.msra.mxu0 %v308
    %1871 = vmatpush.msra.mxu0 %v306
    %1872 = vmatpush.msra.mxu0 %v304
    %1873 = vmatpush.msra.mxu0 %v302
    %1874 = vmatmul.f32.gmra.mxu0 %v1812
    %v1875 = vpop.f32.mrf.mxu0
    %v1876 = vadd.f32 0.0, %v1875
    %1877 = vdwg.mxu0
    %1878 = vmatpush.msra.mxu0 0.0
    %1879 = vmatpush.msra.mxu0 0.0
    %1880 = vmatpush.msra.mxu0 0.0
    %1881 = vmatpush.msra.mxu0 0.0
    %1882 = vmatpush.msra.mxu0 0.0
    %1883 = vmatpush.msra.mxu0 0.0
    %1884 = vmatpush.msra.mxu0 0.0
    %1885 = vmatpush.msra.mxu0 0.0
    %1886 = vmatpush.msra.mxu0 %v317
    %1887 = vmatpush.msra.mxu0 %v315
    %1888 = vmatpush.msra.mxu0 %v313
    %1889 = vmatpush.msra.mxu0 %v311
    %1890 = vmatpush.msra.mxu0 %v309
    %1891 = vmatpush.msra.mxu0 %v307
    %1892 = vmatpush.msra.mxu0 %v305
    %1893 = vmatpush.msra.mxu0 %v303
    %1894 = vmatmul.f32.gmra.mxu0 %v1812
    %v1895 = vpop.f32.mrf.mxu0
    %v1896 = vadd.f32 0.0, %v1895
    %1897 = vdwg.mxu0
    %v1898 = vadd.f32 %v1686, %v1876
    %v1899 = vxor.u32 %v1898, 2147483648
    %v1900 = vmul.f32 %v1899, 1.442695
    %v1901 = vpow.pop %v1900
    %v1902 = vadd.f32 %v1901, 1.0
    %v1903 = vrcp.pop %v1902
    %v1904 = vmul.f32 %v1902, %v1903
    %v1905 = vsub.f32 1.0, %v1904
    %v1906 = vmul.f32 %v1903, %v1905
    %v1907 = vadd.f32 %v1903, %v1906
    %vm1908 = vweird.f32 %v1902
    %vm1909 = vweird.f32 %v1903
    %vm1910 = vmor %vm1908, %vm1909
    %v1911 = vsel %vm1910, %v1903, %v1907
    %v1912 = vand.u32 2147483647, %v1902
    %vm1913 = vcmp.eq.f32.partialorder %v1912, 8.507059e+37
    %v1914 = vand.u32 %v1902, 2147483648
    %v1915 = vor.u32 1.1754944e-38, %v1914
    %v1916 = vsel %vm1913, %v1915, %v1911
    %v1917 = vmul.f32 1.0, %v1916
    %v1918 = vadd.f32 %v1896, %v332
    %v1919 = vmul.f32 %v1917, %v1918
    %v1920 = vadd.f32 %v1687, %v1919
    %v1921 = vtanh.pop %v1920
    %v1922 = vsub.f32 1.0, %v1917
    %1924 = vrot.lane.b32.xlu0 %v1921, 64
    %v1925 = vpop.permute.xlu0 %1924
    %v1927 = vmul.f32 %v1922, %v1925
    %v1928 = vmul.f32 %v1917, %v1782
    %v1929 = vadd.f32 %v1927, %v1928
    %v1930 = vld [vmem:[#allocation5 + $0x40] sm:$0xff]
    %v1931 = vld [vmem:[#allocation5 + $0x48] sm:$0xff]
    %v1932 = vld [vmem:[#allocation5 + $0x50] sm:$0xff]
    %v1933 = vld [vmem:[#allocation5 + $0x58] sm:$0xff]
    %v1934 = vld [vmem:[#allocation5 + $0x60] sm:$0xff]
    %v1935 = vld [vmem:[#allocation5 + $0x68] sm:$0xff]
    %v1936 = vld [vmem:[#allocation5 + $0x70] sm:$0xff]
    %v1937 = vld [vmem:[#allocation5 + $0x78] sm:$0xff]
    %v1938 = vunpack.c.l.bf16 %v1930
    %v1939 = vunpack.c.h.bf16 %v1930
    %v1940 = vunpack.c.l.bf16 %v1931
    %v1941 = vunpack.c.h.bf16 %v1931
    %v1942 = vunpack.c.l.bf16 %v1932
    %v1943 = vunpack.c.h.bf16 %v1932
    %v1944 = vunpack.c.l.bf16 %v1933
    %v1945 = vunpack.c.h.bf16 %v1933
    %v1946 = vunpack.c.l.bf16 %v1934
    %v1947 = vunpack.c.h.bf16 %v1934
    %v1948 = vunpack.c.l.bf16 %v1935
    %v1949 = vunpack.c.h.bf16 %v1935
    %v1950 = vunpack.c.l.bf16 %v1936
    %v1951 = vunpack.c.h.bf16 %v1936
    %v1952 = vunpack.c.l.bf16 %v1937
    %v1953 = vunpack.c.h.bf16 %v1937
    %v1954 = vld [vmem:[#allocation4] sm:$0xff]
    %v1955 = vld [vmem:[#allocation4 + $0x8] sm:$0xff]
    %1957 = vrot.lane.b32.xlu0 %v1929, 64
    %v1958 = vpop.permute.xlu0 %1957
    %v1959 = vsel %vm809, %v1958, 0
    %1961 = vmatpush.msra.mxu0 0.0
    %1962 = vmatpush.msra.mxu0 0.0
    %1963 = vmatpush.msra.mxu0 0.0
    %1964 = vmatpush.msra.mxu0 0.0
    %1965 = vmatpush.msra.mxu0 0.0
    %1966 = vmatpush.msra.mxu0 0.0
    %1967 = vmatpush.msra.mxu0 0.0
    %1968 = vmatpush.msra.mxu0 0.0
    %1969 = vmatpush.msra.mxu0 %v1952
    %1970 = vmatpush.msra.mxu0 %v1950
    %1971 = vmatpush.msra.mxu0 %v1948
    %1972 = vmatpush.msra.mxu0 %v1946
    %1973 = vmatpush.msra.mxu0 %v1944
    %1974 = vmatpush.msra.mxu0 %v1942
    %1975 = vmatpush.msra.mxu0 %v1940
    %1976 = vmatpush.msra.mxu0 %v1938
    %1977 = vmatmul.f32.gmra.mxu0 %v1959
    %v1978 = vpop.f32.mrf.mxu0
    %v1979 = vadd.f32 0.0, %v1978
    %1980 = vdwg.mxu0
    %1981 = vmatpush.msra.mxu0 0.0
    %1982 = vmatpush.msra.mxu0 0.0
    %1983 = vmatpush.msra.mxu0 0.0
    %1984 = vmatpush.msra.mxu0 0.0
    %1985 = vmatpush.msra.mxu0 0.0
    %1986 = vmatpush.msra.mxu0 0.0
    %1987 = vmatpush.msra.mxu0 0.0
    %1988 = vmatpush.msra.mxu0 0.0
    %1989 = vmatpush.msra.mxu0 %v1953
    %1990 = vmatpush.msra.mxu0 %v1951
    %1991 = vmatpush.msra.mxu0 %v1949
    %1992 = vmatpush.msra.mxu0 %v1947
    %1993 = vmatpush.msra.mxu0 %v1945
    %1994 = vmatpush.msra.mxu0 %v1943
    %1995 = vmatpush.msra.mxu0 %v1941
    %1996 = vmatpush.msra.mxu0 %v1939
    %1997 = vmatmul.f32.gmra.mxu0 %v1959
    %v1998 = vpop.f32.mrf.mxu0
    %v1999 = vadd.f32 0.0, %v1998
    %2000 = vdwg.mxu0
    %v2001 = vadd.f32 %v1954, %v1979
    %v2002 = vadd.f32 %v1955, %v1999
    %2003 = vst [vmem:[#allocation4] sm:$0xff] %v2001
    %2004 = vst [vmem:[#allocation4 + $0x8] sm:$0xff] %v2002
    %2005 = vmatpush.msra.mxu0 0.0
    %2006 = vmatpush.msra.mxu0 0.0
    %2007 = vmatpush.msra.mxu0 0.0
    %2008 = vmatpush.msra.mxu0 0.0
    %2009 = vmatpush.msra.mxu0 0.0
    %2010 = vmatpush.msra.mxu0 0.0
    %2011 = vmatpush.msra.mxu0 0.0
    %2012 = vmatpush.msra.mxu0 0.0
    %2013 = vmatpush.msra.mxu0 %v316
    %2014 = vmatpush.msra.mxu0 %v314
    %2015 = vmatpush.msra.mxu0 %v312
    %2016 = vmatpush.msra.mxu0 %v310
    %2017 = vmatpush.msra.mxu0 %v308
    %2018 = vmatpush.msra.mxu0 %v306
    %2019 = vmatpush.msra.mxu0 %v304
    %2020 = vmatpush.msra.mxu0 %v302
    %2021 = vmatmul.f32.gmra.mxu0 %v1959
    %v2022 = vpop.f32.mrf.mxu0
    %v2023 = vadd.f32 0.0, %v2022
    %2024 = vdwg.mxu0
    %2025 = vmatpush.msra.mxu0 0.0
    %2026 = vmatpush.msra.mxu0 0.0
    %2027 = vmatpush.msra.mxu0 0.0
    %2028 = vmatpush.msra.mxu0 0.0
    %2029 = vmatpush.msra.mxu0 0.0
    %2030 = vmatpush.msra.mxu0 0.0
    %2031 = vmatpush.msra.mxu0 0.0
    %2032 = vmatpush.msra.mxu0 0.0
    %2033 = vmatpush.msra.mxu0 %v317
    %2034 = vmatpush.msra.mxu0 %v315
    %2035 = vmatpush.msra.mxu0 %v313
    %2036 = vmatpush.msra.mxu0 %v311
    %2037 = vmatpush.msra.mxu0 %v309
    %2038 = vmatpush.msra.mxu0 %v307
    %2039 = vmatpush.msra.mxu0 %v305
    %2040 = vmatpush.msra.mxu0 %v303
    %2041 = vmatmul.f32.gmra.mxu0 %v1959
    %v2042 = vpop.f32.mrf.mxu0
    %v2043 = vadd.f32 0.0, %v2042
    %2044 = vdwg.mxu0
    %v2045 = vadd.f32 %v1688, %v2023
    %v2046 = vxor.u32 %v2045, 2147483648
    %v2047 = vmul.f32 %v2046, 1.442695
    %v2048 = vpow.pop %v2047
    %v2049 = vadd.f32 %v2048, 1.0
    %v2050 = vrcp.pop %v2049
    %v2051 = vmul.f32 %v2049, %v2050
    %v2052 = vsub.f32 1.0, %v2051
    %v2053 = vmul.f32 %v2050, %v2052
    %v2054 = vadd.f32 %v2050, %v2053
    %vm2055 = vweird.f32 %v2049
    %vm2056 = vweird.f32 %v2050
    %vm2057 = vmor %vm2055, %vm2056
    %v2058 = vsel %vm2057, %v2050, %v2054
    %v2059 = vand.u32 2147483647, %v2049
    %vm2060 = vcmp.eq.f32.partialorder %v2059, 8.507059e+37
    %v2061 = vand.u32 %v2049, 2147483648
    %v2062 = vor.u32 1.1754944e-38, %v2061
    %v2063 = vsel %vm2060, %v2062, %v2058
    %v2064 = vmul.f32 1.0, %v2063
    %v2065 = vadd.f32 %v2043, %v332
    %v2066 = vmul.f32 %v2064, %v2065
    %v2067 = vadd.f32 %v1689, %v2066
    %v2068 = vtanh.pop %v2067
    %v2069 = vsub.f32 1.0, %v2064
    %2071 = vrot.lane.b32.xlu0 %v2068, 64
    %v2072 = vpop.permute.xlu0 %2071
    %v2074 = vmul.f32 %v2069, %v2072
    %v2075 = vmul.f32 %v2064, %v1929
    %v2076 = vadd.f32 %v2074, %v2075
    %v2077 = vld [vmem:[#allocation5 + $0x80] sm:$0xff]
    %v2078 = vld [vmem:[#allocation5 + $0x88] sm:$0xff]
    %v2079 = vld [vmem:[#allocation5 + $0x90] sm:$0xff]
    %v2080 = vld [vmem:[#allocation5 + $0x98] sm:$0xff]
    %v2081 = vld [vmem:[#allocation5 + $0xa0] sm:$0xff]
    %v2082 = vld [vmem:[#allocation5 + $0xa8] sm:$0xff]
    %v2083 = vld [vmem:[#allocation5 + $0xb0] sm:$0xff]
    %v2084 = vld [vmem:[#allocation5 + $0xb8] sm:$0xff]
    %v2085 = vunpack.c.l.bf16 %v2077
    %v2086 = vunpack.c.h.bf16 %v2077
    %v2087 = vunpack.c.l.bf16 %v2078
    %v2088 = vunpack.c.h.bf16 %v2078
    %v2089 = vunpack.c.l.bf16 %v2079
    %v2090 = vunpack.c.h.bf16 %v2079
    %v2091 = vunpack.c.l.bf16 %v2080
    %v2092 = vunpack.c.h.bf16 %v2080
    %v2093 = vunpack.c.l.bf16 %v2081
    %v2094 = vunpack.c.h.bf16 %v2081
    %v2095 = vunpack.c.l.bf16 %v2082
    %v2096 = vunpack.c.h.bf16 %v2082
    %v2097 = vunpack.c.l.bf16 %v2083
    %v2098 = vunpack.c.h.bf16 %v2083
    %v2099 = vunpack.c.l.bf16 %v2084
    %v2100 = vunpack.c.h.bf16 %v2084
    %v2101 = vld [vmem:[#allocation4] sm:$0xff]
    %v2102 = vld [vmem:[#allocation4 + $0x8] sm:$0xff]
    %2104 = vrot.lane.b32.xlu0 %v2076, 64
    %v2105 = vpop.permute.xlu0 %2104
    %v2106 = vsel %vm809, %v2105, 0
    %2108 = vmatpush.msra.mxu0 0.0
    %2109 = vmatpush.msra.mxu0 0.0
    %2110 = vmatpush.msra.mxu0 0.0
    %2111 = vmatpush.msra.mxu0 0.0
    %2112 = vmatpush.msra.mxu0 0.0
    %2113 = vmatpush.msra.mxu0 0.0
    %2114 = vmatpush.msra.mxu0 0.0
    %2115 = vmatpush.msra.mxu0 0.0
    %2116 = vmatpush.msra.mxu0 %v2099
    %2117 = vmatpush.msra.mxu0 %v2097
    %2118 = vmatpush.msra.mxu0 %v2095
    %2119 = vmatpush.msra.mxu0 %v2093
    %2120 = vmatpush.msra.mxu0 %v2091
    %2121 = vmatpush.msra.mxu0 %v2089
    %2122 = vmatpush.msra.mxu0 %v2087
    %2123 = vmatpush.msra.mxu0 %v2085
    %2124 = vmatmul.f32.gmra.mxu0 %v2106
    %v2125 = vpop.f32.mrf.mxu0
    %v2126 = vadd.f32 0.0, %v2125
    %2127 = vdwg.mxu0
    %2128 = vmatpush.msra.mxu0 0.0
    %2129 = vmatpush.msra.mxu0 0.0
    %2130 = vmatpush.msra.mxu0 0.0
    %2131 = vmatpush.msra.mxu0 0.0
    %2132 = vmatpush.msra.mxu0 0.0
    %2133 = vmatpush.msra.mxu0 0.0
    %2134 = vmatpush.msra.mxu0 0.0
    %2135 = vmatpush.msra.mxu0 0.0
    %2136 = vmatpush.msra.mxu0 %v2100
    %2137 = vmatpush.msra.mxu0 %v2098
    %2138 = vmatpush.msra.mxu0 %v2096
    %2139 = vmatpush.msra.mxu0 %v2094
    %2140 = vmatpush.msra.mxu0 %v2092
    %2141 = vmatpush.msra.mxu0 %v2090
    %2142 = vmatpush.msra.mxu0 %v2088
    %2143 = vmatpush.msra.mxu0 %v2086
    %2144 = vmatmul.f32.gmra.mxu0 %v2106
    %v2145 = vpop.f32.mrf.mxu0
    %v2146 = vadd.f32 0.0, %v2145
    %2147 = vdwg.mxu0
    %v2148 = vadd.f32 %v2101, %v2126
    %v2149 = vadd.f32 %v2102, %v2146
    %2150 = vst [vmem:[#allocation4] sm:$0xff] %v2148
    %2151 = vst [vmem:[#allocation4 + $0x8] sm:$0xff] %v2149
    %2152 = vmatpush.msra.mxu0 0.0
    %2153 = vmatpush.msra.mxu0 0.0
    %2154 = vmatpush.msra.mxu0 0.0
    %2155 = vmatpush.msra.mxu0 0.0
    %2156 = vmatpush.msra.mxu0 0.0
    %2157 = vmatpush.msra.mxu0 0.0
    %2158 = vmatpush.msra.mxu0 0.0
    %2159 = vmatpush.msra.mxu0 0.0
    %2160 = vmatpush.msra.mxu0 %v316
    %2161 = vmatpush.msra.mxu0 %v314
    %2162 = vmatpush.msra.mxu0 %v312
    %2163 = vmatpush.msra.mxu0 %v310
    %2164 = vmatpush.msra.mxu0 %v308
    %2165 = vmatpush.msra.mxu0 %v306
    %2166 = vmatpush.msra.mxu0 %v304
    %2167 = vmatpush.msra.mxu0 %v302
    %2168 = vmatmul.f32.gmra.mxu0 %v2106
    %v2169 = vpop.f32.mrf.mxu0
    %v2170 = vadd.f32 0.0, %v2169
    %2171 = vdwg.mxu0
    %2172 = vmatpush.msra.mxu0 0.0
    %2173 = vmatpush.msra.mxu0 0.0
    %2174 = vmatpush.msra.mxu0 0.0
    %2175 = vmatpush.msra.mxu0 0.0
    %2176 = vmatpush.msra.mxu0 0.0
    %2177 = vmatpush.msra.mxu0 0.0
    %2178 = vmatpush.msra.mxu0 0.0
    %2179 = vmatpush.msra.mxu0 0.0
    %2180 = vmatpush.msra.mxu0 %v317
    %2181 = vmatpush.msra.mxu0 %v315
    %2182 = vmatpush.msra.mxu0 %v313
    %2183 = vmatpush.msra.mxu0 %v311
    %2184 = vmatpush.msra.mxu0 %v309
    %2185 = vmatpush.msra.mxu0 %v307
    %2186 = vmatpush.msra.mxu0 %v305
    %2187 = vmatpush.msra.mxu0 %v303
    %2188 = vmatmul.f32.gmra.mxu0 %v2106
    %v2189 = vpop.f32.mrf.mxu0
    %v2190 = vadd.f32 0.0, %v2189
    %2191 = vdwg.mxu0
    %v2192 = vadd.f32 %v1690, %v2170
    %v2193 = vxor.u32 %v2192, 2147483648
    %v2194 = vmul.f32 %v2193, 1.442695
    %v2195 = vpow.pop %v2194
    %v2196 = vadd.f32 %v2195, 1.0
    %v2197 = vrcp.pop %v2196
    %v2198 = vmul.f32 %v2196, %v2197
    %v2199 = vsub.f32 1.0, %v2198
    %v2200 = vmul.f32 %v2197, %v2199
    %v2201 = vadd.f32 %v2197, %v2200
    %vm2202 = vweird.f32 %v2196
    %vm2203 = vweird.f32 %v2197
    %vm2204 = vmor %vm2202, %vm2203
    %v2205 = vsel %vm2204, %v2197, %v2201
    %v2206 = vand.u32 2147483647, %v2196
    %vm2207 = vcmp.eq.f32.partialorder %v2206, 8.507059e+37
    %v2208 = vand.u32 %v2196, 2147483648
    %v2209 = vor.u32 1.1754944e-38, %v2208
    %v2210 = vsel %vm2207, %v2209, %v2205
    %v2211 = vmul.f32 1.0, %v2210
    %v2212 = vadd.f32 %v2190, %v332
    %v2213 = vmul.f32 %v2211, %v2212
    %v2214 = vadd.f32 %v1691, %v2213
    %v2215 = vtanh.pop %v2214
    %v2216 = vsub.f32 1.0, %v2211
    %2218 = vrot.lane.b32.xlu0 %v2215, 64
    %v2219 = vpop.permute.xlu0 %2218
    %v2221 = vmul.f32 %v2216, %v2219
    %v2222 = vmul.f32 %v2211, %v2076
    %v2223 = vadd.f32 %v2221, %v2222
    %v2224 = vld [vmem:[#allocation5 + $0xc0] sm:$0xff]
    %v2225 = vld [vmem:[#allocation5 + $0xc8] sm:$0xff]
    %v2226 = vld [vmem:[#allocation5 + $0xd0] sm:$0xff]
    %v2227 = vld [vmem:[#allocation5 + $0xd8] sm:$0xff]
    %v2228 = vld [vmem:[#allocation5 + $0xe0] sm:$0xff]
    %v2229 = vld [vmem:[#allocation5 + $0xe8] sm:$0xff]
    %v2230 = vld [vmem:[#allocation5 + $0xf0] sm:$0xff]
    %v2231 = vld [vmem:[#allocation5 + $0xf8] sm:$0xff]
    %v2232 = vunpack.c.l.bf16 %v2224
    %v2233 = vunpack.c.h.bf16 %v2224
    %v2234 = vunpack.c.l.bf16 %v2225
    %v2235 = vunpack.c.h.bf16 %v2225
    %v2236 = vunpack.c.l.bf16 %v2226
    %v2237 = vunpack.c.h.bf16 %v2226
    %v2238 = vunpack.c.l.bf16 %v2227
    %v2239 = vunpack.c.h.bf16 %v2227
    %v2240 = vunpack.c.l.bf16 %v2228
    %v2241 = vunpack.c.h.bf16 %v2228
    %v2242 = vunpack.c.l.bf16 %v2229
    %v2243 = vunpack.c.h.bf16 %v2229
    %v2244 = vunpack.c.l.bf16 %v2230
    %v2245 = vunpack.c.h.bf16 %v2230
    %v2246 = vunpack.c.l.bf16 %v2231
    %v2247 = vunpack.c.h.bf16 %v2231
    %v2248 = vld [vmem:[#allocation4] sm:$0xff]
    %v2249 = vld [vmem:[#allocation4 + $0x8] sm:$0xff]
    %2251 = vrot.lane.b32.xlu0 %v2223, 64
    %v2252 = vpop.permute.xlu0 %2251
    %v2253 = vsel %vm809, %v2252, 0
    %2255 = vmatpush.msra.mxu0 0.0
    %2256 = vmatpush.msra.mxu0 0.0
    %2257 = vmatpush.msra.mxu0 0.0
    %2258 = vmatpush.msra.mxu0 0.0
    %2259 = vmatpush.msra.mxu0 0.0
    %2260 = vmatpush.msra.mxu0 0.0
    %2261 = vmatpush.msra.mxu0 0.0
    %2262 = vmatpush.msra.mxu0 0.0
    %2263 = vmatpush.msra.mxu0 %v2246
    %2264 = vmatpush.msra.mxu0 %v2244
    %2265 = vmatpush.msra.mxu0 %v2242
    %2266 = vmatpush.msra.mxu0 %v2240
    %2267 = vmatpush.msra.mxu0 %v2238
    %2268 = vmatpush.msra.mxu0 %v2236
    %2269 = vmatpush.msra.mxu0 %v2234
    %2270 = vmatpush.msra.mxu0 %v2232
    %2271 = vmatmul.f32.gmra.mxu0 %v2253
    %v2272 = vpop.f32.mrf.mxu0
    %v2273 = vadd.f32 0.0, %v2272
    %2274 = vdwg.mxu0
    %2275 = vmatpush.msra.mxu0 0.0
    %2276 = vmatpush.msra.mxu0 0.0
    %2277 = vmatpush.msra.mxu0 0.0
    %2278 = vmatpush.msra.mxu0 0.0
    %2279 = vmatpush.msra.mxu0 0.0
    %2280 = vmatpush.msra.mxu0 0.0
    %2281 = vmatpush.msra.mxu0 0.0
    %2282 = vmatpush.msra.mxu0 0.0
    %2283 = vmatpush.msra.mxu0 %v2247
    %2284 = vmatpush.msra.mxu0 %v2245
    %2285 = vmatpush.msra.mxu0 %v2243
    %2286 = vmatpush.msra.mxu0 %v2241
    %2287 = vmatpush.msra.mxu0 %v2239
    %2288 = vmatpush.msra.mxu0 %v2237
    %2289 = vmatpush.msra.mxu0 %v2235
    %2290 = vmatpush.msra.mxu0 %v2233
    %2291 = vmatmul.f32.gmra.mxu0 %v2253
    %v2292 = vpop.f32.mrf.mxu0
    %v2293 = vadd.f32 0.0, %v2292
    %2294 = vdwg.mxu0
    %v2295 = vadd.f32 %v2248, %v2273
    %v2296 = vadd.f32 %v2249, %v2293
    %2297 = vst [vmem:[#allocation4] sm:$0xff] %v2295
    %2298 = vst [vmem:[#allocation4 + $0x8] sm:$0xff] %v2296
    %2299 = vmatpush.msra.mxu0 0.0
    %2300 = vmatpush.msra.mxu0 0.0
    %2301 = vmatpush.msra.mxu0 0.0
    %2302 = vmatpush.msra.mxu0 0.0
    %2303 = vmatpush.msra.mxu0 0.0
    %2304 = vmatpush.msra.mxu0 0.0
    %2305 = vmatpush.msra.mxu0 0.0
    %2306 = vmatpush.msra.mxu0 0.0
    %2307 = vmatpush.msra.mxu0 %v316
    %2308 = vmatpush.msra.mxu0 %v314
    %2309 = vmatpush.msra.mxu0 %v312
    %2310 = vmatpush.msra.mxu0 %v310
    %2311 = vmatpush.msra.mxu0 %v308
    %2312 = vmatpush.msra.mxu0 %v306
    %2313 = vmatpush.msra.mxu0 %v304
    %2314 = vmatpush.msra.mxu0 %v302
    %2315 = vmatmul.f32.gmra.mxu0 %v2253
    %v2316 = vpop.f32.mrf.mxu0
    %v2317 = vadd.f32 0.0, %v2316
    %2318 = vdwg.mxu0
    %2319 = vmatpush.msra.mxu0 0.0
    %2320 = vmatpush.msra.mxu0 0.0
    %2321 = vmatpush.msra.mxu0 0.0
    %2322 = vmatpush.msra.mxu0 0.0
    %2323 = vmatpush.msra.mxu0 0.0
    %2324 = vmatpush.msra.mxu0 0.0
    %2325 = vmatpush.msra.mxu0 0.0
    %2326 = vmatpush.msra.mxu0 0.0
    %2327 = vmatpush.msra.mxu0 %v317
    %2328 = vmatpush.msra.mxu0 %v315
    %2329 = vmatpush.msra.mxu0 %v313
    %2330 = vmatpush.msra.mxu0 %v311
    %2331 = vmatpush.msra.mxu0 %v309
    %2332 = vmatpush.msra.mxu0 %v307
    %2333 = vmatpush.msra.mxu0 %v305
    %2334 = vmatpush.msra.mxu0 %v303
    %2335 = vmatmul.f32.gmra.mxu0 %v2253
    %v2336 = vpop.f32.mrf.mxu0
    %v2337 = vadd.f32 0.0, %v2336
    %2338 = vdwg.mxu0
    %v2339 = vadd.f32 %v1692, %v2317
    %v2340 = vxor.u32 %v2339, 2147483648
    %v2341 = vmul.f32 %v2340, 1.442695
    %v2342 = vpow.pop %v2341
    %v2343 = vadd.f32 %v2342, 1.0
    %v2344 = vrcp.pop %v2343
    %v2345 = vmul.f32 %v2343, %v2344
    %v2346 = vsub.f32 1.0, %v2345
    %v2347 = vmul.f32 %v2344, %v2346
    %v2348 = vadd.f32 %v2344, %v2347
    %vm2349 = vweird.f32 %v2343
    %vm2350 = vweird.f32 %v2344
    %vm2351 = vmor %vm2349, %vm2350
    %v2352 = vsel %vm2351, %v2344, %v2348
    %v2353 = vand.u32 2147483647, %v2343
    %vm2354 = vcmp.eq.f32.partialorder %v2353, 8.507059e+37
    %v2355 = vand.u32 %v2343, 2147483648
    %v2356 = vor.u32 1.1754944e-38, %v2355
    %v2357 = vsel %vm2354, %v2356, %v2352
    %v2358 = vmul.f32 1.0, %v2357
    %v2359 = vadd.f32 %v2337, %v332
    %v2360 = vmul.f32 %v2358, %v2359
    %v2361 = vadd.f32 %v1693, %v2360
    %v2362 = vtanh.pop %v2361
    %v2363 = vsub.f32 1.0, %v2358
    %2365 = vrot.lane.b32.xlu0 %v2362, 64
    %v2366 = vpop.permute.xlu0 %2365
    %v2368 = vmul.f32 %v2363, %v2366
    %v2369 = vmul.f32 %v2358, %v2223
    %v2370 = vadd.f32 %v2368, %v2369
    %v2371 = vld [vmem:[#allocation5 + $0x100] sm:$0xff]
    %v2372 = vld [vmem:[#allocation5 + $0x108] sm:$0xff]
    %v2373 = vld [vmem:[#allocation5 + $0x110] sm:$0xff]
    %v2374 = vld [vmem:[#allocation5 + $0x118] sm:$0xff]
    %v2375 = vld [vmem:[#allocation5 + $0x120] sm:$0xff]
    %v2376 = vld [vmem:[#allocation5 + $0x128] sm:$0xff]
    %v2377 = vld [vmem:[#allocation5 + $0x130] sm:$0xff]
    %v2378 = vld [vmem:[#allocation5 + $0x138] sm:$0xff]
    %v2379 = vunpack.c.l.bf16 %v2371
    %v2380 = vunpack.c.h.bf16 %v2371
    %v2381 = vunpack.c.l.bf16 %v2372
    %v2382 = vunpack.c.h.bf16 %v2372
    %v2383 = vunpack.c.l.bf16 %v2373
    %v2384 = vunpack.c.h.bf16 %v2373
    %v2385 = vunpack.c.l.bf16 %v2374
    %v2386 = vunpack.c.h.bf16 %v2374
    %v2387 = vunpack.c.l.bf16 %v2375
    %v2388 = vunpack.c.h.bf16 %v2375
    %v2389 = vunpack.c.l.bf16 %v2376
    %v2390 = vunpack.c.h.bf16 %v2376
    %v2391 = vunpack.c.l.bf16 %v2377
    %v2392 = vunpack.c.h.bf16 %v2377
    %v2393 = vunpack.c.l.bf16 %v2378
    %v2394 = vunpack.c.h.bf16 %v2378
    %v2395 = vld [vmem:[#allocation4] sm:$0xff]
    %v2396 = vld [vmem:[#allocation4 + $0x8] sm:$0xff]
    %2398 = vrot.lane.b32.xlu0 %v2370, 64
    %v2399 = vpop.permute.xlu0 %2398
    %v2400 = vsel %vm809, %v2399, 0
    %2402 = vmatpush.msra.mxu0 0.0
    %2403 = vmatpush.msra.mxu0 0.0
    %2404 = vmatpush.msra.mxu0 0.0
    %2405 = vmatpush.msra.mxu0 0.0
    %2406 = vmatpush.msra.mxu0 0.0
    %2407 = vmatpush.msra.mxu0 0.0
    %2408 = vmatpush.msra.mxu0 0.0
    %2409 = vmatpush.msra.mxu0 0.0
    %2410 = vmatpush.msra.mxu0 %v2393
    %2411 = vmatpush.msra.mxu0 %v2391
    %2412 = vmatpush.msra.mxu0 %v2389
    %2413 = vmatpush.msra.mxu0 %v2387
    %2414 = vmatpush.msra.mxu0 %v2385
    %2415 = vmatpush.msra.mxu0 %v2383
    %2416 = vmatpush.msra.mxu0 %v2381
    %2417 = vmatpush.msra.mxu0 %v2379
    %2418 = vmatmul.f32.gmra.mxu0 %v2400
    %v2419 = vpop.f32.mrf.mxu0
    %v2420 = vadd.f32 0.0, %v2419
    %2421 = vdwg.mxu0
    %2422 = vmatpush.msra.mxu0 0.0
    %2423 = vmatpush.msra.mxu0 0.0
    %2424 = vmatpush.msra.mxu0 0.0
    %2425 = vmatpush.msra.mxu0 0.0
    %2426 = vmatpush.msra.mxu0 0.0
    %2427 = vmatpush.msra.mxu0 0.0
    %2428 = vmatpush.msra.mxu0 0.0
    %2429 = vmatpush.msra.mxu0 0.0
    %2430 = vmatpush.msra.mxu0 %v2394
    %2431 = vmatpush.msra.mxu0 %v2392
    %2432 = vmatpush.msra.mxu0 %v2390
    %2433 = vmatpush.msra.mxu0 %v2388
    %2434 = vmatpush.msra.mxu0 %v2386
    %2435 = vmatpush.msra.mxu0 %v2384
    %2436 = vmatpush.msra.mxu0 %v2382
    %2437 = vmatpush.msra.mxu0 %v2380
    %2438 = vmatmul.f32.gmra.mxu0 %v2400
    %v2439 = vpop.f32.mrf.mxu0
    %v2440 = vadd.f32 0.0, %v2439
    %2441 = vdwg.mxu0
    %v2442 = vadd.f32 %v2395, %v2420
    %v2443 = vadd.f32 %v2396, %v2440
    %2444 = vst [vmem:[#allocation4] sm:$0xff] %v2442
    %2445 = vst [vmem:[#allocation4 + $0x8] sm:$0xff] %v2443
    %2446 = vmatpush.msra.mxu0 0.0
    %2447 = vmatpush.msra.mxu0 0.0
    %2448 = vmatpush.msra.mxu0 0.0
    %2449 = vmatpush.msra.mxu0 0.0
    %2450 = vmatpush.msra.mxu0 0.0
    %2451 = vmatpush.msra.mxu0 0.0
    %2452 = vmatpush.msra.mxu0 0.0
    %2453 = vmatpush.msra.mxu0 0.0
    %2454 = vmatpush.msra.mxu0 %v316
    %2455 = vmatpush.msra.mxu0 %v314
    %2456 = vmatpush.msra.mxu0 %v312
    %2457 = vmatpush.msra.mxu0 %v310
    %2458 = vmatpush.msra.mxu0 %v308
    %2459 = vmatpush.msra.mxu0 %v306
    %2460 = vmatpush.msra.mxu0 %v304
    %2461 = vmatpush.msra.mxu0 %v302
    %2462 = vmatmul.f32.gmra.mxu0 %v2400
    %v2463 = vpop.f32.mrf.mxu0
    %v2464 = vadd.f32 0.0, %v2463
    %2465 = vdwg.mxu0
    %2466 = vmatpush.msra.mxu0 0.0
    %2467 = vmatpush.msra.mxu0 0.0
    %2468 = vmatpush.msra.mxu0 0.0
    %2469 = vmatpush.msra.mxu0 0.0
    %2470 = vmatpush.msra.mxu0 0.0
    %2471 = vmatpush.msra.mxu0 0.0
    %2472 = vmatpush.msra.mxu0 0.0
    %2473 = vmatpush.msra.mxu0 0.0
    %2474 = vmatpush.msra.mxu0 %v317
    %2475 = vmatpush.msra.mxu0 %v315
    %2476 = vmatpush.msra.mxu0 %v313
    %2477 = vmatpush.msra.mxu0 %v311
    %2478 = vmatpush.msra.mxu0 %v309
    %2479 = vmatpush.msra.mxu0 %v307
    %2480 = vmatpush.msra.mxu0 %v305
    %2481 = vmatpush.msra.mxu0 %v303
    %2482 = vmatmul.f32.gmra.mxu0 %v2400
    %v2483 = vpop.f32.mrf.mxu0
    %v2484 = vadd.f32 0.0, %v2483
    %2485 = vdwg.mxu0
    %v2486 = vadd.f32 %v1694, %v2464
    %v2487 = vxor.u32 %v2486, 2147483648
    %v2488 = vmul.f32 %v2487, 1.442695
    %v2489 = vpow.pop %v2488
    %v2490 = vadd.f32 %v2489, 1.0
    %v2491 = vrcp.pop %v2490
    %v2492 = vmul.f32 %v2490, %v2491
    %v2493 = vsub.f32 1.0, %v2492
    %v2494 = vmul.f32 %v2491, %v2493
    %v2495 = vadd.f32 %v2491, %v2494
    %vm2496 = vweird.f32 %v2490
    %vm2497 = vweird.f32 %v2491
    %vm2498 = vmor %vm2496, %vm2497
    %v2499 = vsel %vm2498, %v2491, %v2495
    %v2500 = vand.u32 2147483647, %v2490
    %vm2501 = vcmp.eq.f32.partialorder %v2500, 8.507059e+37
    %v2502 = vand.u32 %v2490, 2147483648
    %v2503 = vor.u32 1.1754944e-38, %v2502
    %v2504 = vsel %vm2501, %v2503, %v2499
    %v2505 = vmul.f32 1.0, %v2504
    %v2506 = vadd.f32 %v2484, %v332
    %v2507 = vmul.f32 %v2505, %v2506
    %v2508 = vadd.f32 %v1695, %v2507
    %v2509 = vtanh.pop %v2508
    %v2510 = vsub.f32 1.0, %v2505
    %2512 = vrot.lane.b32.xlu0 %v2509, 64
    %v2513 = vpop.permute.xlu0 %2512
    %v2515 = vmul.f32 %v2510, %v2513
    %v2516 = vmul.f32 %v2505, %v2370
    %v2517 = vadd.f32 %v2515, %v2516
    %v2518 = vld [vmem:[#allocation5 + $0x140] sm:$0xff]
    %v2519 = vld [vmem:[#allocation5 + $0x148] sm:$0xff]
    %v2520 = vld [vmem:[#allocation5 + $0x150] sm:$0xff]
    %v2521 = vld [vmem:[#allocation5 + $0x158] sm:$0xff]
    %v2522 = vld [vmem:[#allocation5 + $0x160] sm:$0xff]
    %v2523 = vld [vmem:[#allocation5 + $0x168] sm:$0xff]
    %v2524 = vld [vmem:[#allocation5 + $0x170] sm:$0xff]
    %v2525 = vld [vmem:[#allocation5 + $0x178] sm:$0xff]
    %v2526 = vunpack.c.l.bf16 %v2518
    %v2527 = vunpack.c.h.bf16 %v2518
    %v2528 = vunpack.c.l.bf16 %v2519
    %v2529 = vunpack.c.h.bf16 %v2519
    %v2530 = vunpack.c.l.bf16 %v2520
    %v2531 = vunpack.c.h.bf16 %v2520
    %v2532 = vunpack.c.l.bf16 %v2521
    %v2533 = vunpack.c.h.bf16 %v2521
    %v2534 = vunpack.c.l.bf16 %v2522
    %v2535 = vunpack.c.h.bf16 %v2522
    %v2536 = vunpack.c.l.bf16 %v2523
    %v2537 = vunpack.c.h.bf16 %v2523
    %v2538 = vunpack.c.l.bf16 %v2524
    %v2539 = vunpack.c.h.bf16 %v2524
    %v2540 = vunpack.c.l.bf16 %v2525
    %v2541 = vunpack.c.h.bf16 %v2525
    %v2542 = vld [vmem:[#allocation4] sm:$0xff]
    %v2543 = vld [vmem:[#allocation4 + $0x8] sm:$0xff]
    %2545 = vrot.lane.b32.xlu0 %v2517, 64
    %v2546 = vpop.permute.xlu0 %2545
    %v2547 = vsel %vm809, %v2546, 0
    %2549 = vmatpush.msra.mxu0 0.0
    %2550 = vmatpush.msra.mxu0 0.0
    %2551 = vmatpush.msra.mxu0 0.0
    %2552 = vmatpush.msra.mxu0 0.0
    %2553 = vmatpush.msra.mxu0 0.0
    %2554 = vmatpush.msra.mxu0 0.0
    %2555 = vmatpush.msra.mxu0 0.0
    %2556 = vmatpush.msra.mxu0 0.0
    %2557 = vmatpush.msra.mxu0 %v2540
    %2558 = vmatpush.msra.mxu0 %v2538
    %2559 = vmatpush.msra.mxu0 %v2536
    %2560 = vmatpush.msra.mxu0 %v2534
    %2561 = vmatpush.msra.mxu0 %v2532
    %2562 = vmatpush.msra.mxu0 %v2530
    %2563 = vmatpush.msra.mxu0 %v2528
    %2564 = vmatpush.msra.mxu0 %v2526
    %2565 = vmatmul.f32.gmra.mxu0 %v2547
    %v2566 = vpop.f32.mrf.mxu0
    %v2567 = vadd.f32 0.0, %v2566
    %2568 = vdwg.mxu0
    %2569 = vmatpush.msra.mxu0 0.0
    %2570 = vmatpush.msra.mxu0 0.0
    %2571 = vmatpush.msra.mxu0 0.0
    %2572 = vmatpush.msra.mxu0 0.0
    %2573 = vmatpush.msra.mxu0 0.0
    %2574 = vmatpush.msra.mxu0 0.0
    %2575 = vmatpush.msra.mxu0 0.0
    %2576 = vmatpush.msra.mxu0 0.0
    %2577 = vmatpush.msra.mxu0 %v2541
    %2578 = vmatpush.msra.mxu0 %v2539
    %2579 = vmatpush.msra.mxu0 %v2537
    %2580 = vmatpush.msra.mxu0 %v2535
    %2581 = vmatpush.msra.mxu0 %v2533
    %2582 = vmatpush.msra.mxu0 %v2531
    %2583 = vmatpush.msra.mxu0 %v2529
    %2584 = vmatpush.msra.mxu0 %v2527
    %2585 = vmatmul.f32.gmra.mxu0 %v2547
    %v2586 = vpop.f32.mrf.mxu0
    %v2587 = vadd.f32 0.0, %v2586
    %2588 = vdwg.mxu0
    %v2589 = vadd.f32 %v2542, %v2567
    %v2590 = vadd.f32 %v2543, %v2587
    %2591 = vst [vmem:[#allocation4] sm:$0xff] %v2589
    %2592 = vst [vmem:[#allocation4 + $0x8] sm:$0xff] %v2590
    %2593 = vmatpush.msra.mxu0 0.0
    %2594 = vmatpush.msra.mxu0 0.0
    %2595 = vmatpush.msra.mxu0 0.0
    %2596 = vmatpush.msra.mxu0 0.0
    %2597 = vmatpush.msra.mxu0 0.0
    %2598 = vmatpush.msra.mxu0 0.0
    %2599 = vmatpush.msra.mxu0 0.0
    %2600 = vmatpush.msra.mxu0 0.0
    %2601 = vmatpush.msra.mxu0 %v316
    %2602 = vmatpush.msra.mxu0 %v314
    %2603 = vmatpush.msra.mxu0 %v312
    %2604 = vmatpush.msra.mxu0 %v310
    %2605 = vmatpush.msra.mxu0 %v308
    %2606 = vmatpush.msra.mxu0 %v306
    %2607 = vmatpush.msra.mxu0 %v304
    %2608 = vmatpush.msra.mxu0 %v302
    %2609 = vmatmul.f32.gmra.mxu0 %v2547
    %v2610 = vpop.f32.mrf.mxu0
    %v2611 = vadd.f32 0.0, %v2610
    %2612 = vdwg.mxu0
    %2613 = vmatpush.msra.mxu0 0.0
    %2614 = vmatpush.msra.mxu0 0.0
    %2615 = vmatpush.msra.mxu0 0.0
    %2616 = vmatpush.msra.mxu0 0.0
    %2617 = vmatpush.msra.mxu0 0.0
    %2618 = vmatpush.msra.mxu0 0.0
    %2619 = vmatpush.msra.mxu0 0.0
    %2620 = vmatpush.msra.mxu0 0.0
    %2621 = vmatpush.msra.mxu0 %v317
    %2622 = vmatpush.msra.mxu0 %v315
    %2623 = vmatpush.msra.mxu0 %v313
    %2624 = vmatpush.msra.mxu0 %v311
    %2625 = vmatpush.msra.mxu0 %v309
    %2626 = vmatpush.msra.mxu0 %v307
    %2627 = vmatpush.msra.mxu0 %v305
    %2628 = vmatpush.msra.mxu0 %v303
    %2629 = vmatmul.f32.gmra.mxu0 %v2547
    %v2630 = vpop.f32.mrf.mxu0
    %v2631 = vadd.f32 0.0, %v2630
    %2632 = vdwg.mxu0
    %v2633 = vadd.f32 %v1696, %v2611
    %v2634 = vxor.u32 %v2633, 2147483648
    %v2635 = vmul.f32 %v2634, 1.442695
    %v2636 = vpow.pop %v2635
    %v2637 = vadd.f32 %v2636, 1.0
    %v2638 = vrcp.pop %v2637
    %v2639 = vmul.f32 %v2637, %v2638
    %v2640 = vsub.f32 1.0, %v2639
    %v2641 = vmul.f32 %v2638, %v2640
    %v2642 = vadd.f32 %v2638, %v2641
    %vm2643 = vweird.f32 %v2637
    %vm2644 = vweird.f32 %v2638
    %vm2645 = vmor %vm2643, %vm2644
    %v2646 = vsel %vm2645, %v2638, %v2642
    %v2647 = vand.u32 2147483647, %v2637
    %vm2648 = vcmp.eq.f32.partialorder %v2647, 8.507059e+37
    %v2649 = vand.u32 %v2637, 2147483648
    %v2650 = vor.u32 1.1754944e-38, %v2649
    %v2651 = vsel %vm2648, %v2650, %v2646
    %v2652 = vmul.f32 1.0, %v2651
    %v2653 = vadd.f32 %v2631, %v332
    %v2654 = vmul.f32 %v2652, %v2653
    %v2655 = vadd.f32 %v1697, %v2654
    %v2656 = vtanh.pop %v2655
    %v2657 = vsub.f32 1.0, %v2652
    %2659 = vrot.lane.b32.xlu0 %v2656, 64
    %v2660 = vpop.permute.xlu0 %2659
    %v2662 = vmul.f32 %v2657, %v2660
    %v2663 = vmul.f32 %v2652, %v2517
    %v2664 = vadd.f32 %v2662, %v2663
    %v2665 = vld [vmem:[#allocation5 + $0x180] sm:$0xff]
    %v2666 = vld [vmem:[#allocation5 + $0x188] sm:$0xff]
    %v2667 = vld [vmem:[#allocation5 + $0x190] sm:$0xff]
    %v2668 = vld [vmem:[#allocation5 + $0x198] sm:$0xff]
    %v2669 = vld [vmem:[#allocation5 + $0x1a0] sm:$0xff]
    %v2670 = vld [vmem:[#allocation5 + $0x1a8] sm:$0xff]
    %v2671 = vld [vmem:[#allocation5 + $0x1b0] sm:$0xff]
    %v2672 = vld [vmem:[#allocation5 + $0x1b8] sm:$0xff]
    %v2673 = vunpack.c.l.bf16 %v2665
    %v2674 = vunpack.c.h.bf16 %v2665
    %v2675 = vunpack.c.l.bf16 %v2666
    %v2676 = vunpack.c.h.bf16 %v2666
    %v2677 = vunpack.c.l.bf16 %v2667
    %v2678 = vunpack.c.h.bf16 %v2667
    %v2679 = vunpack.c.l.bf16 %v2668
    %v2680 = vunpack.c.h.bf16 %v2668
    %v2681 = vunpack.c.l.bf16 %v2669
    %v2682 = vunpack.c.h.bf16 %v2669
    %v2683 = vunpack.c.l.bf16 %v2670
    %v2684 = vunpack.c.h.bf16 %v2670
    %v2685 = vunpack.c.l.bf16 %v2671
    %v2686 = vunpack.c.h.bf16 %v2671
    %v2687 = vunpack.c.l.bf16 %v2672
    %v2688 = vunpack.c.h.bf16 %v2672
    %v2689 = vld [vmem:[#allocation4] sm:$0xff]
    %v2690 = vld [vmem:[#allocation4 + $0x8] sm:$0xff]
    %2692 = vrot.lane.b32.xlu0 %v2664, 64
    %v2693 = vpop.permute.xlu0 %2692
    %v2694 = vsel %vm809, %v2693, 0
    %2696 = vmatpush.msra.mxu0 0.0
    %2697 = vmatpush.msra.mxu0 0.0
    %2698 = vmatpush.msra.mxu0 0.0
    %2699 = vmatpush.msra.mxu0 0.0
    %2700 = vmatpush.msra.mxu0 0.0
    %2701 = vmatpush.msra.mxu0 0.0
    %2702 = vmatpush.msra.mxu0 0.0
    %2703 = vmatpush.msra.mxu0 0.0
    %2704 = vmatpush.msra.mxu0 %v2687
    %2705 = vmatpush.msra.mxu0 %v2685
    %2706 = vmatpush.msra.mxu0 %v2683
    %2707 = vmatpush.msra.mxu0 %v2681
    %2708 = vmatpush.msra.mxu0 %v2679
    %2709 = vmatpush.msra.mxu0 %v2677
    %2710 = vmatpush.msra.mxu0 %v2675
    %2711 = vmatpush.msra.mxu0 %v2673
    %2712 = vmatmul.f32.gmra.mxu0 %v2694
    %v2713 = vpop.f32.mrf.mxu0
    %v2714 = vadd.f32 0.0, %v2713
    %2715 = vdwg.mxu0
    %2716 = vmatpush.msra.mxu0 0.0
    %2717 = vmatpush.msra.mxu0 0.0
    %2718 = vmatpush.msra.mxu0 0.0
    %2719 = vmatpush.msra.mxu0 0.0
    %2720 = vmatpush.msra.mxu0 0.0
    %2721 = vmatpush.msra.mxu0 0.0
    %2722 = vmatpush.msra.mxu0 0.0
    %2723 = vmatpush.msra.mxu0 0.0
    %2724 = vmatpush.msra.mxu0 %v2688
    %2725 = vmatpush.msra.mxu0 %v2686
    %2726 = vmatpush.msra.mxu0 %v2684
    %2727 = vmatpush.msra.mxu0 %v2682
    %2728 = vmatpush.msra.mxu0 %v2680
    %2729 = vmatpush.msra.mxu0 %v2678
    %2730 = vmatpush.msra.mxu0 %v2676
    %2731 = vmatpush.msra.mxu0 %v2674
    %2732 = vmatmul.f32.gmra.mxu0 %v2694
    %v2733 = vpop.f32.mrf.mxu0
    %v2734 = vadd.f32 0.0, %v2733
    %2735 = vdwg.mxu0
    %v2736 = vadd.f32 %v2689, %v2714
    %v2737 = vadd.f32 %v2690, %v2734
    %2738 = vst [vmem:[#allocation4] sm:$0xff] %v2736
    %2739 = vst [vmem:[#allocation4 + $0x8] sm:$0xff] %v2737
    %2740 = vmatpush.msra.mxu0 0.0
    %2741 = vmatpush.msra.mxu0 0.0
    %2742 = vmatpush.msra.mxu0 0.0
    %2743 = vmatpush.msra.mxu0 0.0
    %2744 = vmatpush.msra.mxu0 0.0
    %2745 = vmatpush.msra.mxu0 0.0
    %2746 = vmatpush.msra.mxu0 0.0
    %2747 = vmatpush.msra.mxu0 0.0
    %2748 = vmatpush.msra.mxu0 %v316
    %2749 = vmatpush.msra.mxu0 %v314
    %2750 = vmatpush.msra.mxu0 %v312
    %2751 = vmatpush.msra.mxu0 %v310
    %2752 = vmatpush.msra.mxu0 %v308
    %2753 = vmatpush.msra.mxu0 %v306
    %2754 = vmatpush.msra.mxu0 %v304
    %2755 = vmatpush.msra.mxu0 %v302
    %2756 = vmatmul.f32.gmra.mxu0 %v2694
    %v2757 = vpop.f32.mrf.mxu0
    %v2758 = vadd.f32 0.0, %v2757
    %2759 = vdwg.mxu0
    %2760 = vmatpush.msra.mxu0 0.0
    %2761 = vmatpush.msra.mxu0 0.0
    %2762 = vmatpush.msra.mxu0 0.0
    %2763 = vmatpush.msra.mxu0 0.0
    %2764 = vmatpush.msra.mxu0 0.0
    %2765 = vmatpush.msra.mxu0 0.0
    %2766 = vmatpush.msra.mxu0 0.0
    %2767 = vmatpush.msra.mxu0 0.0
    %2768 = vmatpush.msra.mxu0 %v317
    %2769 = vmatpush.msra.mxu0 %v315
    %2770 = vmatpush.msra.mxu0 %v313
    %2771 = vmatpush.msra.mxu0 %v311
    %2772 = vmatpush.msra.mxu0 %v309
    %2773 = vmatpush.msra.mxu0 %v307
    %2774 = vmatpush.msra.mxu0 %v305
    %2775 = vmatpush.msra.mxu0 %v303
    %2776 = vmatmul.f32.gmra.mxu0 %v2694
    %v2777 = vpop.f32.mrf.mxu0
    %v2778 = vadd.f32 0.0, %v2777
    %2779 = vdwg.mxu0
    %v2780 = vadd.f32 %v1698, %v2758
    %v2781 = vxor.u32 %v2780, 2147483648
    %v2782 = vmul.f32 %v2781, 1.442695
    %v2783 = vpow.pop %v2782
    %v2784 = vadd.f32 %v2783, 1.0
    %v2785 = vrcp.pop %v2784
    %v2786 = vmul.f32 %v2784, %v2785
    %v2787 = vsub.f32 1.0, %v2786
    %v2788 = vmul.f32 %v2785, %v2787
    %v2789 = vadd.f32 %v2785, %v2788
    %vm2790 = vweird.f32 %v2784
    %vm2791 = vweird.f32 %v2785
    %vm2792 = vmor %vm2790, %vm2791
    %v2793 = vsel %vm2792, %v2785, %v2789
    %v2794 = vand.u32 2147483647, %v2784
    %vm2795 = vcmp.eq.f32.partialorder %v2794, 8.507059e+37
    %v2796 = vand.u32 %v2784, 2147483648
    %v2797 = vor.u32 1.1754944e-38, %v2796
    %v2798 = vsel %vm2795, %v2797, %v2793
    %v2799 = vmul.f32 1.0, %v2798
    %v2800 = vadd.f32 %v2778, %v332
    %v2801 = vmul.f32 %v2799, %v2800
    %v2802 = vadd.f32 %v1699, %v2801
    %v2803 = vtanh.pop %v2802
    %v2804 = vsub.f32 1.0, %v2799
    %2806 = vrot.lane.b32.xlu0 %v2803, 64
    %v2807 = vpop.permute.xlu0 %2806
    %v2809 = vmul.f32 %v2804, %v2807
    %v2810 = vmul.f32 %v2799, %v2664
    %v2811 = vadd.f32 %v2809, %v2810
    %v2812 = vld [vmem:[#allocation5 + $0x1c0] sm:$0xff]
    %v2813 = vld [vmem:[#allocation5 + $0x1c8] sm:$0xff]
    %v2814 = vld [vmem:[#allocation5 + $0x1d0] sm:$0xff]
    %v2815 = vld [vmem:[#allocation5 + $0x1d8] sm:$0xff]
    %v2816 = vld [vmem:[#allocation5 + $0x1e0] sm:$0xff]
    %v2817 = vld [vmem:[#allocation5 + $0x1e8] sm:$0xff]
    %v2818 = vld [vmem:[#allocation5 + $0x1f0] sm:$0xff]
    %v2819 = vld [vmem:[#allocation5 + $0x1f8] sm:$0xff]
    %v2820 = vunpack.c.l.bf16 %v2812
    %v2821 = vunpack.c.h.bf16 %v2812
    %v2822 = vunpack.c.l.bf16 %v2813
    %v2823 = vunpack.c.h.bf16 %v2813
    %v2824 = vunpack.c.l.bf16 %v2814
    %v2825 = vunpack.c.h.bf16 %v2814
    %v2826 = vunpack.c.l.bf16 %v2815
    %v2827 = vunpack.c.h.bf16 %v2815
    %v2828 = vunpack.c.l.bf16 %v2816
    %v2829 = vunpack.c.h.bf16 %v2816
    %v2830 = vunpack.c.l.bf16 %v2817
    %v2831 = vunpack.c.h.bf16 %v2817
    %v2832 = vunpack.c.l.bf16 %v2818
    %v2833 = vunpack.c.h.bf16 %v2818
    %v2834 = vunpack.c.l.bf16 %v2819
    %v2835 = vunpack.c.h.bf16 %v2819
    %v2836 = vld [vmem:[#allocation4] sm:$0xff]
    %v2837 = vld [vmem:[#allocation4 + $0x8] sm:$0xff]
    %2839 = vrot.lane.b32.xlu0 %v2811, 64
    %v2840 = vpop.permute.xlu0 %2839
    %v2841 = vsel %vm809, %v2840, 0
    %2843 = vmatpush.msra.mxu0 0.0
    %2844 = vmatpush.msra.mxu0 0.0
    %2845 = vmatpush.msra.mxu0 0.0
    %2846 = vmatpush.msra.mxu0 0.0
    %2847 = vmatpush.msra.mxu0 0.0
    %2848 = vmatpush.msra.mxu0 0.0
    %2849 = vmatpush.msra.mxu0 0.0
    %2850 = vmatpush.msra.mxu0 0.0
    %2851 = vmatpush.msra.mxu0 %v2834
    %2852 = vmatpush.msra.mxu0 %v2832
    %2853 = vmatpush.msra.mxu0 %v2830
    %2854 = vmatpush.msra.mxu0 %v2828
    %2855 = vmatpush.msra.mxu0 %v2826
    %2856 = vmatpush.msra.mxu0 %v2824
    %2857 = vmatpush.msra.mxu0 %v2822
    %2858 = vmatpush.msra.mxu0 %v2820
    %2859 = vmatmul.f32.gmra.mxu0 %v2841
    %v2860 = vpop.f32.mrf.mxu0
    %v2861 = vadd.f32 0.0, %v2860
    %2862 = vdwg.mxu0
    %2863 = vmatpush.msra.mxu0 0.0
    %2864 = vmatpush.msra.mxu0 0.0
    %2865 = vmatpush.msra.mxu0 0.0
    %2866 = vmatpush.msra.mxu0 0.0
    %2867 = vmatpush.msra.mxu0 0.0
    %2868 = vmatpush.msra.mxu0 0.0
    %2869 = vmatpush.msra.mxu0 0.0
    %2870 = vmatpush.msra.mxu0 0.0
    %2871 = vmatpush.msra.mxu0 %v2835
    %2872 = vmatpush.msra.mxu0 %v2833
    %2873 = vmatpush.msra.mxu0 %v2831
    %2874 = vmatpush.msra.mxu0 %v2829
    %2875 = vmatpush.msra.mxu0 %v2827
    %2876 = vmatpush.msra.mxu0 %v2825
    %2877 = vmatpush.msra.mxu0 %v2823
    %2878 = vmatpush.msra.mxu0 %v2821
    %2879 = vmatmul.f32.gmra.mxu0 %v2841
    %v2880 = vpop.f32.mrf.mxu0
    %v2881 = vadd.f32 0.0, %v2880
    %2882 = vdwg.mxu0
    %v2883 = vadd.f32 %v2836, %v2861
    %v2884 = vadd.f32 %v2837, %v2881
    %2885 = vst [vmem:[#allocation4] sm:$0xff] %v2883
    %2886 = vst [vmem:[#allocation4 + $0x8] sm:$0xff] %v2884
    %v2887 = vld [vmem:[#allocation4] sm:$0x3]
    %v2888 = vld [vmem:[#allocation4 + $0x8] sm:$0x3]
    %vm2889 = vcmask 1041408
    %v2890 = vsel %vm2889, %v2887, -inf
    %v2891 = vsel %vm2889, %v2888, -inf
    %v2892 = vmax.f32 %v2890, %v2891
    %2893 = vmax.xlane.f32.xlu0 %v2892
    %v2894 = vpop.xlane.xlu0 %2893
    %v2895 = vsub.f32 %v2887, %v2894
    %v2896 = vsub.f32 %v2888, %v2894
    %v2897 = vmul.f32 %v2895, 1.442695
    %v2898 = vpow.pop %v2897
    %v2899 = vmul.f32 %v2896, 1.442695
    %v2900 = vpow.pop %v2899
    %v2901 = vsel %vm2889, %v2898, 0.0
    %v2902 = vsel %vm2889, %v2900, 0.0
    %v2903 = vadd.f32 %v2901, %v2902
    %2904 = vadd.xlane.f32.xlu0 %v2903
    %v2905 = vpop.xlane.xlu0 %2904
    %v2906 = vrcp.pop %v2905
    %v2907 = vmul.f32 %v2905, %v2906
    %v2908 = vsub.f32 1.0, %v2907
    %v2909 = vmul.f32 %v2906, %v2908
    %v2910 = vadd.f32 %v2906, %v2909
    %vm2911 = vweird.f32 %v2905
    %vm2912 = vweird.f32 %v2906
    %vm2913 = vmor %vm2911, %vm2912
    %v2914 = vsel %vm2913, %v2906, %v2910
    %v2915 = vand.u32 2147483647, %v2905
    %vm2916 = vcmp.eq.f32.partialorder %v2915, 8.507059e+37
    %v2917 = vand.u32 %v2905, 2147483648
    %v2918 = vor.u32 1.1754944e-38, %v2917
    %v2919 = vsel %vm2916, %v2918, %v2914
    %v2920 = vmul.f32 %v2898, %v2919
    %v2921 = vmul.f32 %v2900, %v2919
    %v2924 = vrot.slane %v2921, 6
    %v2925 = vsel %vm2889, %v2920, %v2924
    %2927 = vst [vmem:[#allocation7] sm:$0xf] %v2925
    // Predicated region
    $region33: #{tpu_custom_call.1} parent=1 // pred_check
      _
    $region34: #{tpu_custom_call.1} parent=1 // pred_check_branch
      %2929 = sbr.rel (0) target = $region36
    $region35: #{tpu_custom_call.1} parent=1 // pred_region
      %2931 = vsyncadd [#allocation8], 0
      %s2933 = sshll.u32 [#allocation7], 4
      %s2934 = int_to_ptr.vmem [resolvable:$true] %s2933
      %s2935 = sshll.u32 %s4, 4
      %s2936 = int_to_ptr.hbm [resolvable:$true] %s2935
      %2938 = dma.vmem_to_hbm [thread:$0]  %s2934, 64, %s2936, [#allocation8]
    $region36: #{tpu_custom_call.1} parent=1 // pred_fallthru
      _
    // Predicated region
    $region37: #{tpu_custom_call.1} parent=1 // pred_check
      _
    $region38: #{tpu_custom_call.1} parent=1 // pred_check_branch
      %2940 = sbr.rel (0) target = $region40
    $region39: #{tpu_custom_call.1} parent=1 // pred_region
      %2942 = dma.done [#allocation8], 64
    $region40: #{tpu_custom_call.1} parent=1 // pred_fallthru
      _
    %2943 = vsyncpa [#allocation8], 1
  %2944 = vsyncmov [#allocation6]
  %s2945 = vpop.sfrf %2944
  %p2946 = scmp.eq.s32.totalorder %s2945, 0
  %p2947 = pneg %p2946
  %2949 = shalt.err (%p2947)

</llo_original>
